<compile_context>
chip_gen: v6e
topology: v6e:2x2x1
jax: 0.10.0
libtpu: 0.0.40
codegen_flags: <defaults>
</compile_context>

<pallas_src>
import jax
import jax.numpy as jnp
from jax import lax
from jax.experimental import pallas as pl
from jax.experimental.pallas import tpu as pltpu

KH = KW = 3  # kernel_size=3, padding=1, stride=1


def _conv_bn_relu_kernel(x_ref, w_ref, shift_ref, o_ref, xp_ref, cols_ref):
    """Grid = (batch n, Cout tile j).  One sample x one Cout tile per step.

    x_ref     : (1, H, W, Cin)            bf16 unpadded input (constant in j)
    w_ref     : (KH*KW*Cin, COUT_TILE)    bf16 BN-scale-folded conv weights
    shift_ref : (1, COUT_TILE)            f32 folded BN shift
    o_ref     : (1, H, W, COUT_TILE)      output
    xp_ref    : (1, H+2, W+2, Cin)        bf16 VMEM scratch (zero halo), persistent
    cols_ref  : (H*W, KH*KW*Cin)          bf16 VMEM scratch (im2col slab), persistent
    """
    _, H, W, Cin = x_ref.shape
    cout_tile = o_ref.shape[-1]

    # Build the padded input + im2col slab once per input block and reuse it for
    # every Cout tile (the x BlockSpec index_map is constant in j).
    @pl.when(pl.program_id(1) == 0)
    def _build_cols():
        # Whole-scratch zero: only the 1-pixel halo ring actually needs it, but a
        # dense full zero lowers to plain unmasked stores and is sharding-safe.
        # TODO(synk): replace with 4 halo edge-strip stores.
        xp_ref[...] = jnp.zeros_like(xp_ref)
        xp_ref[:, 1:1 + H, 1:1 + W, :] = x_ref[...]          # bf16, no cast
        # im2col column order (kh, kw, ci) matches the (KH, KW, Cin, Cout)
        # -> (KH*KW*Cin, Cout) weight reshape in the wrapper.
        cols_ref[...] = jnp.concatenate(
            [xp_ref[:, kh:kh + H, kw:kw + W, :].reshape(H * W, Cin)
             for kh in range(KH) for kw in range(KW)],
            axis=-1)

    # Single bf16 MXU matmul with f32 accumulation, lane-dense Cout tile.
    acc = jnp.dot(cols_ref[...], w_ref[...], preferred_element_type=jnp.float32)

    # Folded eval-mode BatchNorm shift + ReLU.
    y = jnp.maximum(acc + shift_ref[...], 0.0)
    o_ref[...] = y.reshape(1, H, W, cout_tile).astype(o_ref.dtype)


def conv_block_forward(x_nchw, weight_oihw, gamma, beta, running_mean,
                       running_var, eps=1e-5, out_dtype=jnp.float32):
    """Forward pass of conv_block (Conv2d 3x3, pad=1, no bias -> BN(eval) -> ReLU).

    x_nchw      : (N, Cin, H, W)    float32
    weight_oihw : (Cout, Cin, 3, 3) float32 (PyTorch layout)
    gamma/beta/running_mean/running_var : (Cout,)
    returns     : (N, Cout, H, W)   float32
    """
    N, Cin, H, W = x_nchw.shape
    Cout = weight_oihw.shape[0]

    # 256-wide Cout tiles better fill the v6e/v7x 2x256x256 MXU per push when Cout
    # is large; 128 otherwise (also the right choice on v5e's 128x128 MXU).
    cout_tile = 256 if Cout >= 256 else 128
    cout_pad = pl.cdiv(Cout, cout_tile) * cout_tile

    # NCHW -> NHWC (channels on the lane dim); bf16 activations in HBM.
    # TODO(synk): at real shapes keep NHWC as the model-native layout so these
    #             wrapper transposes (a full HBM read+write each) disappear.
    x_nhwc = jnp.transpose(x_nchw, (0, 2, 3, 1)).astype(jnp.bfloat16)

    # Fold eval-mode BatchNorm: relu(conv(x, w * scale) + shift).
    # TODO(synk): training-mode BatchNorm (batch statistics) is not implemented;
    #             eval-mode running-stats normalization is used instead.
    scale = gamma / jnp.sqrt(running_var + eps)           # (Cout,)
    shift = beta - running_mean * scale                   # (Cout,)

    # OIHW -> (KH, KW, Cin, Cout), scale-folded, flattened to (9*Cin, Cout),
    # zero-padded on Cout to a lane-dense multiple of the tile, cast to bf16.
    w_hwio = jnp.transpose(weight_oihw, (2, 3, 1, 0)) * scale
    w_mat = w_hwio.reshape(KH * KW * Cin, Cout)
    w_p = (jnp.zeros((KH * KW * Cin, cout_pad), jnp.float32)
           .at[:, :Cout].set(w_mat).astype(jnp.bfloat16))
    shift_p = jnp.zeros((1, cout_pad), jnp.float32).at[:, :Cout].set(shift)

    out_nhwc = pl.pallas_call(
        _conv_bn_relu_kernel,
        out_shape=jax.ShapeDtypeStruct((N, H, W, cout_pad), out_dtype),
        grid_spec=pltpu.PrefetchScalarGridSpec(
            num_scalar_prefetch=0,
            grid=(N, cout_pad // cout_tile),
            in_specs=[
                pl.BlockSpec((1, H, W, Cin), lambda n, j: (n, 0, 0, 0)),
                pl.BlockSpec((KH * KW * Cin, cout_tile), lambda n, j: (0, j)),
                pl.BlockSpec((1, cout_tile), lambda n, j: (0, j)),
            ],
            out_specs=pl.BlockSpec((1, H, W, cout_tile),
                                   lambda n, j: (n, 0, 0, j)),
            scratch_shapes=[
                pltpu.VMEM((1, H + 2, W + 2, Cin), jnp.bfloat16),       # halo
                pltpu.VMEM((H * W, KH * KW * Cin), jnp.bfloat16),       # im2col
            ],
        ),
        compiler_params=pltpu.CompilerParams(
            # Batch axis is shardable across v7x's 2 TensorCores; the Cout axis
            # must stay sequential ("arbitrary") because the im2col scratch built
            # at j == 0 is reused by later j on the same core.
            dimension_semantics=("parallel", "arbitrary"),
            vmem_limit_bytes=48 * 1024 * 1024,
        ),
    )(x_nhwc, w_p, shift_p)

    # Drop channel padding, NHWC -> NCHW (PyTorch output convention), f32.
    return jnp.transpose(out_nhwc[..., :Cout].astype(jnp.float32), (0, 3, 1, 2))


def _reference(x_nchw, weight_oihw, gamma, beta, running_mean, running_var,
               eps=1e-5):
    """Pure-JAX f32 reference (lax conv) for correctness checking."""
    y = lax.conv_general_dilated(
        x_nchw, weight_oihw, window_strides=(1, 1), padding=((1, 1), (1, 1)),
        dimension_numbers=("NCHW", "OIHW", "NCHW"))
    scale = (gamma / jnp.sqrt(running_var + eps)).reshape(1, -1, 1, 1)
    shift = (beta - running_mean * gamma / jnp.sqrt(running_var + eps)
             ).reshape(1, -1, 1, 1)
    return jnp.maximum(y * scale + shift, 0.0)


if __name__ == "__main__":
    # Small deterministic shapes: batch=2, input_nc=4, output_nc=8, spatial=16.
    N, Cin, Cout, H, W = 2, 4, 8, 16, 16

    key = jax.random.PRNGKey(0)
    kx, kw, kg, kb, km, kv = jax.random.split(key, 6)

    x = jax.random.normal(kx, (N, Cin, H, W), dtype=jnp.float32)
    weight = jax.random.normal(kw, (Cout, Cin, KH, KW), dtype=jnp.float32) * 0.1
    gamma = 1.0 + 0.1 * jax.random.normal(kg, (Cout,), dtype=jnp.float32)
    beta = 0.1 * jax.random.normal(kb, (Cout,), dtype=jnp.float32)
    running_mean = 0.1 * jax.random.normal(km, (Cout,), dtype=jnp.float32)
    running_var = 1.0 + 0.1 * jax.random.uniform(kv, (Cout,), dtype=jnp.float32)

    out = conv_block_forward(x, weight, gamma, beta, running_mean, running_var)
    out = jax.block_until_ready(out)

    ref = _reference(x, weight, gamma, beta, running_mean, running_var)
    assert out.shape == (N, Cout, H, W)
    # bf16 MXU operands (f32 accumulation) -> relaxed tolerance vs f32 reference.
    assert jnp.allclose(out, ref, atol=5e-2, rtol=5e-2), "mismatch vs reference"

    print("KERNEL_OK")
</pallas_src>

<mosaic_0001>
module attributes {stable_mosaic.version = 11 : i64} {
  func.func @_conv_bn_relu_kernel(%arg0: i32, %arg1: i32, %arg2: memref<1x16x16x4xbf16, #tpu.memory_space<vmem>>, %arg3: memref<36x128xbf16, #tpu.memory_space<vmem>>, %arg4: memref<1x128xf32, #tpu.memory_space<vmem>>, %arg5: memref<1x16x16x128xf32, #tpu.memory_space<vmem>>, %arg6: memref<1x18x18x4xbf16, #tpu.memory_space<vmem>>, %arg7: memref<256x36xbf16, #tpu.memory_space<vmem>>) attributes {dimension_semantics = [#tpu.dimension_semantics<parallel>, #tpu.dimension_semantics<arbitrary>], iteration_bounds = array<i64: 2, 1>, scalar_prefetch = 0 : i64, scratch_operands = 2 : i64, tpu.core_type = #tpu.core_type<tc>, window_params = [{transform_indices = @transform_0, window_bounds = array<i64: 1, 16, 16, 4>}, {transform_indices = @transform_1, window_bounds = array<i64: 36, 128>}, {transform_indices = @transform_2, window_bounds = array<i64: 1, 128>}, {transform_indices = @transform_3, window_bounds = array<i64: 1, 16, 16, 128>}]} {
    %c0_i32 = arith.constant 0 : i32
    %0 = arith.cmpi eq, %arg1, %c0_i32 : i32
    %1 = arith.extui %0 : i1 to i32
    %c0_i32_0 = arith.constant 0 : i32
    %2 = arith.cmpi ne, %1, %c0_i32_0 : i32
    scf.if %2 {
      %cst_11 = arith.constant 0.000000e+00 : bf16
      %13 = vector.broadcast %cst_11 : bf16 to vector<1x18x18x4xbf16>
      %c0_12 = arith.constant 0 : index
      %c0_13 = arith.constant 0 : index
      %c0_14 = arith.constant 0 : index
      %c0_15 = arith.constant 0 : index
      %14 = vector.load %arg6[%c0_12, %c0_13, %c0_14, %c0_15] : memref<1x18x18x4xbf16, #tpu.memory_space<vmem>>, vector<1x18x18x4xbf16>
      tpu.vector_store %arg6[%c0_12, %c0_13, %c0_14, %c0_15], %13 {strides = array<i32>} : memref<1x18x18x4xbf16, #tpu.memory_space<vmem>>, vector<1x18x18x4xbf16>,
      %c0_16 = arith.constant 0 : index
      %c0_17 = arith.constant 0 : index
      %c0_18 = arith.constant 0 : index
      %c0_19 = arith.constant 0 : index
      %15 = vector.load %arg2[%c0_16, %c0_17, %c0_18, %c0_19] : memref<1x16x16x4xbf16, #tpu.memory_space<vmem>>, vector<1x16x16x4xbf16>
      %c0_20 = arith.constant 0 : index
      %c1 = arith.constant 1 : index
      %c1_21 = arith.constant 1 : index
      %c0_22 = arith.constant 0 : index
      %16 = vector.load %arg6[%c0_20, %c1, %c1_21, %c0_22] : memref<1x18x18x4xbf16, #tpu.memory_space<vmem>>, vector<1x16x16x4xbf16>
      tpu.vector_store %arg6[%c0_20, %c1, %c1_21, %c0_22], %15 {strides = array<i32>} : memref<1x18x18x4xbf16, #tpu.memory_space<vmem>>, vector<1x16x16x4xbf16>,
      %c0_23 = arith.constant 0 : index
      %c0_24 = arith.constant 0 : index
      %c0_25 = arith.constant 0 : index
      %c0_26 = arith.constant 0 : index
      %17 = vector.load %arg6[%c0_23, %c0_24, %c0_25, %c0_26] : memref<1x18x18x4xbf16, #tpu.memory_space<vmem>>, vector<1x16x16x4xbf16>
      %18 = vector.shape_cast %17 : vector<1x16x16x4xbf16> to vector<256x4xbf16>
      %c0_27 = arith.constant 0 : index
      %c0_28 = arith.constant 0 : index
      %c1_29 = arith.constant 1 : index
      %c0_30 = arith.constant 0 : index
      %19 = vector.load %arg6[%c0_27, %c0_28, %c1_29, %c0_30] : memref<1x18x18x4xbf16, #tpu.memory_space<vmem>>, vector<1x16x16x4xbf16>
      %20 = vector.shape_cast %19 : vector<1x16x16x4xbf16> to vector<256x4xbf16>
      %c0_31 = arith.constant 0 : index
      %c0_32 = arith.constant 0 : index
      %c2 = arith.constant 2 : index
      %c0_33 = arith.constant 0 : index
      %21 = vector.load %arg6[%c0_31, %c0_32, %c2, %c0_33] : memref<1x18x18x4xbf16, #tpu.memory_space<vmem>>, vector<1x16x16x4xbf16>
      %22 = vector.shape_cast %21 : vector<1x16x16x4xbf16> to vector<256x4xbf16>
      %c0_34 = arith.constant 0 : index
      %c1_35 = arith.constant 1 : index
      %c0_36 = arith.constant 0 : index
      %c0_37 = arith.constant 0 : index
      %23 = vector.load %arg6[%c0_34, %c1_35, %c0_36, %c0_37] : memref<1x18x18x4xbf16, #tpu.memory_space<vmem>>, vector<1x16x16x4xbf16>
      %24 = vector.shape_cast %23 : vector<1x16x16x4xbf16> to vector<256x4xbf16>
      %c0_38 = arith.constant 0 : index
      %c1_39 = arith.constant 1 : index
      %c1_40 = arith.constant 1 : index
      %c0_41 = arith.constant 0 : index
      %25 = vector.load %arg6[%c0_38, %c1_39, %c1_40, %c0_41] : memref<1x18x18x4xbf16, #tpu.memory_space<vmem>>, vector<1x16x16x4xbf16>
      %26 = vector.shape_cast %25 : vector<1x16x16x4xbf16> to vector<256x4xbf16>
      %c0_42 = arith.constant 0 : index
      %c1_43 = arith.constant 1 : index
      %c2_44 = arith.constant 2 : index
      %c0_45 = arith.constant 0 : index
      %27 = vector.load %arg6[%c0_42, %c1_43, %c2_44, %c0_45] : memref<1x18x18x4xbf16, #tpu.memory_space<vmem>>, vector<1x16x16x4xbf16>
      %28 = vector.shape_cast %27 : vector<1x16x16x4xbf16> to vector<256x4xbf16>
      %c0_46 = arith.constant 0 : index
      %c2_47 = arith.constant 2 : index
      %c0_48 = arith.constant 0 : index
      %c0_49 = arith.constant 0 : index
      %29 = vector.load %arg6[%c0_46, %c2_47, %c0_48, %c0_49] : memref<1x18x18x4xbf16, #tpu.memory_space<vmem>>, vector<1x16x16x4xbf16>
      %30 = vector.shape_cast %29 : vector<1x16x16x4xbf16> to vector<256x4xbf16>
      %c0_50 = arith.constant 0 : index
      %c2_51 = arith.constant 2 : index
      %c1_52 = arith.constant 1 : index
      %c0_53 = arith.constant 0 : index
      %31 = vector.load %arg6[%c0_50, %c2_51, %c1_52, %c0_53] : memref<1x18x18x4xbf16, #tpu.memory_space<vmem>>, vector<1x16x16x4xbf16>
      %32 = vector.shape_cast %31 : vector<1x16x16x4xbf16> to vector<256x4xbf16>
      %c0_54 = arith.constant 0 : index
      %c2_55 = arith.constant 2 : index
      %c2_56 = arith.constant 2 : index
      %c0_57 = arith.constant 0 : index
      %33 = vector.load %arg6[%c0_54, %c2_55, %c2_56, %c0_57] : memref<1x18x18x4xbf16, #tpu.memory_space<vmem>>, vector<1x16x16x4xbf16>
      %34 = vector.shape_cast %33 : vector<1x16x16x4xbf16> to vector<256x4xbf16>
      %35 = tpu.concatenate %18, %20, %22, %24, %26, %28, %30, %32, %34 in 1 : vector<256x4xbf16>, vector<256x4xbf16>, vector<256x4xbf16>, vector<256x4xbf16>, vector<256x4xbf16>, vector<256x4xbf16>, vector<256x4xbf16>, vector<256x4xbf16>, vector<256x4xbf16> -> vector<256x36xbf16>
      %c0_58 = arith.constant 0 : index
      %c0_59 = arith.constant 0 : index
      %36 = vector.load %arg7[%c0_58, %c0_59] : memref<256x36xbf16, #tpu.memory_space<vmem>>, vector<256x36xbf16>
      tpu.vector_store %arg7[%c0_58, %c0_59], %35 {strides = array<i32>} : memref<256x36xbf16, #tpu.memory_space<vmem>>, vector<256x36xbf16>,
    } else {
    }
    %c0 = arith.constant 0 : index
    %c0_1 = arith.constant 0 : index
    %3 = vector.load %arg7[%c0, %c0_1] : memref<256x36xbf16, #tpu.memory_space<vmem>>, vector<256x36xbf16>
    %c0_2 = arith.constant 0 : index
    %c0_3 = arith.constant 0 : index
    %4 = vector.load %arg3[%c0_2, %c0_3] : memref<36x128xbf16, #tpu.memory_space<vmem>>, vector<36x128xbf16>
    %cst = arith.constant dense<0.000000e+00> : vector<256x128xf32>
    %5 = tpu.matmul %3, %4, %cst {dimension_numbers = #tpu.dot_dimension_numbers<[1], [0], [0], [1], [0, 0, 1, 1], [], []>} : vector<256x36xbf16>, vector<36x128xbf16>, vector<256x128xf32> -> vector<256x128xf32>
    %c0_4 = arith.constant 0 : index
    %c0_5 = arith.constant 0 : index
    %6 = vector.load %arg4[%c0_4, %c0_5] : memref<1x128xf32, #tpu.memory_space<vmem>>, vector<1x128xf32>
    %7 = vector.broadcast %6 : vector<1x128xf32> to vector<256x128xf32>
    %8 = arith.addf %5, %7 : vector<256x128xf32>
    %cst_6 = arith.constant 0.000000e+00 : f32
    %9 = vector.broadcast %cst_6 : f32 to vector<256x128xf32>
    %10 = arith.maximumf %8, %9 : vector<256x128xf32>
    %11 = vector.shape_cast %10 : vector<256x128xf32> to vector<1x16x16x128xf32>
    %c0_7 = arith.constant 0 : index
    %c0_8 = arith.constant 0 : index
    %c0_9 = arith.constant 0 : index
    %c0_10 = arith.constant 0 : index
    %12 = vector.load %arg5[%c0_7, %c0_8, %c0_9, %c0_10] : memref<1x16x16x128xf32, #tpu.memory_space<vmem>>, vector<1x16x16x128xf32>
    tpu.vector_store %arg5[%c0_7, %c0_8, %c0_9, %c0_10], %11 {strides = array<i32>} : memref<1x16x16x128xf32, #tpu.memory_space<vmem>>, vector<1x16x16x128xf32>,
    return
  }
  func.func @transform_0(%arg0: i32, %arg1: i32) -> (i32, i32, i32, i32) {
    %c0_i32 = arith.constant 0 : i32
    %c0_i32_0 = arith.constant 0 : i32
    %c0_i32_1 = arith.constant 0 : i32
    %c0_i32_2 = arith.constant 0 : i32
    return %arg0, %c0_i32, %c0_i32_0, %c0_i32_1 : i32, i32, i32, i32
  }
  func.func @transform_1(%arg0: i32, %arg1: i32) -> (i32, i32) {
    %c0_i32 = arith.constant 0 : i32
    %c0_i32_0 = arith.constant 0 : i32
    return %c0_i32, %arg1 : i32, i32
  }
  func.func @transform_2(%arg0: i32, %arg1: i32) -> (i32, i32) {
    %c0_i32 = arith.constant 0 : i32
    %c0_i32_0 = arith.constant 0 : i32
    return %c0_i32, %arg1 : i32, i32
  }
  func.func @transform_3(%arg0: i32, %arg1: i32) -> (i32, i32, i32, i32) {
    %c0_i32 = arith.constant 0 : i32
    %c0_i32_0 = arith.constant 0 : i32
    %c0_i32_1 = arith.constant 0 : i32
    return %arg0, %c0_i32, %c0_i32_0, %arg1 : i32, i32, i32, i32
  }
}

</mosaic_0001>

<llo_original>
// kernel: tpu_custom_call.1
$region0: #{tpu_custom_call.1}
  #allocation0 [shape = 'u32[]', space=smem, size = 0x4, offset = 0x4, fixed_abs, tag = 'smem constant byte address 0x4 - core index']
  #allocation1 [shape = 'u32[144,128]{1,0:T(1,128)}', space=vmem, size = 0x12000, scoped, tag = 'internal scratch']
  #allocation2 [shape = 'bf16[1,18,18,4]{3,2,1,0:T(8,128)(2,1)}', space=vmem, size = 0x1b000, scoped, tag = 'scratch operand']
  #allocation3 [shape = 'bf16[256,36]{1,0:T(8,128)(2,1)}', space=vmem, size = 0x10000, scoped, tag = 'scratch operand']
  %s0 = inlined_call_operand.vmem [shape: bf16[2,16,16,4], index: 0, kind: input, shape index: {}]
  %s1 = inlined_call_operand.vmem [shape: bf16[36,128], index: 1, kind: input, shape index: {}]
  %s2 = inlined_call_operand.vmem [shape: f32[1,128], index: 2, kind: input, shape index: {}]
  %s3 = inlined_call_operand.hbm [shape: f32[2,16,16,128], index: 3, kind: output, shape index: {}]
  %s4 = sld [smem:[#allocation0]]
  $region49: #{tpu_custom_call.1} parent=0
    _
  %s6 = ssub.s32 1, %s4
  %s7 = scalar_select 0, %s6, %s4
  $region1: #{tpu_custom_call.1} parent=0
    #allocation4 [shape = 'u8[262144]{0}', space=vmem, size = 0x40000, scoped, tag = 'output window, operand 0']
    #allocation5 [shape = 's32[2]{0}', space=sflag, size = 0x8, scoped, tag = 'scoped memory for tpu_custom_call.1']
    %8 = vsyncpa [#allocation5], 0
    %s9 = scalar_lea.sflag [#allocation5], 1
    %10 = vsyncpa %s9, 0
    loop: start=0, step=1, limit=4
    $region2: #{tpu_custom_call.1} parent=1 // loop_pre_header
      _
    $region3: #{tpu_custom_call.1} parent=1 // loop_header
      %s12 = sphi 0, %s16
      %p13 = scmp.ge.s32.totalorder %s12, 4
      %s19 = sphi 0, %s31
      %s20 = sphi 0, %s27
      %s21 = sphi 0, %s19
      %s22 = sphi 0, %s20
      %s23 = sphi 0, %s21
      %s24 = sphi 0, %s22
      %s34 = sphi 0, %s36
      %s37 = sphi 0, %s34
      %s38 = sphi 0, %s37
      %s54 = sphi 0, %s38
      %s60 = sphi 0, %s62
      %s63 = sphi 0, %s60
      %s64 = sphi 0, %s63
      %s80 = sphi 0, %s64
      %s86 = sphi 0, %s88
      %s89 = sphi 0, %s86
      %s90 = sphi 0, %s89
      %s106 = sphi 0, %s90
      %s114 = sphi 0, %s116
      %s117 = sphi 0, %s114
      %s118 = sphi 0, %s117
      %s134 = sphi 0, %s118
    $region4: #{tpu_custom_call.1} parent=1 // loop_header_branch
      %15 = sbr.rel (%p13) target = $region8
    $region5: #{tpu_custom_call.1} parent=1 // loop_body
      %s17 = ssub.s32 %s12, 1
      %s18 = ssub.s32 %s12, 2
      %s25 = sadd.s32 1, %s20
      %p26 = scmp.ge.s32.totalorder %s25, 1
      %s27 = scalar_select %p26, 0, %s25
      %s28 = sadd.s32 1, %s19
      %s29 = scalar_select %p26, %s28, %s19
      %p30 = scmp.ge.s32.totalorder %s29, 2
      %s31 = scalar_select %p30, 0, %s29
      %s32 = ssub.s32 %s19, %s31
      %p33 = scmp.eq.s32.totalorder %s32, 0
      %s35 = sadd.s32 %s34, 1
      %s36 = scalar_select %p33, %s34, %s35
      %p39 = pneg %p33
      %p40 = scmp.eq.s32.totalorder %s12, 1
      %p41 = por %p39, %p40
      %p42 = scmp.ne.s32.totalorder %s34, %s37
      %p43 = scmp.eq.s32.totalorder %s12, 0
      %p44 = por %p42, %p43
      %p45 = scmp.ne.s32.totalorder %s34, %s37
      %p46 = scmp.eq.s32.totalorder %s17, 1
      %p47 = por %p45, %p46
      %p48 = scmp.ne.s32.totalorder %s37, %s38
      %p49 = scmp.eq.s32.totalorder %s17, 0
      %p50 = por %p48, %p49
      %p51 = scmp.ne.s32.totalorder %s37, %s38
      %p52 = scmp.eq.s32.totalorder %s18, 1
      %p53 = por %p51, %p52
      %p55 = scmp.ne.s32.totalorder %s38, %s54
      %p56 = scmp.eq.s32.totalorder %s18, 0
      %p57 = por %p55, %p56
      %s58 = ssub.s32 %s20, %s27
      %p59 = scmp.eq.s32.totalorder %s58, 0
      %s61 = sadd.s32 %s60, 1
      %s62 = scalar_select %p59, %s60, %s61
      %p65 = pneg %p59
      %p66 = scmp.eq.s32.totalorder %s12, 1
      %p67 = por %p65, %p66
      %p68 = scmp.ne.s32.totalorder %s60, %s63
      %p69 = scmp.eq.s32.totalorder %s12, 0
      %p70 = por %p68, %p69
      %p71 = scmp.ne.s32.totalorder %s60, %s63
      %p72 = scmp.eq.s32.totalorder %s17, 1
      %p73 = por %p71, %p72
      %p74 = scmp.ne.s32.totalorder %s63, %s64
      %p75 = scmp.eq.s32.totalorder %s17, 0
      %p76 = por %p74, %p75
      %p77 = scmp.ne.s32.totalorder %s63, %s64
      %p78 = scmp.eq.s32.totalorder %s18, 1
      %p79 = por %p77, %p78
      %p81 = scmp.ne.s32.totalorder %s64, %s80
      %p82 = scmp.eq.s32.totalorder %s18, 0
      %p83 = por %p81, %p82
      %s84 = ssub.s32 %s20, %s27
      %p85 = scmp.eq.s32.totalorder %s84, 0
      %s87 = sadd.s32 %s86, 1
      %s88 = scalar_select %p85, %s86, %s87
      %p91 = pneg %p85
      %p92 = scmp.eq.s32.totalorder %s12, 1
      %p93 = por %p91, %p92
      %p94 = scmp.ne.s32.totalorder %s86, %s89
      %p95 = scmp.eq.s32.totalorder %s12, 0
      %p96 = por %p94, %p95
      %p97 = scmp.ne.s32.totalorder %s86, %s89
      %p98 = scmp.eq.s32.totalorder %s17, 1
      %p99 = por %p97, %p98
      %p100 = scmp.ne.s32.totalorder %s89, %s90
      %p101 = scmp.eq.s32.totalorder %s17, 0
      %p102 = por %p100, %p101
      %p103 = scmp.ne.s32.totalorder %s89, %s90
      %p104 = scmp.eq.s32.totalorder %s18, 1
      %p105 = por %p103, %p104
      %p107 = scmp.ne.s32.totalorder %s90, %s106
      %p108 = scmp.eq.s32.totalorder %s18, 0
      %p109 = por %p107, %p108
      %s110 = ssub.s32 %s19, %s31
      %s111 = ssub.s32 %s20, %s27
      %s112 = sor.u32 %s110, %s111
      %p113 = scmp.eq.s32.totalorder %s112, 0
      %s115 = sadd.s32 %s114, 1
      %s116 = scalar_select %p113, %s114, %s115
      %p119 = pneg %p113
      %p120 = scmp.eq.s32.totalorder %s12, 1
      %p121 = por %p119, %p120
      %p122 = scmp.ne.s32.totalorder %s114, %s117
      %p123 = scmp.eq.s32.totalorder %s12, 0
      %p124 = por %p122, %p123
      %p125 = scmp.ne.s32.totalorder %s114, %s117
      %p126 = scmp.eq.s32.totalorder %s17, 1
      %p127 = por %p125, %p126
      %p128 = scmp.ne.s32.totalorder %s117, %s118
      %p129 = scmp.eq.s32.totalorder %s17, 0
      %p130 = por %p128, %p129
      %p131 = scmp.ne.s32.totalorder %s117, %s118
      %p132 = scmp.eq.s32.totalorder %s18, 1
      %p133 = por %p131, %p132
      %p135 = scmp.ne.s32.totalorder %s118, %s134
      %p136 = scmp.eq.s32.totalorder %s18, 0
      %p137 = por %p135, %p136
      %p138 = scmp.le.s32.totalorder 1, %s12
      %p139 = scmp.lt.s32.totalorder %s12, 3
      %p140 = pnand %p138, %p139
      %p141 = pneg %p140
      // Predicated region
      $region9: #{tpu_custom_call.1} parent=5 // pred_check
        _
      $region10: #{tpu_custom_call.1} parent=5 // pred_check_branch
        %143 = sbr.rel (%p140) target = $region12
      $region11: #{tpu_custom_call.1} parent=5 // pred_region
        %s144 = ssub.s32 %s12, 1
        // Predicated region
        $region13: #{tpu_custom_call.1} parent=11 // pred_check
          %p145 = pneg %p76
        $region14: #{tpu_custom_call.1} parent=11 // pred_check_branch
          %147 = sbr.rel (%p145) target = $region16
        $region15: #{tpu_custom_call.1} parent=11 // pred_region
          %p148 = scmp.lt.s32.totalorder %s22, 0
          %s149 = scalar_select %p148, %s22, 0
          %s150 = smul.addr %s149, 4
          %s151 = scalar_lea.vmem %s1, %s150
        $region16: #{tpu_custom_call.1} parent=11 // pred_fallthru
          _
        // Predicated region
        $region17: #{tpu_custom_call.1} parent=11 // pred_check
          %p152 = pneg %p102
        $region18: #{tpu_custom_call.1} parent=11 // pred_check_branch
          %154 = sbr.rel (%p152) target = $region20
        $region19: #{tpu_custom_call.1} parent=11 // pred_region
          %p155 = scmp.lt.s32.totalorder %s22, 0
          %s156 = scalar_select %p155, %s22, 0
          %s157 = scalar_lea.vmem %s2, %s156
        $region20: #{tpu_custom_call.1} parent=11 // pred_fallthru
          _
      $region12: #{tpu_custom_call.1} parent=5 // pred_fallthru
        _
      %p158 = scmp.lt.s32.totalorder %s12, 2
      // Predicated region
      $region21: #{tpu_custom_call.1} parent=5 // pred_check
        %p159 = pneg %p158
      $region22: #{tpu_custom_call.1} parent=5 // pred_check_branch
        %161 = sbr.rel (%p159) target = $region24
      $region23: #{tpu_custom_call.1} parent=5 // pred_region
        // Predicated region
        $region25: #{tpu_custom_call.1} parent=23 // pred_check
          %p162 = pneg %p44
        $region26: #{tpu_custom_call.1} parent=23 // pred_check_branch
          %164 = sbr.rel (%p162) target = $region28
        $region27: #{tpu_custom_call.1} parent=23 // pred_region
          %p165 = scmp.lt.s32.totalorder %s19, 1
          %s166 = scalar_select %p165, %s19, 1
          %s167 = smul.addr %s166, 32
          %s168 = smul.addr %s167, 4
          %s169 = scalar_lea.vmem %s0, %s168
        $region28: #{tpu_custom_call.1} parent=23 // pred_fallthru
          _
      $region24: #{tpu_custom_call.1} parent=5 // pred_fallthru
        _
      %p170 = scmp.le.s32.totalorder 1, %s12
      %p171 = scmp.lt.s32.totalorder %s12, 3
      %p172 = pnand %p170, %p171
      %p173 = pneg %p172
      // Predicated region
      $region29: #{tpu_custom_call.1} parent=5 // pred_check
        _
      $region30: #{tpu_custom_call.1} parent=5 // pred_check_branch
        %175 = sbr.rel (%p172) target = $region32
      $region31: #{tpu_custom_call.1} parent=5 // pred_region
        %s176 = ssub.s32 %s12, 1
        %p177 = scmp.lt.s32.totalorder %s21, 1
        %s178 = scalar_select %p177, %s21, 1
        %s179 = smul.addr %s178, 32
        %s180 = smul.addr %s179, 4
        %s181 = scalar_lea.vmem %s0, %s180
        %p182 = pneg %p50
        %p183 = pneg %p47
        %p184 = scmp.lt.s32.totalorder %s22, 0
        %s185 = scalar_select %p184, %s22, 0
        %s186 = smul.addr %s185, 4
        %s187 = scalar_lea.vmem %s1, %s186
        %p188 = pneg %p76
        %p189 = pneg %p73
        %p190 = scmp.lt.s32.totalorder %s22, 0
        %s191 = scalar_select %p190, %s22, 0
        %s192 = scalar_lea.vmem %s2, %s191
        %p193 = pneg %p102
        %p194 = pneg %p99
        %p195 = pneg %p130
        %p196 = pneg %p127
        %s197 = sand.u32 %s117, 1
        %s198 = scalar_lea.sflag [#allocation5], %s197
        %s199 = sand.u32 %s117, 1
        %s200 = smul.addr %s199, 256
        %s201 = scalar_lea.vmem [#allocation4], %s200
        %p202 = scmp.lt.s32.totalorder %s21, 1
        %s203 = scalar_select %p202, %s21, 1
        %s204 = smul.addr %s203, 32
        %s205 = smul.addr %s204, 4
        %s206 = scalar_lea.vmem %s0, %s205
        %p207 = scmp.lt.s32.totalorder %s22, 0
        %s208 = scalar_select %p207, %s22, 0
        %s209 = smul.addr %s208, 4
        %s210 = scalar_lea.vmem %s1, %s209
        %p211 = scmp.lt.s32.totalorder %s22, 0
        %s212 = scalar_select %p211, %s22, 0
        %s213 = scalar_lea.vmem %s2, %s212
        %p215 = scmp.eq.s32.totalorder %s22, 0
        // Predicated region
        $region33: #{tpu_custom_call.1} parent=31 // pred_check
          %p216 = pneg %p215
        $region34: #{tpu_custom_call.1} parent=31 // pred_check_branch
          %218 = sbr.rel (%p216) target = $region36
        $region35: #{tpu_custom_call.1} parent=31 // pred_region
          %vm219 = vcmask 27648
          %220 = vst.msk [vmem:[#allocation2] sm:$0xf] %vm219, 0
          %221 = vst.msk [vmem:[#allocation2 + $0x4] sm:$0xf] %vm219, 0
          %vm222 = vcmask 24576
          %223 = vst.msk [vmem:[#allocation2 + $0x8] sm:$0x1] %vm222, 0
          %224 = vst.msk [vmem:[#allocation2 + $0xc] sm:$0xf] %vm219, 0
          %225 = vst.msk [vmem:[#allocation2 + $0x10] sm:$0xf] %vm219, 0
          %226 = vst.msk [vmem:[#allocation2 + $0x14] sm:$0x1] %vm222, 0
          %227 = vst.msk [vmem:[#allocation2 + $0x18] sm:$0xf] %vm219, 0
          %228 = vst.msk [vmem:[#allocation2 + $0x1c] sm:$0xf] %vm219, 0
          %229 = vst.msk [vmem:[#allocation2 + $0x20] sm:$0x1] %vm222, 0
          %230 = vst.msk [vmem:[#allocation2 + $0x24] sm:$0xf] %vm219, 0
          %231 = vst.msk [vmem:[#allocation2 + $0x28] sm:$0xf] %vm219, 0
          %232 = vst.msk [vmem:[#allocation2 + $0x2c] sm:$0x1] %vm222, 0
          %233 = vst.msk [vmem:[#allocation2 + $0x30] sm:$0xf] %vm219, 0
          %234 = vst.msk [vmem:[#allocation2 + $0x34] sm:$0xf] %vm219, 0
          %235 = vst.msk [vmem:[#allocation2 + $0x38] sm:$0x1] %vm222, 0
          %236 = vst.msk [vmem:[#allocation2 + $0x3c] sm:$0xf] %vm219, 0
          %237 = vst.msk [vmem:[#allocation2 + $0x40] sm:$0xf] %vm219, 0
          %238 = vst.msk [vmem:[#allocation2 + $0x44] sm:$0x1] %vm222, 0
          %239 = vst.msk [vmem:[#allocation2 + $0x48] sm:$0xf] %vm219, 0
          %240 = vst.msk [vmem:[#allocation2 + $0x4c] sm:$0xf] %vm219, 0
          %241 = vst.msk [vmem:[#allocation2 + $0x50] sm:$0x1] %vm222, 0
          %242 = vst.msk [vmem:[#allocation2 + $0x54] sm:$0xf] %vm219, 0
          %243 = vst.msk [vmem:[#allocation2 + $0x58] sm:$0xf] %vm219, 0
          %244 = vst.msk [vmem:[#allocation2 + $0x5c] sm:$0x1] %vm222, 0
          %245 = vst.msk [vmem:[#allocation2 + $0x60] sm:$0xf] %vm219, 0
          %246 = vst.msk [vmem:[#allocation2 + $0x64] sm:$0xf] %vm219, 0
          %247 = vst.msk [vmem:[#allocation2 + $0x68] sm:$0x1] %vm222, 0
          %248 = vst.msk [vmem:[#allocation2 + $0x6c] sm:$0xf] %vm219, 0
          %249 = vst.msk [vmem:[#allocation2 + $0x70] sm:$0xf] %vm219, 0
          %250 = vst.msk [vmem:[#allocation2 + $0x74] sm:$0x1] %vm222, 0
          %251 = vst.msk [vmem:[#allocation2 + $0x78] sm:$0xf] %vm219, 0
          %252 = vst.msk [vmem:[#allocation2 + $0x7c] sm:$0xf] %vm219, 0
          %253 = vst.msk [vmem:[#allocation2 + $0x80] sm:$0x1] %vm222, 0
          %254 = vst.msk [vmem:[#allocation2 + $0x84] sm:$0xf] %vm219, 0
          %255 = vst.msk [vmem:[#allocation2 + $0x88] sm:$0xf] %vm219, 0
          %256 = vst.msk [vmem:[#allocation2 + $0x8c] sm:$0x1] %vm222, 0
          %257 = vst.msk [vmem:[#allocation2 + $0x90] sm:$0xf] %vm219, 0
          %258 = vst.msk [vmem:[#allocation2 + $0x94] sm:$0xf] %vm219, 0
          %259 = vst.msk [vmem:[#allocation2 + $0x98] sm:$0x1] %vm222, 0
          %260 = vst.msk [vmem:[#allocation2 + $0x9c] sm:$0xf] %vm219, 0
          %261 = vst.msk [vmem:[#allocation2 + $0xa0] sm:$0xf] %vm219, 0
          %262 = vst.msk [vmem:[#allocation2 + $0xa4] sm:$0x1] %vm222, 0
          %263 = vst.msk [vmem:[#allocation2 + $0xa8] sm:$0xf] %vm219, 0
          %264 = vst.msk [vmem:[#allocation2 + $0xac] sm:$0xf] %vm219, 0
          %265 = vst.msk [vmem:[#allocation2 + $0xb0] sm:$0x1] %vm222, 0
          %266 = vst.msk [vmem:[#allocation2 + $0xb4] sm:$0xf] %vm219, 0
          %267 = vst.msk [vmem:[#allocation2 + $0xb8] sm:$0xf] %vm219, 0
          %268 = vst.msk [vmem:[#allocation2 + $0xbc] sm:$0x1] %vm222, 0
          %269 = vst.msk [vmem:[#allocation2 + $0xc0] sm:$0xf] %vm219, 0
          %270 = vst.msk [vmem:[#allocation2 + $0xc4] sm:$0xf] %vm219, 0
          %271 = vst.msk [vmem:[#allocation2 + $0xc8] sm:$0x1] %vm222, 0
          %272 = vst.msk [vmem:[#allocation2 + $0xcc] sm:$0xf] %vm219, 0
          %273 = vst.msk [vmem:[#allocation2 + $0xd0] sm:$0xf] %vm219, 0
          %274 = vst.msk [vmem:[#allocation2 + $0xd4] sm:$0x1] %vm222, 0
          %v275 = vld [vmem:[%s206] sm:$0xf]
          %v276 = vld [vmem:[%s206 + $0x4] sm:$0xf]
          %v277 = vld [vmem:[%s206 + $0x8] sm:$0xf]
          %v278 = vld [vmem:[%s206 + $0xc] sm:$0xf]
          %v279 = vld [vmem:[%s206 + $0x10] sm:$0xf]
          %v280 = vld [vmem:[%s206 + $0x14] sm:$0xf]
          %v281 = vld [vmem:[%s206 + $0x18] sm:$0xf]
          %v282 = vld [vmem:[%s206 + $0x1c] sm:$0xf]
          %v283 = vld [vmem:[%s206 + $0x20] sm:$0xf]
          %v284 = vld [vmem:[%s206 + $0x24] sm:$0xf]
          %v285 = vld [vmem:[%s206 + $0x28] sm:$0xf]
          %v286 = vld [vmem:[%s206 + $0x2c] sm:$0xf]
          %v287 = vld [vmem:[%s206 + $0x30] sm:$0xf]
          %v288 = vld [vmem:[%s206 + $0x34] sm:$0xf]
          %v289 = vld [vmem:[%s206 + $0x38] sm:$0xf]
          %v290 = vld [vmem:[%s206 + $0x3c] sm:$0xf]
          %v291 = vld [vmem:[%s206 + $0x40] sm:$0xf]
          %v292 = vld [vmem:[%s206 + $0x44] sm:$0xf]
          %v293 = vld [vmem:[%s206 + $0x48] sm:$0xf]
          %v294 = vld [vmem:[%s206 + $0x4c] sm:$0xf]
          %v295 = vld [vmem:[%s206 + $0x50] sm:$0xf]
          %v296 = vld [vmem:[%s206 + $0x54] sm:$0xf]
          %v297 = vld [vmem:[%s206 + $0x58] sm:$0xf]
          %v298 = vld [vmem:[%s206 + $0x5c] sm:$0xf]
          %v299 = vld [vmem:[%s206 + $0x60] sm:$0xf]
          %v300 = vld [vmem:[%s206 + $0x64] sm:$0xf]
          %v301 = vld [vmem:[%s206 + $0x68] sm:$0xf]
          %v302 = vld [vmem:[%s206 + $0x6c] sm:$0xf]
          %v303 = vld [vmem:[%s206 + $0x70] sm:$0xf]
          %v304 = vld [vmem:[%s206 + $0x74] sm:$0xf]
          %v305 = vld [vmem:[%s206 + $0x78] sm:$0xf]
          %v306 = vld [vmem:[%s206 + $0x7c] sm:$0xf]
          %vm307 = vsmask.f32 256
          %vm308 = vsmask.f32 4368
          %vm309 = vmor %vm307, %vm308
          %v311 = vshrl.u32 %v275, 16
          %v313 = vrot.slane %v311, 7
          %v314 = vshll.u32 %v275, 16
          %v316 = vor.u32 %v313, %v314
          %v317 = vrot.slane %v313, 4
          %v319 = vshrl.u32 %v276, 16
          %v321 = vrot.slane %v319, 7
          %v322 = vshll.u32 %v276, 16
          %v324 = vor.u32 %v321, %v322
          %v325 = vsel %vm309, %v317, %v324
          %v326 = vrot.slane %v321, 4
          %v328 = vshrl.u32 %v277, 16
          %v330 = vrot.slane %v328, 7
          %v331 = vshll.u32 %v277, 16
          %v333 = vor.u32 %v330, %v331
          %v334 = vrot.slane %v330, 4
          %v336 = vshrl.u32 %v278, 16
          %v338 = vrot.slane %v336, 7
          %v339 = vshll.u32 %v278, 16
          %v341 = vor.u32 %v338, %v339
          %v342 = vsel %vm309, %v334, %v341
          %v343 = vrot.slane %v338, 4
          %v345 = vshrl.u32 %v279, 16
          %v347 = vrot.slane %v345, 7
          %v348 = vshll.u32 %v279, 16
          %v350 = vor.u32 %v347, %v348
          %v351 = vrot.slane %v347, 4
          %v353 = vshrl.u32 %v280, 16
          %v355 = vrot.slane %v353, 7
          %v356 = vshll.u32 %v280, 16
          %v358 = vor.u32 %v355, %v356
          %v359 = vsel %vm309, %v351, %v358
          %v360 = vrot.slane %v355, 4
          %v362 = vshrl.u32 %v281, 16
          %v364 = vrot.slane %v362, 7
          %v365 = vshll.u32 %v281, 16
          %v367 = vor.u32 %v364, %v365
          %v368 = vrot.slane %v364, 4
          %v370 = vshrl.u32 %v282, 16
          %v372 = vrot.slane %v370, 7
          %v373 = vshll.u32 %v282, 16
          %v375 = vor.u32 %v372, %v373
          %v376 = vsel %vm309, %v368, %v375
          %v377 = vrot.slane %v372, 4
          %v379 = vshrl.u32 %v283, 16
          %v381 = vrot.slane %v379, 7
          %v382 = vshll.u32 %v283, 16
          %v384 = vor.u32 %v381, %v382
          %v385 = vrot.slane %v381, 4
          %v387 = vshrl.u32 %v284, 16
          %v389 = vrot.slane %v387, 7
          %v390 = vshll.u32 %v284, 16
          %v392 = vor.u32 %v389, %v390
          %v393 = vsel %vm309, %v385, %v392
          %v394 = vrot.slane %v389, 4
          %v396 = vshrl.u32 %v285, 16
          %v398 = vrot.slane %v396, 7
          %v399 = vshll.u32 %v285, 16
          %v401 = vor.u32 %v398, %v399
          %v402 = vrot.slane %v398, 4
          %v404 = vshrl.u32 %v286, 16
          %v406 = vrot.slane %v404, 7
          %v407 = vshll.u32 %v286, 16
          %v409 = vor.u32 %v406, %v407
          %v410 = vsel %vm309, %v402, %v409
          %v411 = vrot.slane %v406, 4
          %v413 = vshrl.u32 %v287, 16
          %v415 = vrot.slane %v413, 7
          %v416 = vshll.u32 %v287, 16
          %v418 = vor.u32 %v415, %v416
          %v419 = vrot.slane %v415, 4
          %v421 = vshrl.u32 %v288, 16
          %v423 = vrot.slane %v421, 7
          %v424 = vshll.u32 %v288, 16
          %v426 = vor.u32 %v423, %v424
          %v427 = vsel %vm309, %v419, %v426
          %v428 = vrot.slane %v423, 4
          %v430 = vshrl.u32 %v289, 16
          %v432 = vrot.slane %v430, 7
          %v433 = vshll.u32 %v289, 16
          %v435 = vor.u32 %v432, %v433
          %v436 = vrot.slane %v432, 4
          %v438 = vshrl.u32 %v290, 16
          %v440 = vrot.slane %v438, 7
          %v441 = vshll.u32 %v290, 16
          %v443 = vor.u32 %v440, %v441
          %v444 = vsel %vm309, %v436, %v443
          %v445 = vrot.slane %v440, 4
          %v447 = vshrl.u32 %v291, 16
          %v449 = vrot.slane %v447, 7
          %v450 = vshll.u32 %v291, 16
          %v452 = vor.u32 %v449, %v450
          %v453 = vrot.slane %v449, 4
          %v455 = vshrl.u32 %v292, 16
          %v457 = vrot.slane %v455, 7
          %v458 = vshll.u32 %v292, 16
          %v460 = vor.u32 %v457, %v458
          %v461 = vsel %vm309, %v453, %v460
          %v462 = vrot.slane %v457, 4
          %v464 = vshrl.u32 %v293, 16
          %v466 = vrot.slane %v464, 7
          %v467 = vshll.u32 %v293, 16
          %v469 = vor.u32 %v466, %v467
          %v470 = vrot.slane %v466, 4
          %v472 = vshrl.u32 %v294, 16
          %v474 = vrot.slane %v472, 7
          %v475 = vshll.u32 %v294, 16
          %v477 = vor.u32 %v474, %v475
          %v478 = vsel %vm309, %v470, %v477
          %v479 = vrot.slane %v474, 4
          %v481 = vshrl.u32 %v295, 16
          %v483 = vrot.slane %v481, 7
          %v484 = vshll.u32 %v295, 16
          %v486 = vor.u32 %v483, %v484
          %v487 = vrot.slane %v483, 4
          %v489 = vshrl.u32 %v296, 16
          %v491 = vrot.slane %v489, 7
          %v492 = vshll.u32 %v296, 16
          %v494 = vor.u32 %v491, %v492
          %v495 = vsel %vm309, %v487, %v494
          %v496 = vrot.slane %v491, 4
          %v498 = vshrl.u32 %v297, 16
          %v500 = vrot.slane %v498, 7
          %v501 = vshll.u32 %v297, 16
          %v503 = vor.u32 %v500, %v501
          %v504 = vrot.slane %v500, 4
          %v506 = vshrl.u32 %v298, 16
          %v508 = vrot.slane %v506, 7
          %v509 = vshll.u32 %v298, 16
          %v511 = vor.u32 %v508, %v509
          %v512 = vsel %vm309, %v504, %v511
          %v513 = vrot.slane %v508, 4
          %v515 = vshrl.u32 %v299, 16
          %v517 = vrot.slane %v515, 7
          %v518 = vshll.u32 %v299, 16
          %v520 = vor.u32 %v517, %v518
          %v521 = vrot.slane %v517, 4
          %v523 = vshrl.u32 %v300, 16
          %v525 = vrot.slane %v523, 7
          %v526 = vshll.u32 %v300, 16
          %v528 = vor.u32 %v525, %v526
          %v529 = vsel %vm309, %v521, %v528
          %v530 = vrot.slane %v525, 4
          %v532 = vshrl.u32 %v301, 16
          %v534 = vrot.slane %v532, 7
          %v535 = vshll.u32 %v301, 16
          %v537 = vor.u32 %v534, %v535
          %v538 = vrot.slane %v534, 4
          %v540 = vshrl.u32 %v302, 16
          %v542 = vrot.slane %v540, 7
          %v543 = vshll.u32 %v302, 16
          %v545 = vor.u32 %v542, %v543
          %v546 = vsel %vm309, %v538, %v545
          %v547 = vrot.slane %v542, 4
          %v549 = vshrl.u32 %v303, 16
          %v551 = vrot.slane %v549, 7
          %v552 = vshll.u32 %v303, 16
          %v554 = vor.u32 %v551, %v552
          %v555 = vrot.slane %v551, 4
          %v557 = vshrl.u32 %v304, 16
          %v559 = vrot.slane %v557, 7
          %v560 = vshll.u32 %v304, 16
          %v562 = vor.u32 %v559, %v560
          %v563 = vsel %vm309, %v555, %v562
          %v564 = vrot.slane %v559, 4
          %v566 = vshrl.u32 %v305, 16
          %v568 = vrot.slane %v566, 7
          %v569 = vshll.u32 %v305, 16
          %v571 = vor.u32 %v568, %v569
          %v572 = vrot.slane %v568, 4
          %v574 = vshrl.u32 %v306, 16
          %v576 = vrot.slane %v574, 7
          %v577 = vshll.u32 %v306, 16
          %v579 = vor.u32 %v576, %v577
          %v580 = vsel %vm309, %v572, %v579
          %v581 = vrot.slane %v576, 4
          %s630 = scalar_lea.vmem [#allocation2], 12
          %vm631 = vcmask 27648
          %vm632 = vsmask.f32 7938
          %vm633 = vmand %vm631, %vm632
          %v634 = vld [vmem:[%s630] sm:$0xf]
          %v635 = vsel %vm633, %v316, %v634
          %636 = vst [vmem:[%s630] sm:$0xf] %v635
          %637 = vst.msk [vmem:[%s630 + $0x4] sm:$0xf] %vm219, %v325
          %vm638 = vcmask 24576
          %vm639 = vmand %vm638, %vm307
          %v640 = vld [vmem:[%s630 + $0x8] sm:$0x1]
          %v641 = vsel %vm639, %v326, %v640
          %642 = vst [vmem:[%s630 + $0x8] sm:$0x1] %v641
          %v643 = vld [vmem:[%s630 + $0xc] sm:$0xf]
          %v644 = vsel %vm633, %v333, %v643
          %645 = vst [vmem:[%s630 + $0xc] sm:$0xf] %v644
          %646 = vst.msk [vmem:[%s630 + $0x10] sm:$0xf] %vm219, %v342
          %v647 = vld [vmem:[%s630 + $0x14] sm:$0x1]
          %v648 = vsel %vm639, %v343, %v647
          %649 = vst [vmem:[%s630 + $0x14] sm:$0x1] %v648
          %v650 = vld [vmem:[%s630 + $0x18] sm:$0xf]
          %v651 = vsel %vm633, %v350, %v650
          %652 = vst [vmem:[%s630 + $0x18] sm:$0xf] %v651
          %653 = vst.msk [vmem:[%s630 + $0x1c] sm:$0xf] %vm219, %v359
          %v654 = vld [vmem:[%s630 + $0x20] sm:$0x1]
          %v655 = vsel %vm639, %v360, %v654
          %656 = vst [vmem:[%s630 + $0x20] sm:$0x1] %v655
          %v657 = vld [vmem:[%s630 + $0x24] sm:$0xf]
          %v658 = vsel %vm633, %v367, %v657
          %659 = vst [vmem:[%s630 + $0x24] sm:$0xf] %v658
          %660 = vst.msk [vmem:[%s630 + $0x28] sm:$0xf] %vm219, %v376
          %v661 = vld [vmem:[%s630 + $0x2c] sm:$0x1]
          %v662 = vsel %vm639, %v377, %v661
          %663 = vst [vmem:[%s630 + $0x2c] sm:$0x1] %v662
          %v664 = vld [vmem:[%s630 + $0x30] sm:$0xf]
          %v665 = vsel %vm633, %v384, %v664
          %666 = vst [vmem:[%s630 + $0x30] sm:$0xf] %v665
          %667 = vst.msk [vmem:[%s630 + $0x34] sm:$0xf] %vm219, %v393
          %v668 = vld [vmem:[%s630 + $0x38] sm:$0x1]
          %v669 = vsel %vm639, %v394, %v668
          %670 = vst [vmem:[%s630 + $0x38] sm:$0x1] %v669
          %v671 = vld [vmem:[%s630 + $0x3c] sm:$0xf]
          %v672 = vsel %vm633, %v401, %v671
          %673 = vst [vmem:[%s630 + $0x3c] sm:$0xf] %v672
          %674 = vst.msk [vmem:[%s630 + $0x40] sm:$0xf] %vm219, %v410
          %v675 = vld [vmem:[%s630 + $0x44] sm:$0x1]
          %v676 = vsel %vm639, %v411, %v675
          %677 = vst [vmem:[%s630 + $0x44] sm:$0x1] %v676
          %v678 = vld [vmem:[%s630 + $0x48] sm:$0xf]
          %v679 = vsel %vm633, %v418, %v678
          %680 = vst [vmem:[%s630 + $0x48] sm:$0xf] %v679
          %681 = vst.msk [vmem:[%s630 + $0x4c] sm:$0xf] %vm219, %v427
          %v682 = vld [vmem:[%s630 + $0x50] sm:$0x1]
          %v683 = vsel %vm639, %v428, %v682
          %684 = vst [vmem:[%s630 + $0x50] sm:$0x1] %v683
          %v685 = vld [vmem:[%s630 + $0x54] sm:$0xf]
          %v686 = vsel %vm633, %v435, %v685
          %687 = vst [vmem:[%s630 + $0x54] sm:$0xf] %v686
          %688 = vst.msk [vmem:[%s630 + $0x58] sm:$0xf] %vm219, %v444
          %v689 = vld [vmem:[%s630 + $0x5c] sm:$0x1]
          %v690 = vsel %vm639, %v445, %v689
          %691 = vst [vmem:[%s630 + $0x5c] sm:$0x1] %v690
          %v692 = vld [vmem:[%s630 + $0x60] sm:$0xf]
          %v693 = vsel %vm633, %v452, %v692
          %694 = vst [vmem:[%s630 + $0x60] sm:$0xf] %v693
          %695 = vst.msk [vmem:[%s630 + $0x64] sm:$0xf] %vm219, %v461
          %v696 = vld [vmem:[%s630 + $0x68] sm:$0x1]
          %v697 = vsel %vm639, %v462, %v696
          %698 = vst [vmem:[%s630 + $0x68] sm:$0x1] %v697
          %v699 = vld [vmem:[%s630 + $0x6c] sm:$0xf]
          %v700 = vsel %vm633, %v469, %v699
          %701 = vst [vmem:[%s630 + $0x6c] sm:$0xf] %v700
          %702 = vst.msk [vmem:[%s630 + $0x70] sm:$0xf] %vm219, %v478
          %v703 = vld [vmem:[%s630 + $0x74] sm:$0x1]
          %v704 = vsel %vm639, %v479, %v703
          %705 = vst [vmem:[%s630 + $0x74] sm:$0x1] %v704
          %v706 = vld [vmem:[%s630 + $0x78] sm:$0xf]
          %v707 = vsel %vm633, %v486, %v706
          %708 = vst [vmem:[%s630 + $0x78] sm:$0xf] %v707
          %709 = vst.msk [vmem:[%s630 + $0x7c] sm:$0xf] %vm219, %v495
          %v710 = vld [vmem:[%s630 + $0x80] sm:$0x1]
          %v711 = vsel %vm639, %v496, %v710
          %712 = vst [vmem:[%s630 + $0x80] sm:$0x1] %v711
          %v713 = vld [vmem:[%s630 + $0x84] sm:$0xf]
          %v714 = vsel %vm633, %v503, %v713
          %715 = vst [vmem:[%s630 + $0x84] sm:$0xf] %v714
          %716 = vst.msk [vmem:[%s630 + $0x88] sm:$0xf] %vm219, %v512
          %v717 = vld [vmem:[%s630 + $0x8c] sm:$0x1]
          %v718 = vsel %vm639, %v513, %v717
          %719 = vst [vmem:[%s630 + $0x8c] sm:$0x1] %v718
          %v720 = vld [vmem:[%s630 + $0x90] sm:$0xf]
          %v721 = vsel %vm633, %v520, %v720
          %722 = vst [vmem:[%s630 + $0x90] sm:$0xf] %v721
          %723 = vst.msk [vmem:[%s630 + $0x94] sm:$0xf] %vm219, %v529
          %v724 = vld [vmem:[%s630 + $0x98] sm:$0x1]
          %v725 = vsel %vm639, %v530, %v724
          %726 = vst [vmem:[%s630 + $0x98] sm:$0x1] %v725
          %v727 = vld [vmem:[%s630 + $0x9c] sm:$0xf]
          %v728 = vsel %vm633, %v537, %v727
          %729 = vst [vmem:[%s630 + $0x9c] sm:$0xf] %v728
          %730 = vst.msk [vmem:[%s630 + $0xa0] sm:$0xf] %vm219, %v546
          %v731 = vld [vmem:[%s630 + $0xa4] sm:$0x1]
          %v732 = vsel %vm639, %v547, %v731
          %733 = vst [vmem:[%s630 + $0xa4] sm:$0x1] %v732
          %v734 = vld [vmem:[%s630 + $0xa8] sm:$0xf]
          %v735 = vsel %vm633, %v554, %v734
          %736 = vst [vmem:[%s630 + $0xa8] sm:$0xf] %v735
          %737 = vst.msk [vmem:[%s630 + $0xac] sm:$0xf] %vm219, %v563
          %v738 = vld [vmem:[%s630 + $0xb0] sm:$0x1]
          %v739 = vsel %vm639, %v564, %v738
          %740 = vst [vmem:[%s630 + $0xb0] sm:$0x1] %v739
          %v741 = vld [vmem:[%s630 + $0xb4] sm:$0xf]
          %v742 = vsel %vm633, %v571, %v741
          %743 = vst [vmem:[%s630 + $0xb4] sm:$0xf] %v742
          %744 = vst.msk [vmem:[%s630 + $0xb8] sm:$0xf] %vm219, %v580
          %v745 = vld [vmem:[%s630 + $0xbc] sm:$0x1]
          %v746 = vsel %vm639, %v581, %v745
          %747 = vst [vmem:[%s630 + $0xbc] sm:$0x1] %v746
          %v748 = vld [vmem:[#allocation2] sm:$0xf]
          %v749 = vld [vmem:[#allocation2 + $0x4] sm:$0xf]
          %v750 = vld [vmem:[#allocation2 + $0xc] sm:$0xf]
          %v751 = vld [vmem:[#allocation2 + $0x10] sm:$0xf]
          %v752 = vld [vmem:[#allocation2 + $0x18] sm:$0xf]
          %v753 = vld [vmem:[#allocation2 + $0x1c] sm:$0xf]
          %v754 = vld [vmem:[#allocation2 + $0x24] sm:$0xf]
          %v755 = vld [vmem:[#allocation2 + $0x28] sm:$0xf]
          %v756 = vld [vmem:[#allocation2 + $0x30] sm:$0xf]
          %v757 = vld [vmem:[#allocation2 + $0x34] sm:$0xf]
          %v758 = vld [vmem:[#allocation2 + $0x3c] sm:$0xf]
          %v759 = vld [vmem:[#allocation2 + $0x40] sm:$0xf]
          %v760 = vld [vmem:[#allocation2 + $0x48] sm:$0xf]
          %v761 = vld [vmem:[#allocation2 + $0x4c] sm:$0xf]
          %v762 = vld [vmem:[#allocation2 + $0x54] sm:$0xf]
          %v763 = vld [vmem:[#allocation2 + $0x58] sm:$0xf]
          %v764 = vld [vmem:[#allocation2 + $0x60] sm:$0xf]
          %v765 = vld [vmem:[#allocation2 + $0x64] sm:$0xf]
          %v766 = vld [vmem:[#allocation2 + $0x6c] sm:$0xf]
          %v767 = vld [vmem:[#allocation2 + $0x70] sm:$0xf]
          %v768 = vld [vmem:[#allocation2 + $0x78] sm:$0xf]
          %v769 = vld [vmem:[#allocation2 + $0x7c] sm:$0xf]
          %v770 = vld [vmem:[#allocation2 + $0x84] sm:$0xf]
          %v771 = vld [vmem:[#allocation2 + $0x88] sm:$0xf]
          %v772 = vld [vmem:[#allocation2 + $0x90] sm:$0xf]
          %v773 = vld [vmem:[#allocation2 + $0x94] sm:$0xf]
          %v774 = vld [vmem:[#allocation2 + $0x9c] sm:$0xf]
          %v775 = vld [vmem:[#allocation2 + $0xa0] sm:$0xf]
          %v776 = vld [vmem:[#allocation2 + $0xa8] sm:$0xf]
          %v777 = vld [vmem:[#allocation2 + $0xac] sm:$0xf]
          %v778 = vld [vmem:[#allocation2 + $0xb4] sm:$0xf]
          %v779 = vld [vmem:[#allocation2 + $0xb8] sm:$0xf]
          %v780 = vld [vmem:[#allocation2 + $0x8] sm:$0x1]
          %v781 = vld [vmem:[#allocation2 + $0x14] sm:$0x1]
          %v782 = vld [vmem:[#allocation2 + $0x20] sm:$0x1]
          %v783 = vld [vmem:[#allocation2 + $0x2c] sm:$0x1]
          %v784 = vld [vmem:[#allocation2 + $0x38] sm:$0x1]
          %v785 = vld [vmem:[#allocation2 + $0x44] sm:$0x1]
          %v786 = vld [vmem:[#allocation2 + $0x50] sm:$0x1]
          %v787 = vld [vmem:[#allocation2 + $0x5c] sm:$0x1]
          %v788 = vld [vmem:[#allocation2 + $0x68] sm:$0x1]
          %v789 = vld [vmem:[#allocation2 + $0x74] sm:$0x1]
          %v790 = vld [vmem:[#allocation2 + $0x80] sm:$0x1]
          %v791 = vld [vmem:[#allocation2 + $0x8c] sm:$0x1]
          %v792 = vld [vmem:[#allocation2 + $0x98] sm:$0x1]
          %v793 = vld [vmem:[#allocation2 + $0xa4] sm:$0x1]
          %v794 = vld [vmem:[#allocation2 + $0xb0] sm:$0x1]
          %v795 = vld [vmem:[#allocation2 + $0xbc] sm:$0x1]
          %vm796 = vsmask.f32 3328
          %vm797 = vsmask.f32 7440
          %vm798 = vmor %vm796, %vm797
          %v800 = vshrl.u32 %v748, 16
          %v802 = vrot.slane %v800, 4
          %v803 = vshll.u32 %v748, 16
          %v805 = vrot.slane %v803, 5
          %v806 = vor.u32 %v802, %v805
          %v807 = vrot.slane %v806, 4
          %v809 = vshll.u32 %v749, 16
          %v811 = vrot.slane %v809, 5
          %v812 = vsel %vm798, %v807, %v811
          %v813 = vshrl.u32 %v749, 16
          %v815 = vrot.slane %v813, 4
          %v816 = vor.u32 %v815, %v811
          %v817 = vrot.slane %v816, 4
          %v819 = vshll.u32 %v780, 16
          %v821 = vrot.slane %v819, 5
          %v822 = vsel %vm798, %v817, %v821
          %v824 = vshrl.u32 %v750, 16
          %v826 = vrot.slane %v824, 4
          %v827 = vshll.u32 %v750, 16
          %v829 = vrot.slane %v827, 5
          %v830 = vor.u32 %v826, %v829
          %v831 = vrot.slane %v830, 4
          %v833 = vshll.u32 %v751, 16
          %v835 = vrot.slane %v833, 5
          %v836 = vsel %vm798, %v831, %v835
          %v837 = vshrl.u32 %v751, 16
          %v839 = vrot.slane %v837, 4
          %v840 = vor.u32 %v839, %v835
          %v841 = vrot.slane %v840, 4
          %v843 = vshll.u32 %v781, 16
          %v845 = vrot.slane %v843, 5
          %v846 = vsel %vm798, %v841, %v845
          %v848 = vshrl.u32 %v752, 16
          %v850 = vrot.slane %v848, 4
          %v851 = vshll.u32 %v752, 16
          %v853 = vrot.slane %v851, 5
          %v854 = vor.u32 %v850, %v853
          %v855 = vrot.slane %v854, 4
          %v857 = vshll.u32 %v753, 16
          %v859 = vrot.slane %v857, 5
          %v860 = vsel %vm798, %v855, %v859
          %v861 = vshrl.u32 %v753, 16
          %v863 = vrot.slane %v861, 4
          %v864 = vor.u32 %v863, %v859
          %v865 = vrot.slane %v864, 4
          %v867 = vshll.u32 %v782, 16
          %v869 = vrot.slane %v867, 5
          %v870 = vsel %vm798, %v865, %v869
          %v872 = vshrl.u32 %v754, 16
          %v874 = vrot.slane %v872, 4
          %v875 = vshll.u32 %v754, 16
          %v877 = vrot.slane %v875, 5
          %v878 = vor.u32 %v874, %v877
          %v879 = vrot.slane %v878, 4
          %v881 = vshll.u32 %v755, 16
          %v883 = vrot.slane %v881, 5
          %v884 = vsel %vm798, %v879, %v883
          %v885 = vshrl.u32 %v755, 16
          %v887 = vrot.slane %v885, 4
          %v888 = vor.u32 %v887, %v883
          %v889 = vrot.slane %v888, 4
          %v891 = vshll.u32 %v783, 16
          %v893 = vrot.slane %v891, 5
          %v894 = vsel %vm798, %v889, %v893
          %v896 = vshrl.u32 %v756, 16
          %v898 = vrot.slane %v896, 4
          %v899 = vshll.u32 %v756, 16
          %v901 = vrot.slane %v899, 5
          %v902 = vor.u32 %v898, %v901
          %v903 = vrot.slane %v902, 4
          %v905 = vshll.u32 %v757, 16
          %v907 = vrot.slane %v905, 5
          %v908 = vsel %vm798, %v903, %v907
          %v909 = vshrl.u32 %v757, 16
          %v911 = vrot.slane %v909, 4
          %v912 = vor.u32 %v911, %v907
          %v913 = vrot.slane %v912, 4
          %v915 = vshll.u32 %v784, 16
          %v917 = vrot.slane %v915, 5
          %v918 = vsel %vm798, %v913, %v917
          %v920 = vshrl.u32 %v758, 16
          %v922 = vrot.slane %v920, 4
          %v923 = vshll.u32 %v758, 16
          %v925 = vrot.slane %v923, 5
          %v926 = vor.u32 %v922, %v925
          %v927 = vrot.slane %v926, 4
          %v929 = vshll.u32 %v759, 16
          %v931 = vrot.slane %v929, 5
          %v932 = vsel %vm798, %v927, %v931
          %v933 = vshrl.u32 %v759, 16
          %v935 = vrot.slane %v933, 4
          %v936 = vor.u32 %v935, %v931
          %v937 = vrot.slane %v936, 4
          %v939 = vshll.u32 %v785, 16
          %v941 = vrot.slane %v939, 5
          %v942 = vsel %vm798, %v937, %v941
          %v944 = vshrl.u32 %v760, 16
          %v946 = vrot.slane %v944, 4
          %v947 = vshll.u32 %v760, 16
          %v949 = vrot.slane %v947, 5
          %v950 = vor.u32 %v946, %v949
          %v951 = vrot.slane %v950, 4
          %v953 = vshll.u32 %v761, 16
          %v955 = vrot.slane %v953, 5
          %v956 = vsel %vm798, %v951, %v955
          %v957 = vshrl.u32 %v761, 16
          %v959 = vrot.slane %v957, 4
          %v960 = vor.u32 %v959, %v955
          %v961 = vrot.slane %v960, 4
          %v963 = vshll.u32 %v786, 16
          %v965 = vrot.slane %v963, 5
          %v966 = vsel %vm798, %v961, %v965
          %v968 = vshrl.u32 %v762, 16
          %v970 = vrot.slane %v968, 4
          %v971 = vshll.u32 %v762, 16
          %v973 = vrot.slane %v971, 5
          %v974 = vor.u32 %v970, %v973
          %v975 = vrot.slane %v974, 4
          %v977 = vshll.u32 %v763, 16
          %v979 = vrot.slane %v977, 5
          %v980 = vsel %vm798, %v975, %v979
          %v981 = vshrl.u32 %v763, 16
          %v983 = vrot.slane %v981, 4
          %v984 = vor.u32 %v983, %v979
          %v985 = vrot.slane %v984, 4
          %v987 = vshll.u32 %v787, 16
          %v989 = vrot.slane %v987, 5
          %v990 = vsel %vm798, %v985, %v989
          %v992 = vshrl.u32 %v764, 16
          %v994 = vrot.slane %v992, 4
          %v995 = vshll.u32 %v764, 16
          %v997 = vrot.slane %v995, 5
          %v998 = vor.u32 %v994, %v997
          %v999 = vrot.slane %v998, 4
          %v1001 = vshll.u32 %v765, 16
          %v1003 = vrot.slane %v1001, 5
          %v1004 = vsel %vm798, %v999, %v1003
          %v1005 = vshrl.u32 %v765, 16
          %v1007 = vrot.slane %v1005, 4
          %v1008 = vor.u32 %v1007, %v1003
          %v1009 = vrot.slane %v1008, 4
          %v1011 = vshll.u32 %v788, 16
          %v1013 = vrot.slane %v1011, 5
          %v1014 = vsel %vm798, %v1009, %v1013
          %v1016 = vshrl.u32 %v766, 16
          %v1018 = vrot.slane %v1016, 4
          %v1019 = vshll.u32 %v766, 16
          %v1021 = vrot.slane %v1019, 5
          %v1022 = vor.u32 %v1018, %v1021
          %v1023 = vrot.slane %v1022, 4
          %v1025 = vshll.u32 %v767, 16
          %v1027 = vrot.slane %v1025, 5
          %v1028 = vsel %vm798, %v1023, %v1027
          %v1029 = vshrl.u32 %v767, 16
          %v1031 = vrot.slane %v1029, 4
          %v1032 = vor.u32 %v1031, %v1027
          %v1033 = vrot.slane %v1032, 4
          %v1035 = vshll.u32 %v789, 16
          %v1037 = vrot.slane %v1035, 5
          %v1038 = vsel %vm798, %v1033, %v1037
          %v1040 = vshrl.u32 %v768, 16
          %v1042 = vrot.slane %v1040, 4
          %v1043 = vshll.u32 %v768, 16
          %v1045 = vrot.slane %v1043, 5
          %v1046 = vor.u32 %v1042, %v1045
          %v1047 = vrot.slane %v1046, 4
          %v1049 = vshll.u32 %v769, 16
          %v1051 = vrot.slane %v1049, 5
          %v1052 = vsel %vm798, %v1047, %v1051
          %v1053 = vshrl.u32 %v769, 16
          %v1055 = vrot.slane %v1053, 4
          %v1056 = vor.u32 %v1055, %v1051
          %v1057 = vrot.slane %v1056, 4
          %v1059 = vshll.u32 %v790, 16
          %v1061 = vrot.slane %v1059, 5
          %v1062 = vsel %vm798, %v1057, %v1061
          %v1064 = vshrl.u32 %v770, 16
          %v1066 = vrot.slane %v1064, 4
          %v1067 = vshll.u32 %v770, 16
          %v1069 = vrot.slane %v1067, 5
          %v1070 = vor.u32 %v1066, %v1069
          %v1071 = vrot.slane %v1070, 4
          %v1073 = vshll.u32 %v771, 16
          %v1075 = vrot.slane %v1073, 5
          %v1076 = vsel %vm798, %v1071, %v1075
          %v1077 = vshrl.u32 %v771, 16
          %v1079 = vrot.slane %v1077, 4
          %v1080 = vor.u32 %v1079, %v1075
          %v1081 = vrot.slane %v1080, 4
          %v1083 = vshll.u32 %v791, 16
          %v1085 = vrot.slane %v1083, 5
          %v1086 = vsel %vm798, %v1081, %v1085
          %v1088 = vshrl.u32 %v772, 16
          %v1090 = vrot.slane %v1088, 4
          %v1091 = vshll.u32 %v772, 16
          %v1093 = vrot.slane %v1091, 5
          %v1094 = vor.u32 %v1090, %v1093
          %v1095 = vrot.slane %v1094, 4
          %v1097 = vshll.u32 %v773, 16
          %v1099 = vrot.slane %v1097, 5
          %v1100 = vsel %vm798, %v1095, %v1099
          %v1101 = vshrl.u32 %v773, 16
          %v1103 = vrot.slane %v1101, 4
          %v1104 = vor.u32 %v1103, %v1099
          %v1105 = vrot.slane %v1104, 4
          %v1107 = vshll.u32 %v792, 16
          %v1109 = vrot.slane %v1107, 5
          %v1110 = vsel %vm798, %v1105, %v1109
          %v1112 = vshrl.u32 %v774, 16
          %v1114 = vrot.slane %v1112, 4
          %v1115 = vshll.u32 %v774, 16
          %v1117 = vrot.slane %v1115, 5
          %v1118 = vor.u32 %v1114, %v1117
          %v1119 = vrot.slane %v1118, 4
          %v1121 = vshll.u32 %v775, 16
          %v1123 = vrot.slane %v1121, 5
          %v1124 = vsel %vm798, %v1119, %v1123
          %v1125 = vshrl.u32 %v775, 16
          %v1127 = vrot.slane %v1125, 4
          %v1128 = vor.u32 %v1127, %v1123
          %v1129 = vrot.slane %v1128, 4
          %v1131 = vshll.u32 %v793, 16
          %v1133 = vrot.slane %v1131, 5
          %v1134 = vsel %vm798, %v1129, %v1133
          %v1136 = vshrl.u32 %v776, 16
          %v1138 = vrot.slane %v1136, 4
          %v1139 = vshll.u32 %v776, 16
          %v1141 = vrot.slane %v1139, 5
          %v1142 = vor.u32 %v1138, %v1141
          %v1143 = vrot.slane %v1142, 4
          %v1145 = vshll.u32 %v777, 16
          %v1147 = vrot.slane %v1145, 5
          %v1148 = vsel %vm798, %v1143, %v1147
          %v1149 = vshrl.u32 %v777, 16
          %v1151 = vrot.slane %v1149, 4
          %v1152 = vor.u32 %v1151, %v1147
          %v1153 = vrot.slane %v1152, 4
          %v1155 = vshll.u32 %v794, 16
          %v1157 = vrot.slane %v1155, 5
          %v1158 = vsel %vm798, %v1153, %v1157
          %v1160 = vshrl.u32 %v778, 16
          %v1162 = vrot.slane %v1160, 4
          %v1163 = vshll.u32 %v778, 16
          %v1165 = vrot.slane %v1163, 5
          %v1166 = vor.u32 %v1162, %v1165
          %v1167 = vrot.slane %v1166, 4
          %v1169 = vshll.u32 %v779, 16
          %v1171 = vrot.slane %v1169, 5
          %v1172 = vsel %vm798, %v1167, %v1171
          %v1173 = vshrl.u32 %v779, 16
          %v1175 = vrot.slane %v1173, 4
          %v1176 = vor.u32 %v1175, %v1171
          %v1177 = vrot.slane %v1176, 4
          %v1179 = vshll.u32 %v795, 16
          %v1181 = vrot.slane %v1179, 5
          %v1182 = vsel %vm798, %v1177, %v1181
          %v1183 = vld [vmem:[#allocation2] sm:$0xe]
          %v1184 = vld [vmem:[#allocation2 + $0xc] sm:$0xe]
          %v1185 = vld [vmem:[#allocation2 + $0x18] sm:$0xe]
          %v1186 = vld [vmem:[#allocation2 + $0x24] sm:$0xe]
          %v1187 = vld [vmem:[#allocation2 + $0x30] sm:$0xe]
          %v1188 = vld [vmem:[#allocation2 + $0x3c] sm:$0xe]
          %v1189 = vld [vmem:[#allocation2 + $0x48] sm:$0xe]
          %v1190 = vld [vmem:[#allocation2 + $0x54] sm:$0xe]
          %v1191 = vld [vmem:[#allocation2 + $0x60] sm:$0xe]
          %v1192 = vld [vmem:[#allocation2 + $0x6c] sm:$0xe]
          %v1193 = vld [vmem:[#allocation2 + $0x78] sm:$0xe]
          %v1194 = vld [vmem:[#allocation2 + $0x84] sm:$0xe]
          %v1195 = vld [vmem:[#allocation2 + $0x90] sm:$0xe]
          %v1196 = vld [vmem:[#allocation2 + $0x9c] sm:$0xe]
          %v1197 = vld [vmem:[#allocation2 + $0xa8] sm:$0xe]
          %v1198 = vld [vmem:[#allocation2 + $0xb4] sm:$0xe]
          %vm1247 = vcmask 1042432
          %vm1248 = vcmask 1046532
          %vm1249 = vmor %vm1247, %vm1248
          %v1250 = vrot.slane %v1183, 5
          %v1251 = vrot.slane %v1250, 4
          %v1252 = vrot.slane %v749, 5
          %v1253 = vsel %vm1249, %v1251, %v1252
          %v1254 = vrot.slane %v1252, 4
          %v1255 = vrot.slane %v780, 5
          %v1256 = vsel %vm1249, %v1254, %v1255
          %v1257 = vrot.slane %v1184, 5
          %v1258 = vrot.slane %v1257, 4
          %v1259 = vrot.slane %v751, 5
          %v1260 = vsel %vm1249, %v1258, %v1259
          %v1261 = vrot.slane %v1259, 4
          %v1262 = vrot.slane %v781, 5
          %v1263 = vsel %vm1249, %v1261, %v1262
          %v1264 = vrot.slane %v1185, 5
          %v1265 = vrot.slane %v1264, 4
          %v1266 = vrot.slane %v753, 5
          %v1267 = vsel %vm1249, %v1265, %v1266
          %v1268 = vrot.slane %v1266, 4
          %v1269 = vrot.slane %v782, 5
          %v1270 = vsel %vm1249, %v1268, %v1269
          %v1271 = vrot.slane %v1186, 5
          %v1272 = vrot.slane %v1271, 4
          %v1273 = vrot.slane %v755, 5
          %v1274 = vsel %vm1249, %v1272, %v1273
          %v1275 = vrot.slane %v1273, 4
          %v1276 = vrot.slane %v783, 5
          %v1277 = vsel %vm1249, %v1275, %v1276
          %v1278 = vrot.slane %v1187, 5
          %v1279 = vrot.slane %v1278, 4
          %v1280 = vrot.slane %v757, 5
          %v1281 = vsel %vm1249, %v1279, %v1280
          %v1282 = vrot.slane %v1280, 4
          %v1283 = vrot.slane %v784, 5
          %v1284 = vsel %vm1249, %v1282, %v1283
          %v1285 = vrot.slane %v1188, 5
          %v1286 = vrot.slane %v1285, 4
          %v1287 = vrot.slane %v759, 5
          %v1288 = vsel %vm1249, %v1286, %v1287
          %v1289 = vrot.slane %v1287, 4
          %v1290 = vrot.slane %v785, 5
          %v1291 = vsel %vm1249, %v1289, %v1290
          %v1292 = vrot.slane %v1189, 5
          %v1293 = vrot.slane %v1292, 4
          %v1294 = vrot.slane %v761, 5
          %v1295 = vsel %vm1249, %v1293, %v1294
          %v1296 = vrot.slane %v1294, 4
          %v1297 = vrot.slane %v786, 5
          %v1298 = vsel %vm1249, %v1296, %v1297
          %v1299 = vrot.slane %v1190, 5
          %v1300 = vrot.slane %v1299, 4
          %v1301 = vrot.slane %v763, 5
          %v1302 = vsel %vm1249, %v1300, %v1301
          %v1303 = vrot.slane %v1301, 4
          %v1304 = vrot.slane %v787, 5
          %v1305 = vsel %vm1249, %v1303, %v1304
          %v1306 = vrot.slane %v1191, 5
          %v1307 = vrot.slane %v1306, 4
          %v1308 = vrot.slane %v765, 5
          %v1309 = vsel %vm1249, %v1307, %v1308
          %v1310 = vrot.slane %v1308, 4
          %v1311 = vrot.slane %v788, 5
          %v1312 = vsel %vm1249, %v1310, %v1311
          %v1313 = vrot.slane %v1192, 5
          %v1314 = vrot.slane %v1313, 4
          %v1315 = vrot.slane %v767, 5
          %v1316 = vsel %vm1249, %v1314, %v1315
          %v1317 = vrot.slane %v1315, 4
          %v1318 = vrot.slane %v789, 5
          %v1319 = vsel %vm1249, %v1317, %v1318
          %v1320 = vrot.slane %v1193, 5
          %v1321 = vrot.slane %v1320, 4
          %v1322 = vrot.slane %v769, 5
          %v1323 = vsel %vm1249, %v1321, %v1322
          %v1324 = vrot.slane %v1322, 4
          %v1325 = vrot.slane %v790, 5
          %v1326 = vsel %vm1249, %v1324, %v1325
          %v1327 = vrot.slane %v1194, 5
          %v1328 = vrot.slane %v1327, 4
          %v1329 = vrot.slane %v771, 5
          %v1330 = vsel %vm1249, %v1328, %v1329
          %v1331 = vrot.slane %v1329, 4
          %v1332 = vrot.slane %v791, 5
          %v1333 = vsel %vm1249, %v1331, %v1332
          %v1334 = vrot.slane %v1195, 5
          %v1335 = vrot.slane %v1334, 4
          %v1336 = vrot.slane %v773, 5
          %v1337 = vsel %vm1249, %v1335, %v1336
          %v1338 = vrot.slane %v1336, 4
          %v1339 = vrot.slane %v792, 5
          %v1340 = vsel %vm1249, %v1338, %v1339
          %v1341 = vrot.slane %v1196, 5
          %v1342 = vrot.slane %v1341, 4
          %v1343 = vrot.slane %v775, 5
          %v1344 = vsel %vm1249, %v1342, %v1343
          %v1345 = vrot.slane %v1343, 4
          %v1346 = vrot.slane %v793, 5
          %v1347 = vsel %vm1249, %v1345, %v1346
          %v1348 = vrot.slane %v1197, 5
          %v1349 = vrot.slane %v1348, 4
          %v1350 = vrot.slane %v777, 5
          %v1351 = vsel %vm1249, %v1349, %v1350
          %v1352 = vrot.slane %v1350, 4
          %v1353 = vrot.slane %v794, 5
          %v1354 = vsel %vm1249, %v1352, %v1353
          %v1355 = vrot.slane %v1198, 5
          %v1356 = vrot.slane %v1355, 4
          %v1357 = vrot.slane %v779, 5
          %v1358 = vsel %vm1249, %v1356, %v1357
          %v1359 = vrot.slane %v1357, 4
          %v1360 = vrot.slane %v795, 5
          %v1361 = vsel %vm1249, %v1359, %v1360
          %v1362 = vld [vmem:[%s630] sm:$0xf]
          %v1363 = vld [vmem:[%s630 + $0x4] sm:$0xf]
          %v1364 = vld [vmem:[%s630 + $0xc] sm:$0xf]
          %v1365 = vld [vmem:[%s630 + $0x10] sm:$0xf]
          %v1366 = vld [vmem:[%s630 + $0x18] sm:$0xf]
          %v1367 = vld [vmem:[%s630 + $0x1c] sm:$0xf]
          %v1368 = vld [vmem:[%s630 + $0x24] sm:$0xf]
          %v1369 = vld [vmem:[%s630 + $0x28] sm:$0xf]
          %v1370 = vld [vmem:[%s630 + $0x30] sm:$0xf]
          %v1371 = vld [vmem:[%s630 + $0x34] sm:$0xf]
          %v1372 = vld [vmem:[%s630 + $0x3c] sm:$0xf]
          %v1373 = vld [vmem:[%s630 + $0x40] sm:$0xf]
          %v1374 = vld [vmem:[%s630 + $0x48] sm:$0xf]
          %v1375 = vld [vmem:[%s630 + $0x4c] sm:$0xf]
          %v1376 = vld [vmem:[%s630 + $0x54] sm:$0xf]
          %v1377 = vld [vmem:[%s630 + $0x58] sm:$0xf]
          %v1378 = vld [vmem:[%s630 + $0x60] sm:$0xf]
          %v1379 = vld [vmem:[%s630 + $0x64] sm:$0xf]
          %v1380 = vld [vmem:[%s630 + $0x6c] sm:$0xf]
          %v1381 = vld [vmem:[%s630 + $0x70] sm:$0xf]
          %v1382 = vld [vmem:[%s630 + $0x78] sm:$0xf]
          %v1383 = vld [vmem:[%s630 + $0x7c] sm:$0xf]
          %v1384 = vld [vmem:[%s630 + $0x84] sm:$0xf]
          %v1385 = vld [vmem:[%s630 + $0x88] sm:$0xf]
          %v1386 = vld [vmem:[%s630 + $0x90] sm:$0xf]
          %v1387 = vld [vmem:[%s630 + $0x94] sm:$0xf]
          %v1388 = vld [vmem:[%s630 + $0x9c] sm:$0xf]
          %v1389 = vld [vmem:[%s630 + $0xa0] sm:$0xf]
          %v1390 = vld [vmem:[%s630 + $0xa8] sm:$0xf]
          %v1391 = vld [vmem:[%s630 + $0xac] sm:$0xf]
          %v1392 = vld [vmem:[%s630 + $0xb4] sm:$0xf]
          %v1393 = vld [vmem:[%s630 + $0xb8] sm:$0xf]
          %v1394 = vld [vmem:[%s630 + $0x8] sm:$0x1]
          %v1395 = vld [vmem:[%s630 + $0x14] sm:$0x1]
          %v1396 = vld [vmem:[%s630 + $0x20] sm:$0x1]
          %v1397 = vld [vmem:[%s630 + $0x2c] sm:$0x1]
          %v1398 = vld [vmem:[%s630 + $0x38] sm:$0x1]
          %v1399 = vld [vmem:[%s630 + $0x44] sm:$0x1]
          %v1400 = vld [vmem:[%s630 + $0x50] sm:$0x1]
          %v1401 = vld [vmem:[%s630 + $0x5c] sm:$0x1]
          %v1402 = vld [vmem:[%s630 + $0x68] sm:$0x1]
          %v1403 = vld [vmem:[%s630 + $0x74] sm:$0x1]
          %v1404 = vld [vmem:[%s630 + $0x80] sm:$0x1]
          %v1405 = vld [vmem:[%s630 + $0x8c] sm:$0x1]
          %v1406 = vld [vmem:[%s630 + $0x98] sm:$0x1]
          %v1407 = vld [vmem:[%s630 + $0xa4] sm:$0x1]
          %v1408 = vld [vmem:[%s630 + $0xb0] sm:$0x1]
          %v1409 = vld [vmem:[%s630 + $0xbc] sm:$0x1]
          %v1411 = vshrl.u32 %v1362, 16
          %v1413 = vrot.slane %v1411, 4
          %v1414 = vshll.u32 %v1362, 16
          %v1416 = vrot.slane %v1414, 5
          %v1417 = vor.u32 %v1413, %v1416
          %v1418 = vrot.slane %v1417, 4
          %v1420 = vshll.u32 %v1363, 16
          %v1422 = vrot.slane %v1420, 5
          %v1423 = vsel %vm798, %v1418, %v1422
          %v1424 = vshrl.u32 %v1363, 16
          %v1426 = vrot.slane %v1424, 4
          %v1427 = vor.u32 %v1426, %v1422
          %v1428 = vrot.slane %v1427, 4
          %v1430 = vshll.u32 %v1394, 16
          %v1432 = vrot.slane %v1430, 5
          %v1433 = vsel %vm798, %v1428, %v1432
          %v1435 = vshrl.u32 %v1364, 16
          %v1437 = vrot.slane %v1435, 4
          %v1438 = vshll.u32 %v1364, 16
          %v1440 = vrot.slane %v1438, 5
          %v1441 = vor.u32 %v1437, %v1440
          %v1442 = vrot.slane %v1441, 4
          %v1444 = vshll.u32 %v1365, 16
          %v1446 = vrot.slane %v1444, 5
          %v1447 = vsel %vm798, %v1442, %v1446
          %v1448 = vshrl.u32 %v1365, 16
          %v1450 = vrot.slane %v1448, 4
          %v1451 = vor.u32 %v1450, %v1446
          %v1452 = vrot.slane %v1451, 4
          %v1454 = vshll.u32 %v1395, 16
          %v1456 = vrot.slane %v1454, 5
          %v1457 = vsel %vm798, %v1452, %v1456
          %v1459 = vshrl.u32 %v1366, 16
          %v1461 = vrot.slane %v1459, 4
          %v1462 = vshll.u32 %v1366, 16
          %v1464 = vrot.slane %v1462, 5
          %v1465 = vor.u32 %v1461, %v1464
          %v1466 = vrot.slane %v1465, 4
          %v1468 = vshll.u32 %v1367, 16
          %v1470 = vrot.slane %v1468, 5
          %v1471 = vsel %vm798, %v1466, %v1470
          %v1472 = vshrl.u32 %v1367, 16
          %v1474 = vrot.slane %v1472, 4
          %v1475 = vor.u32 %v1474, %v1470
          %v1476 = vrot.slane %v1475, 4
          %v1478 = vshll.u32 %v1396, 16
          %v1480 = vrot.slane %v1478, 5
          %v1481 = vsel %vm798, %v1476, %v1480
          %v1483 = vshrl.u32 %v1368, 16
          %v1485 = vrot.slane %v1483, 4
          %v1486 = vshll.u32 %v1368, 16
          %v1488 = vrot.slane %v1486, 5
          %v1489 = vor.u32 %v1485, %v1488
          %v1490 = vrot.slane %v1489, 4
          %v1492 = vshll.u32 %v1369, 16
          %v1494 = vrot.slane %v1492, 5
          %v1495 = vsel %vm798, %v1490, %v1494
          %v1496 = vshrl.u32 %v1369, 16
          %v1498 = vrot.slane %v1496, 4
          %v1499 = vor.u32 %v1498, %v1494
          %v1500 = vrot.slane %v1499, 4
          %v1502 = vshll.u32 %v1397, 16
          %v1504 = vrot.slane %v1502, 5
          %v1505 = vsel %vm798, %v1500, %v1504
          %v1507 = vshrl.u32 %v1370, 16
          %v1509 = vrot.slane %v1507, 4
          %v1510 = vshll.u32 %v1370, 16
          %v1512 = vrot.slane %v1510, 5
          %v1513 = vor.u32 %v1509, %v1512
          %v1514 = vrot.slane %v1513, 4
          %v1516 = vshll.u32 %v1371, 16
          %v1518 = vrot.slane %v1516, 5
          %v1519 = vsel %vm798, %v1514, %v1518
          %v1520 = vshrl.u32 %v1371, 16
          %v1522 = vrot.slane %v1520, 4
          %v1523 = vor.u32 %v1522, %v1518
          %v1524 = vrot.slane %v1523, 4
          %v1526 = vshll.u32 %v1398, 16
          %v1528 = vrot.slane %v1526, 5
          %v1529 = vsel %vm798, %v1524, %v1528
          %v1531 = vshrl.u32 %v1372, 16
          %v1533 = vrot.slane %v1531, 4
          %v1534 = vshll.u32 %v1372, 16
          %v1536 = vrot.slane %v1534, 5
          %v1537 = vor.u32 %v1533, %v1536
          %v1538 = vrot.slane %v1537, 4
          %v1540 = vshll.u32 %v1373, 16
          %v1542 = vrot.slane %v1540, 5
          %v1543 = vsel %vm798, %v1538, %v1542
          %v1544 = vshrl.u32 %v1373, 16
          %v1546 = vrot.slane %v1544, 4
          %v1547 = vor.u32 %v1546, %v1542
          %v1548 = vrot.slane %v1547, 4
          %v1550 = vshll.u32 %v1399, 16
          %v1552 = vrot.slane %v1550, 5
          %v1553 = vsel %vm798, %v1548, %v1552
          %v1555 = vshrl.u32 %v1374, 16
          %v1557 = vrot.slane %v1555, 4
          %v1558 = vshll.u32 %v1374, 16
          %v1560 = vrot.slane %v1558, 5
          %v1561 = vor.u32 %v1557, %v1560
          %v1562 = vrot.slane %v1561, 4
          %v1564 = vshll.u32 %v1375, 16
          %v1566 = vrot.slane %v1564, 5
          %v1567 = vsel %vm798, %v1562, %v1566
          %v1568 = vshrl.u32 %v1375, 16
          %v1570 = vrot.slane %v1568, 4
          %v1571 = vor.u32 %v1570, %v1566
          %v1572 = vrot.slane %v1571, 4
          %v1574 = vshll.u32 %v1400, 16
          %v1576 = vrot.slane %v1574, 5
          %v1577 = vsel %vm798, %v1572, %v1576
          %v1579 = vshrl.u32 %v1376, 16
          %v1581 = vrot.slane %v1579, 4
          %v1582 = vshll.u32 %v1376, 16
          %v1584 = vrot.slane %v1582, 5
          %v1585 = vor.u32 %v1581, %v1584
          %v1586 = vrot.slane %v1585, 4
          %v1588 = vshll.u32 %v1377, 16
          %v1590 = vrot.slane %v1588, 5
          %v1591 = vsel %vm798, %v1586, %v1590
          %v1592 = vshrl.u32 %v1377, 16
          %v1594 = vrot.slane %v1592, 4
          %v1595 = vor.u32 %v1594, %v1590
          %v1596 = vrot.slane %v1595, 4
          %v1598 = vshll.u32 %v1401, 16
          %v1600 = vrot.slane %v1598, 5
          %v1601 = vsel %vm798, %v1596, %v1600
          %v1603 = vshrl.u32 %v1378, 16
          %v1605 = vrot.slane %v1603, 4
          %v1606 = vshll.u32 %v1378, 16
          %v1608 = vrot.slane %v1606, 5
          %v1609 = vor.u32 %v1605, %v1608
          %v1610 = vrot.slane %v1609, 4
          %v1612 = vshll.u32 %v1379, 16
          %v1614 = vrot.slane %v1612, 5
          %v1615 = vsel %vm798, %v1610, %v1614
          %v1616 = vshrl.u32 %v1379, 16
          %v1618 = vrot.slane %v1616, 4
          %v1619 = vor.u32 %v1618, %v1614
          %v1620 = vrot.slane %v1619, 4
          %v1622 = vshll.u32 %v1402, 16
          %v1624 = vrot.slane %v1622, 5
          %v1625 = vsel %vm798, %v1620, %v1624
          %v1627 = vshrl.u32 %v1380, 16
          %v1629 = vrot.slane %v1627, 4
          %v1630 = vshll.u32 %v1380, 16
          %v1632 = vrot.slane %v1630, 5
          %v1633 = vor.u32 %v1629, %v1632
          %v1634 = vrot.slane %v1633, 4
          %v1636 = vshll.u32 %v1381, 16
          %v1638 = vrot.slane %v1636, 5
          %v1639 = vsel %vm798, %v1634, %v1638
          %v1640 = vshrl.u32 %v1381, 16
          %v1642 = vrot.slane %v1640, 4
          %v1643 = vor.u32 %v1642, %v1638
          %v1644 = vrot.slane %v1643, 4
          %v1646 = vshll.u32 %v1403, 16
          %v1648 = vrot.slane %v1646, 5
          %v1649 = vsel %vm798, %v1644, %v1648
          %v1651 = vshrl.u32 %v1382, 16
          %v1653 = vrot.slane %v1651, 4
          %v1654 = vshll.u32 %v1382, 16
          %v1656 = vrot.slane %v1654, 5
          %v1657 = vor.u32 %v1653, %v1656
          %v1658 = vrot.slane %v1657, 4
          %v1660 = vshll.u32 %v1383, 16
          %v1662 = vrot.slane %v1660, 5
          %v1663 = vsel %vm798, %v1658, %v1662
          %v1664 = vshrl.u32 %v1383, 16
          %v1666 = vrot.slane %v1664, 4
          %v1667 = vor.u32 %v1666, %v1662
          %v1668 = vrot.slane %v1667, 4
          %v1670 = vshll.u32 %v1404, 16
          %v1672 = vrot.slane %v1670, 5
          %v1673 = vsel %vm798, %v1668, %v1672
          %v1675 = vshrl.u32 %v1384, 16
          %v1677 = vrot.slane %v1675, 4
          %v1678 = vshll.u32 %v1384, 16
          %v1680 = vrot.slane %v1678, 5
          %v1681 = vor.u32 %v1677, %v1680
          %v1682 = vrot.slane %v1681, 4
          %v1684 = vshll.u32 %v1385, 16
          %v1686 = vrot.slane %v1684, 5
          %v1687 = vsel %vm798, %v1682, %v1686
          %v1688 = vshrl.u32 %v1385, 16
          %v1690 = vrot.slane %v1688, 4
          %v1691 = vor.u32 %v1690, %v1686
          %v1692 = vrot.slane %v1691, 4
          %v1694 = vshll.u32 %v1405, 16
          %v1696 = vrot.slane %v1694, 5
          %v1697 = vsel %vm798, %v1692, %v1696
          %v1699 = vshrl.u32 %v1386, 16
          %v1701 = vrot.slane %v1699, 4
          %v1702 = vshll.u32 %v1386, 16
          %v1704 = vrot.slane %v1702, 5
          %v1705 = vor.u32 %v1701, %v1704
          %v1706 = vrot.slane %v1705, 4
          %v1708 = vshll.u32 %v1387, 16
          %v1710 = vrot.slane %v1708, 5
          %v1711 = vsel %vm798, %v1706, %v1710
          %v1712 = vshrl.u32 %v1387, 16
          %v1714 = vrot.slane %v1712, 4
          %v1715 = vor.u32 %v1714, %v1710
          %v1716 = vrot.slane %v1715, 4
          %v1718 = vshll.u32 %v1406, 16
          %v1720 = vrot.slane %v1718, 5
          %v1721 = vsel %vm798, %v1716, %v1720
          %v1723 = vshrl.u32 %v1388, 16
          %v1725 = vrot.slane %v1723, 4
          %v1726 = vshll.u32 %v1388, 16
          %v1728 = vrot.slane %v1726, 5
          %v1729 = vor.u32 %v1725, %v1728
          %v1730 = vrot.slane %v1729, 4
          %v1732 = vshll.u32 %v1389, 16
          %v1734 = vrot.slane %v1732, 5
          %v1735 = vsel %vm798, %v1730, %v1734
          %v1736 = vshrl.u32 %v1389, 16
          %v1738 = vrot.slane %v1736, 4
          %v1739 = vor.u32 %v1738, %v1734
          %v1740 = vrot.slane %v1739, 4
          %v1742 = vshll.u32 %v1407, 16
          %v1744 = vrot.slane %v1742, 5
          %v1745 = vsel %vm798, %v1740, %v1744
          %v1747 = vshrl.u32 %v1390, 16
          %v1749 = vrot.slane %v1747, 4
          %v1750 = vshll.u32 %v1390, 16
          %v1752 = vrot.slane %v1750, 5
          %v1753 = vor.u32 %v1749, %v1752
          %v1754 = vrot.slane %v1753, 4
          %v1756 = vshll.u32 %v1391, 16
          %v1758 = vrot.slane %v1756, 5
          %v1759 = vsel %vm798, %v1754, %v1758
          %v1760 = vshrl.u32 %v1391, 16
          %v1762 = vrot.slane %v1760, 4
          %v1763 = vor.u32 %v1762, %v1758
          %v1764 = vrot.slane %v1763, 4
          %v1766 = vshll.u32 %v1408, 16
          %v1768 = vrot.slane %v1766, 5
          %v1769 = vsel %vm798, %v1764, %v1768
          %v1771 = vshrl.u32 %v1392, 16
          %v1773 = vrot.slane %v1771, 4
          %v1774 = vshll.u32 %v1392, 16
          %v1776 = vrot.slane %v1774, 5
          %v1777 = vor.u32 %v1773, %v1776
          %v1778 = vrot.slane %v1777, 4
          %v1780 = vshll.u32 %v1393, 16
          %v1782 = vrot.slane %v1780, 5
          %v1783 = vsel %vm798, %v1778, %v1782
          %v1784 = vshrl.u32 %v1393, 16
          %v1786 = vrot.slane %v1784, 4
          %v1787 = vor.u32 %v1786, %v1782
          %v1788 = vrot.slane %v1787, 4
          %v1790 = vshll.u32 %v1409, 16
          %v1792 = vrot.slane %v1790, 5
          %v1793 = vsel %vm798, %v1788, %v1792
          %v1794 = vld [vmem:[%s630] sm:$0xe]
          %v1795 = vld [vmem:[%s630 + $0xc] sm:$0xe]
          %v1796 = vld [vmem:[%s630 + $0x18] sm:$0xe]
          %v1797 = vld [vmem:[%s630 + $0x24] sm:$0xe]
          %v1798 = vld [vmem:[%s630 + $0x30] sm:$0xe]
          %v1799 = vld [vmem:[%s630 + $0x3c] sm:$0xe]
          %v1800 = vld [vmem:[%s630 + $0x48] sm:$0xe]
          %v1801 = vld [vmem:[%s630 + $0x54] sm:$0xe]
          %v1802 = vld [vmem:[%s630 + $0x60] sm:$0xe]
          %v1803 = vld [vmem:[%s630 + $0x6c] sm:$0xe]
          %v1804 = vld [vmem:[%s630 + $0x78] sm:$0xe]
          %v1805 = vld [vmem:[%s630 + $0x84] sm:$0xe]
          %v1806 = vld [vmem:[%s630 + $0x90] sm:$0xe]
          %v1807 = vld [vmem:[%s630 + $0x9c] sm:$0xe]
          %v1808 = vld [vmem:[%s630 + $0xa8] sm:$0xe]
          %v1809 = vld [vmem:[%s630 + $0xb4] sm:$0xe]
          %v1858 = vrot.slane %v1794, 5
          %v1859 = vrot.slane %v1858, 4
          %v1860 = vrot.slane %v1363, 5
          %v1861 = vsel %vm1249, %v1859, %v1860
          %v1862 = vrot.slane %v1860, 4
          %v1863 = vrot.slane %v1394, 5
          %v1864 = vsel %vm1249, %v1862, %v1863
          %v1865 = vrot.slane %v1795, 5
          %v1866 = vrot.slane %v1865, 4
          %v1867 = vrot.slane %v1365, 5
          %v1868 = vsel %vm1249, %v1866, %v1867
          %v1869 = vrot.slane %v1867, 4
          %v1870 = vrot.slane %v1395, 5
          %v1871 = vsel %vm1249, %v1869, %v1870
          %v1872 = vrot.slane %v1796, 5
          %v1873 = vrot.slane %v1872, 4
          %v1874 = vrot.slane %v1367, 5
          %v1875 = vsel %vm1249, %v1873, %v1874
          %v1876 = vrot.slane %v1874, 4
          %v1877 = vrot.slane %v1396, 5
          %v1878 = vsel %vm1249, %v1876, %v1877
          %v1879 = vrot.slane %v1797, 5
          %v1880 = vrot.slane %v1879, 4
          %v1881 = vrot.slane %v1369, 5
          %v1882 = vsel %vm1249, %v1880, %v1881
          %v1883 = vrot.slane %v1881, 4
          %v1884 = vrot.slane %v1397, 5
          %v1885 = vsel %vm1249, %v1883, %v1884
          %v1886 = vrot.slane %v1798, 5
          %v1887 = vrot.slane %v1886, 4
          %v1888 = vrot.slane %v1371, 5
          %v1889 = vsel %vm1249, %v1887, %v1888
          %v1890 = vrot.slane %v1888, 4
          %v1891 = vrot.slane %v1398, 5
          %v1892 = vsel %vm1249, %v1890, %v1891
          %v1893 = vrot.slane %v1799, 5
          %v1894 = vrot.slane %v1893, 4
          %v1895 = vrot.slane %v1373, 5
          %v1896 = vsel %vm1249, %v1894, %v1895
          %v1897 = vrot.slane %v1895, 4
          %v1898 = vrot.slane %v1399, 5
          %v1899 = vsel %vm1249, %v1897, %v1898
          %v1900 = vrot.slane %v1800, 5
          %v1901 = vrot.slane %v1900, 4
          %v1902 = vrot.slane %v1375, 5
          %v1903 = vsel %vm1249, %v1901, %v1902
          %v1904 = vrot.slane %v1902, 4
          %v1905 = vrot.slane %v1400, 5
          %v1906 = vsel %vm1249, %v1904, %v1905
          %v1907 = vrot.slane %v1801, 5
          %v1908 = vrot.slane %v1907, 4
          %v1909 = vrot.slane %v1377, 5
          %v1910 = vsel %vm1249, %v1908, %v1909
          %v1911 = vrot.slane %v1909, 4
          %v1912 = vrot.slane %v1401, 5
          %v1913 = vsel %vm1249, %v1911, %v1912
          %v1914 = vrot.slane %v1802, 5
          %v1915 = vrot.slane %v1914, 4
          %v1916 = vrot.slane %v1379, 5
          %v1917 = vsel %vm1249, %v1915, %v1916
          %v1918 = vrot.slane %v1916, 4
          %v1919 = vrot.slane %v1402, 5
          %v1920 = vsel %vm1249, %v1918, %v1919
          %v1921 = vrot.slane %v1803, 5
          %v1922 = vrot.slane %v1921, 4
          %v1923 = vrot.slane %v1381, 5
          %v1924 = vsel %vm1249, %v1922, %v1923
          %v1925 = vrot.slane %v1923, 4
          %v1926 = vrot.slane %v1403, 5
          %v1927 = vsel %vm1249, %v1925, %v1926
          %v1928 = vrot.slane %v1804, 5
          %v1929 = vrot.slane %v1928, 4
          %v1930 = vrot.slane %v1383, 5
          %v1931 = vsel %vm1249, %v1929, %v1930
          %v1932 = vrot.slane %v1930, 4
          %v1933 = vrot.slane %v1404, 5
          %v1934 = vsel %vm1249, %v1932, %v1933
          %v1935 = vrot.slane %v1805, 5
          %v1936 = vrot.slane %v1935, 4
          %v1937 = vrot.slane %v1385, 5
          %v1938 = vsel %vm1249, %v1936, %v1937
          %v1939 = vrot.slane %v1937, 4
          %v1940 = vrot.slane %v1405, 5
          %v1941 = vsel %vm1249, %v1939, %v1940
          %v1942 = vrot.slane %v1806, 5
          %v1943 = vrot.slane %v1942, 4
          %v1944 = vrot.slane %v1387, 5
          %v1945 = vsel %vm1249, %v1943, %v1944
          %v1946 = vrot.slane %v1944, 4
          %v1947 = vrot.slane %v1406, 5
          %v1948 = vsel %vm1249, %v1946, %v1947
          %v1949 = vrot.slane %v1807, 5
          %v1950 = vrot.slane %v1949, 4
          %v1951 = vrot.slane %v1389, 5
          %v1952 = vsel %vm1249, %v1950, %v1951
          %v1953 = vrot.slane %v1951, 4
          %v1954 = vrot.slane %v1407, 5
          %v1955 = vsel %vm1249, %v1953, %v1954
          %v1956 = vrot.slane %v1808, 5
          %v1957 = vrot.slane %v1956, 4
          %v1958 = vrot.slane %v1391, 5
          %v1959 = vsel %vm1249, %v1957, %v1958
          %v1960 = vrot.slane %v1958, 4
          %v1961 = vrot.slane %v1408, 5
          %v1962 = vsel %vm1249, %v1960, %v1961
          %v1963 = vrot.slane %v1809, 5
          %v1964 = vrot.slane %v1963, 4
          %v1965 = vrot.slane %v1393, 5
          %v1966 = vsel %vm1249, %v1964, %v1965
          %v1967 = vrot.slane %v1965, 4
          %v1968 = vrot.slane %v1409, 5
          %v1969 = vsel %vm1249, %v1967, %v1968
          %s1970 = scalar_lea.vmem [#allocation2], 24
          %v1971 = vld [vmem:[%s1970] sm:$0xf]
          %v1972 = vld [vmem:[%s1970 + $0x4] sm:$0xf]
          %v1973 = vld [vmem:[%s1970 + $0xc] sm:$0xf]
          %v1974 = vld [vmem:[%s1970 + $0x10] sm:$0xf]
          %v1975 = vld [vmem:[%s1970 + $0x18] sm:$0xf]
          %v1976 = vld [vmem:[%s1970 + $0x1c] sm:$0xf]
          %v1977 = vld [vmem:[%s1970 + $0x24] sm:$0xf]
          %v1978 = vld [vmem:[%s1970 + $0x28] sm:$0xf]
          %v1979 = vld [vmem:[%s1970 + $0x30] sm:$0xf]
          %v1980 = vld [vmem:[%s1970 + $0x34] sm:$0xf]
          %v1981 = vld [vmem:[%s1970 + $0x3c] sm:$0xf]
          %v1982 = vld [vmem:[%s1970 + $0x40] sm:$0xf]
          %v1983 = vld [vmem:[%s1970 + $0x48] sm:$0xf]
          %v1984 = vld [vmem:[%s1970 + $0x4c] sm:$0xf]
          %v1985 = vld [vmem:[%s1970 + $0x54] sm:$0xf]
          %v1986 = vld [vmem:[%s1970 + $0x58] sm:$0xf]
          %v1987 = vld [vmem:[%s1970 + $0x60] sm:$0xf]
          %v1988 = vld [vmem:[%s1970 + $0x64] sm:$0xf]
          %v1989 = vld [vmem:[%s1970 + $0x6c] sm:$0xf]
          %v1990 = vld [vmem:[%s1970 + $0x70] sm:$0xf]
          %v1991 = vld [vmem:[%s1970 + $0x78] sm:$0xf]
          %v1992 = vld [vmem:[%s1970 + $0x7c] sm:$0xf]
          %v1993 = vld [vmem:[%s1970 + $0x84] sm:$0xf]
          %v1994 = vld [vmem:[%s1970 + $0x88] sm:$0xf]
          %v1995 = vld [vmem:[%s1970 + $0x90] sm:$0xf]
          %v1996 = vld [vmem:[%s1970 + $0x94] sm:$0xf]
          %v1997 = vld [vmem:[%s1970 + $0x9c] sm:$0xf]
          %v1998 = vld [vmem:[%s1970 + $0xa0] sm:$0xf]
          %v1999 = vld [vmem:[%s1970 + $0xa8] sm:$0xf]
          %v2000 = vld [vmem:[%s1970 + $0xac] sm:$0xf]
          %v2001 = vld [vmem:[%s1970 + $0xb4] sm:$0xf]
          %v2002 = vld [vmem:[%s1970 + $0xb8] sm:$0xf]
          %v2003 = vld [vmem:[%s1970 + $0x8] sm:$0x1]
          %v2004 = vld [vmem:[%s1970 + $0x14] sm:$0x1]
          %v2005 = vld [vmem:[%s1970 + $0x20] sm:$0x1]
          %v2006 = vld [vmem:[%s1970 + $0x2c] sm:$0x1]
          %v2007 = vld [vmem:[%s1970 + $0x38] sm:$0x1]
          %v2008 = vld [vmem:[%s1970 + $0x44] sm:$0x1]
          %v2009 = vld [vmem:[%s1970 + $0x50] sm:$0x1]
          %v2010 = vld [vmem:[%s1970 + $0x5c] sm:$0x1]
          %v2011 = vld [vmem:[%s1970 + $0x68] sm:$0x1]
          %v2012 = vld [vmem:[%s1970 + $0x74] sm:$0x1]
          %v2013 = vld [vmem:[%s1970 + $0x80] sm:$0x1]
          %v2014 = vld [vmem:[%s1970 + $0x8c] sm:$0x1]
          %v2015 = vld [vmem:[%s1970 + $0x98] sm:$0x1]
          %v2016 = vld [vmem:[%s1970 + $0xa4] sm:$0x1]
          %v2017 = vld [vmem:[%s1970 + $0xb0] sm:$0x1]
          %v2018 = vld [vmem:[%s1970 + $0xbc] sm:$0x1]
          %v2020 = vshrl.u32 %v1971, 16
          %v2022 = vrot.slane %v2020, 4
          %v2023 = vshll.u32 %v1971, 16
          %v2025 = vrot.slane %v2023, 5
          %v2026 = vor.u32 %v2022, %v2025
          %v2027 = vrot.slane %v2026, 4
          %v2029 = vshll.u32 %v1972, 16
          %v2031 = vrot.slane %v2029, 5
          %v2032 = vsel %vm798, %v2027, %v2031
          %v2033 = vshrl.u32 %v1972, 16
          %v2035 = vrot.slane %v2033, 4
          %v2036 = vor.u32 %v2035, %v2031
          %v2037 = vrot.slane %v2036, 4
          %v2039 = vshll.u32 %v2003, 16
          %v2041 = vrot.slane %v2039, 5
          %v2042 = vsel %vm798, %v2037, %v2041
          %v2044 = vshrl.u32 %v1973, 16
          %v2046 = vrot.slane %v2044, 4
          %v2047 = vshll.u32 %v1973, 16
          %v2049 = vrot.slane %v2047, 5
          %v2050 = vor.u32 %v2046, %v2049
          %v2051 = vrot.slane %v2050, 4
          %v2053 = vshll.u32 %v1974, 16
          %v2055 = vrot.slane %v2053, 5
          %v2056 = vsel %vm798, %v2051, %v2055
          %v2057 = vshrl.u32 %v1974, 16
          %v2059 = vrot.slane %v2057, 4
          %v2060 = vor.u32 %v2059, %v2055
          %v2061 = vrot.slane %v2060, 4
          %v2063 = vshll.u32 %v2004, 16
          %v2065 = vrot.slane %v2063, 5
          %v2066 = vsel %vm798, %v2061, %v2065
          %v2068 = vshrl.u32 %v1975, 16
          %v2070 = vrot.slane %v2068, 4
          %v2071 = vshll.u32 %v1975, 16
          %v2073 = vrot.slane %v2071, 5
          %v2074 = vor.u32 %v2070, %v2073
          %v2075 = vrot.slane %v2074, 4
          %v2077 = vshll.u32 %v1976, 16
          %v2079 = vrot.slane %v2077, 5
          %v2080 = vsel %vm798, %v2075, %v2079
          %v2081 = vshrl.u32 %v1976, 16
          %v2083 = vrot.slane %v2081, 4
          %v2084 = vor.u32 %v2083, %v2079
          %v2085 = vrot.slane %v2084, 4
          %v2087 = vshll.u32 %v2005, 16
          %v2089 = vrot.slane %v2087, 5
          %v2090 = vsel %vm798, %v2085, %v2089
          %v2092 = vshrl.u32 %v1977, 16
          %v2094 = vrot.slane %v2092, 4
          %v2095 = vshll.u32 %v1977, 16
          %v2097 = vrot.slane %v2095, 5
          %v2098 = vor.u32 %v2094, %v2097
          %v2099 = vrot.slane %v2098, 4
          %v2101 = vshll.u32 %v1978, 16
          %v2103 = vrot.slane %v2101, 5
          %v2104 = vsel %vm798, %v2099, %v2103
          %v2105 = vshrl.u32 %v1978, 16
          %v2107 = vrot.slane %v2105, 4
          %v2108 = vor.u32 %v2107, %v2103
          %v2109 = vrot.slane %v2108, 4
          %v2111 = vshll.u32 %v2006, 16
          %v2113 = vrot.slane %v2111, 5
          %v2114 = vsel %vm798, %v2109, %v2113
          %v2116 = vshrl.u32 %v1979, 16
          %v2118 = vrot.slane %v2116, 4
          %v2119 = vshll.u32 %v1979, 16
          %v2121 = vrot.slane %v2119, 5
          %v2122 = vor.u32 %v2118, %v2121
          %v2123 = vrot.slane %v2122, 4
          %v2125 = vshll.u32 %v1980, 16
          %v2127 = vrot.slane %v2125, 5
          %v2128 = vsel %vm798, %v2123, %v2127
          %v2129 = vshrl.u32 %v1980, 16
          %v2131 = vrot.slane %v2129, 4
          %v2132 = vor.u32 %v2131, %v2127
          %v2133 = vrot.slane %v2132, 4
          %v2135 = vshll.u32 %v2007, 16
          %v2137 = vrot.slane %v2135, 5
          %v2138 = vsel %vm798, %v2133, %v2137
          %v2140 = vshrl.u32 %v1981, 16
          %v2142 = vrot.slane %v2140, 4
          %v2143 = vshll.u32 %v1981, 16
          %v2145 = vrot.slane %v2143, 5
          %v2146 = vor.u32 %v2142, %v2145
          %v2147 = vrot.slane %v2146, 4
          %v2149 = vshll.u32 %v1982, 16
          %v2151 = vrot.slane %v2149, 5
          %v2152 = vsel %vm798, %v2147, %v2151
          %v2153 = vshrl.u32 %v1982, 16
          %v2155 = vrot.slane %v2153, 4
          %v2156 = vor.u32 %v2155, %v2151
          %v2157 = vrot.slane %v2156, 4
          %v2159 = vshll.u32 %v2008, 16
          %v2161 = vrot.slane %v2159, 5
          %v2162 = vsel %vm798, %v2157, %v2161
          %v2164 = vshrl.u32 %v1983, 16
          %v2166 = vrot.slane %v2164, 4
          %v2167 = vshll.u32 %v1983, 16
          %v2169 = vrot.slane %v2167, 5
          %v2170 = vor.u32 %v2166, %v2169
          %v2171 = vrot.slane %v2170, 4
          %v2173 = vshll.u32 %v1984, 16
          %v2175 = vrot.slane %v2173, 5
          %v2176 = vsel %vm798, %v2171, %v2175
          %v2177 = vshrl.u32 %v1984, 16
          %v2179 = vrot.slane %v2177, 4
          %v2180 = vor.u32 %v2179, %v2175
          %v2181 = vrot.slane %v2180, 4
          %v2183 = vshll.u32 %v2009, 16
          %v2185 = vrot.slane %v2183, 5
          %v2186 = vsel %vm798, %v2181, %v2185
          %v2188 = vshrl.u32 %v1985, 16
          %v2190 = vrot.slane %v2188, 4
          %v2191 = vshll.u32 %v1985, 16
          %v2193 = vrot.slane %v2191, 5
          %v2194 = vor.u32 %v2190, %v2193
          %v2195 = vrot.slane %v2194, 4
          %v2197 = vshll.u32 %v1986, 16
          %v2199 = vrot.slane %v2197, 5
          %v2200 = vsel %vm798, %v2195, %v2199
          %v2201 = vshrl.u32 %v1986, 16
          %v2203 = vrot.slane %v2201, 4
          %v2204 = vor.u32 %v2203, %v2199
          %v2205 = vrot.slane %v2204, 4
          %v2207 = vshll.u32 %v2010, 16
          %v2209 = vrot.slane %v2207, 5
          %v2210 = vsel %vm798, %v2205, %v2209
          %v2212 = vshrl.u32 %v1987, 16
          %v2214 = vrot.slane %v2212, 4
          %v2215 = vshll.u32 %v1987, 16
          %v2217 = vrot.slane %v2215, 5
          %v2218 = vor.u32 %v2214, %v2217
          %v2219 = vrot.slane %v2218, 4
          %v2221 = vshll.u32 %v1988, 16
          %v2223 = vrot.slane %v2221, 5
          %v2224 = vsel %vm798, %v2219, %v2223
          %v2225 = vshrl.u32 %v1988, 16
          %v2227 = vrot.slane %v2225, 4
          %v2228 = vor.u32 %v2227, %v2223
          %v2229 = vrot.slane %v2228, 4
          %v2231 = vshll.u32 %v2011, 16
          %v2233 = vrot.slane %v2231, 5
          %v2234 = vsel %vm798, %v2229, %v2233
          %v2236 = vshrl.u32 %v1989, 16
          %v2238 = vrot.slane %v2236, 4
          %v2239 = vshll.u32 %v1989, 16
          %v2241 = vrot.slane %v2239, 5
          %v2242 = vor.u32 %v2238, %v2241
          %v2243 = vrot.slane %v2242, 4
          %v2245 = vshll.u32 %v1990, 16
          %v2247 = vrot.slane %v2245, 5
          %v2248 = vsel %vm798, %v2243, %v2247
          %v2249 = vshrl.u32 %v1990, 16
          %v2251 = vrot.slane %v2249, 4
          %v2252 = vor.u32 %v2251, %v2247
          %v2253 = vrot.slane %v2252, 4
          %v2255 = vshll.u32 %v2012, 16
          %v2257 = vrot.slane %v2255, 5
          %v2258 = vsel %vm798, %v2253, %v2257
          %v2260 = vshrl.u32 %v1991, 16
          %v2262 = vrot.slane %v2260, 4
          %v2263 = vshll.u32 %v1991, 16
          %v2265 = vrot.slane %v2263, 5
          %v2266 = vor.u32 %v2262, %v2265
          %v2267 = vrot.slane %v2266, 4
          %v2269 = vshll.u32 %v1992, 16
          %v2271 = vrot.slane %v2269, 5
          %v2272 = vsel %vm798, %v2267, %v2271
          %v2273 = vshrl.u32 %v1992, 16
          %v2275 = vrot.slane %v2273, 4
          %v2276 = vor.u32 %v2275, %v2271
          %v2277 = vrot.slane %v2276, 4
          %v2279 = vshll.u32 %v2013, 16
          %v2281 = vrot.slane %v2279, 5
          %v2282 = vsel %vm798, %v2277, %v2281
          %v2284 = vshrl.u32 %v1993, 16
          %v2286 = vrot.slane %v2284, 4
          %v2287 = vshll.u32 %v1993, 16
          %v2289 = vrot.slane %v2287, 5
          %v2290 = vor.u32 %v2286, %v2289
          %v2291 = vrot.slane %v2290, 4
          %v2293 = vshll.u32 %v1994, 16
          %v2295 = vrot.slane %v2293, 5
          %v2296 = vsel %vm798, %v2291, %v2295
          %v2297 = vshrl.u32 %v1994, 16
          %v2299 = vrot.slane %v2297, 4
          %v2300 = vor.u32 %v2299, %v2295
          %v2301 = vrot.slane %v2300, 4
          %v2303 = vshll.u32 %v2014, 16
          %v2305 = vrot.slane %v2303, 5
          %v2306 = vsel %vm798, %v2301, %v2305
          %v2308 = vshrl.u32 %v1995, 16
          %v2310 = vrot.slane %v2308, 4
          %v2311 = vshll.u32 %v1995, 16
          %v2313 = vrot.slane %v2311, 5
          %v2314 = vor.u32 %v2310, %v2313
          %v2315 = vrot.slane %v2314, 4
          %v2317 = vshll.u32 %v1996, 16
          %v2319 = vrot.slane %v2317, 5
          %v2320 = vsel %vm798, %v2315, %v2319
          %v2321 = vshrl.u32 %v1996, 16
          %v2323 = vrot.slane %v2321, 4
          %v2324 = vor.u32 %v2323, %v2319
          %v2325 = vrot.slane %v2324, 4
          %v2327 = vshll.u32 %v2015, 16
          %v2329 = vrot.slane %v2327, 5
          %v2330 = vsel %vm798, %v2325, %v2329
          %v2332 = vshrl.u32 %v1997, 16
          %v2334 = vrot.slane %v2332, 4
          %v2335 = vshll.u32 %v1997, 16
          %v2337 = vrot.slane %v2335, 5
          %v2338 = vor.u32 %v2334, %v2337
          %v2339 = vrot.slane %v2338, 4
          %v2341 = vshll.u32 %v1998, 16
          %v2343 = vrot.slane %v2341, 5
          %v2344 = vsel %vm798, %v2339, %v2343
          %v2345 = vshrl.u32 %v1998, 16
          %v2347 = vrot.slane %v2345, 4
          %v2348 = vor.u32 %v2347, %v2343
          %v2349 = vrot.slane %v2348, 4
          %v2351 = vshll.u32 %v2016, 16
          %v2353 = vrot.slane %v2351, 5
          %v2354 = vsel %vm798, %v2349, %v2353
          %v2356 = vshrl.u32 %v1999, 16
          %v2358 = vrot.slane %v2356, 4
          %v2359 = vshll.u32 %v1999, 16
          %v2361 = vrot.slane %v2359, 5
          %v2362 = vor.u32 %v2358, %v2361
          %v2363 = vrot.slane %v2362, 4
          %v2365 = vshll.u32 %v2000, 16
          %v2367 = vrot.slane %v2365, 5
          %v2368 = vsel %vm798, %v2363, %v2367
          %v2369 = vshrl.u32 %v2000, 16
          %v2371 = vrot.slane %v2369, 4
          %v2372 = vor.u32 %v2371, %v2367
          %v2373 = vrot.slane %v2372, 4
          %v2375 = vshll.u32 %v2017, 16
          %v2377 = vrot.slane %v2375, 5
          %v2378 = vsel %vm798, %v2373, %v2377
          %v2380 = vshrl.u32 %v2001, 16
          %v2382 = vrot.slane %v2380, 4
          %v2383 = vshll.u32 %v2001, 16
          %v2385 = vrot.slane %v2383, 5
          %v2386 = vor.u32 %v2382, %v2385
          %v2387 = vrot.slane %v2386, 4
          %v2389 = vshll.u32 %v2002, 16
          %v2391 = vrot.slane %v2389, 5
          %v2392 = vsel %vm798, %v2387, %v2391
          %v2393 = vshrl.u32 %v2002, 16
          %v2395 = vrot.slane %v2393, 4
          %v2396 = vor.u32 %v2395, %v2391
          %v2397 = vrot.slane %v2396, 4
          %v2399 = vshll.u32 %v2018, 16
          %v2401 = vrot.slane %v2399, 5
          %v2402 = vsel %vm798, %v2397, %v2401
          %v2403 = vld [vmem:[%s1970] sm:$0xe]
          %v2404 = vld [vmem:[%s1970 + $0xc] sm:$0xe]
          %v2405 = vld [vmem:[%s1970 + $0x18] sm:$0xe]
          %v2406 = vld [vmem:[%s1970 + $0x24] sm:$0xe]
          %v2407 = vld [vmem:[%s1970 + $0x30] sm:$0xe]
          %v2408 = vld [vmem:[%s1970 + $0x3c] sm:$0xe]
          %v2409 = vld [vmem:[%s1970 + $0x48] sm:$0xe]
          %v2410 = vld [vmem:[%s1970 + $0x54] sm:$0xe]
          %v2411 = vld [vmem:[%s1970 + $0x60] sm:$0xe]
          %v2412 = vld [vmem:[%s1970 + $0x6c] sm:$0xe]
          %v2413 = vld [vmem:[%s1970 + $0x78] sm:$0xe]
          %v2414 = vld [vmem:[%s1970 + $0x84] sm:$0xe]
          %v2415 = vld [vmem:[%s1970 + $0x90] sm:$0xe]
          %v2416 = vld [vmem:[%s1970 + $0x9c] sm:$0xe]
          %v2417 = vld [vmem:[%s1970 + $0xa8] sm:$0xe]
          %v2418 = vld [vmem:[%s1970 + $0xb4] sm:$0xe]
          %v2467 = vrot.slane %v2403, 5
          %v2468 = vrot.slane %v2467, 4
          %v2469 = vrot.slane %v1972, 5
          %v2470 = vsel %vm1249, %v2468, %v2469
          %v2471 = vrot.slane %v2469, 4
          %v2472 = vrot.slane %v2003, 5
          %v2473 = vsel %vm1249, %v2471, %v2472
          %v2474 = vrot.slane %v2404, 5
          %v2475 = vrot.slane %v2474, 4
          %v2476 = vrot.slane %v1974, 5
          %v2477 = vsel %vm1249, %v2475, %v2476
          %v2478 = vrot.slane %v2476, 4
          %v2479 = vrot.slane %v2004, 5
          %v2480 = vsel %vm1249, %v2478, %v2479
          %v2481 = vrot.slane %v2405, 5
          %v2482 = vrot.slane %v2481, 4
          %v2483 = vrot.slane %v1976, 5
          %v2484 = vsel %vm1249, %v2482, %v2483
          %v2485 = vrot.slane %v2483, 4
          %v2486 = vrot.slane %v2005, 5
          %v2487 = vsel %vm1249, %v2485, %v2486
          %v2488 = vrot.slane %v2406, 5
          %v2489 = vrot.slane %v2488, 4
          %v2490 = vrot.slane %v1978, 5
          %v2491 = vsel %vm1249, %v2489, %v2490
          %v2492 = vrot.slane %v2490, 4
          %v2493 = vrot.slane %v2006, 5
          %v2494 = vsel %vm1249, %v2492, %v2493
          %v2495 = vrot.slane %v2407, 5
          %v2496 = vrot.slane %v2495, 4
          %v2497 = vrot.slane %v1980, 5
          %v2498 = vsel %vm1249, %v2496, %v2497
          %v2499 = vrot.slane %v2497, 4
          %v2500 = vrot.slane %v2007, 5
          %v2501 = vsel %vm1249, %v2499, %v2500
          %v2502 = vrot.slane %v2408, 5
          %v2503 = vrot.slane %v2502, 4
          %v2504 = vrot.slane %v1982, 5
          %v2505 = vsel %vm1249, %v2503, %v2504
          %v2506 = vrot.slane %v2504, 4
          %v2507 = vrot.slane %v2008, 5
          %v2508 = vsel %vm1249, %v2506, %v2507
          %v2509 = vrot.slane %v2409, 5
          %v2510 = vrot.slane %v2509, 4
          %v2511 = vrot.slane %v1984, 5
          %v2512 = vsel %vm1249, %v2510, %v2511
          %v2513 = vrot.slane %v2511, 4
          %v2514 = vrot.slane %v2009, 5
          %v2515 = vsel %vm1249, %v2513, %v2514
          %v2516 = vrot.slane %v2410, 5
          %v2517 = vrot.slane %v2516, 4
          %v2518 = vrot.slane %v1986, 5
          %v2519 = vsel %vm1249, %v2517, %v2518
          %v2520 = vrot.slane %v2518, 4
          %v2521 = vrot.slane %v2010, 5
          %v2522 = vsel %vm1249, %v2520, %v2521
          %v2523 = vrot.slane %v2411, 5
          %v2524 = vrot.slane %v2523, 4
          %v2525 = vrot.slane %v1988, 5
          %v2526 = vsel %vm1249, %v2524, %v2525
          %v2527 = vrot.slane %v2525, 4
          %v2528 = vrot.slane %v2011, 5
          %v2529 = vsel %vm1249, %v2527, %v2528
          %v2530 = vrot.slane %v2412, 5
          %v2531 = vrot.slane %v2530, 4
          %v2532 = vrot.slane %v1990, 5
          %v2533 = vsel %vm1249, %v2531, %v2532
          %v2534 = vrot.slane %v2532, 4
          %v2535 = vrot.slane %v2012, 5
          %v2536 = vsel %vm1249, %v2534, %v2535
          %v2537 = vrot.slane %v2413, 5
          %v2538 = vrot.slane %v2537, 4
          %v2539 = vrot.slane %v1992, 5
          %v2540 = vsel %vm1249, %v2538, %v2539
          %v2541 = vrot.slane %v2539, 4
          %v2542 = vrot.slane %v2013, 5
          %v2543 = vsel %vm1249, %v2541, %v2542
          %v2544 = vrot.slane %v2414, 5
          %v2545 = vrot.slane %v2544, 4
          %v2546 = vrot.slane %v1994, 5
          %v2547 = vsel %vm1249, %v2545, %v2546
          %v2548 = vrot.slane %v2546, 4
          %v2549 = vrot.slane %v2014, 5
          %v2550 = vsel %vm1249, %v2548, %v2549
          %v2551 = vrot.slane %v2415, 5
          %v2552 = vrot.slane %v2551, 4
          %v2553 = vrot.slane %v1996, 5
          %v2554 = vsel %vm1249, %v2552, %v2553
          %v2555 = vrot.slane %v2553, 4
          %v2556 = vrot.slane %v2015, 5
          %v2557 = vsel %vm1249, %v2555, %v2556
          %v2558 = vrot.slane %v2416, 5
          %v2559 = vrot.slane %v2558, 4
          %v2560 = vrot.slane %v1998, 5
          %v2561 = vsel %vm1249, %v2559, %v2560
          %v2562 = vrot.slane %v2560, 4
          %v2563 = vrot.slane %v2016, 5
          %v2564 = vsel %vm1249, %v2562, %v2563
          %v2565 = vrot.slane %v2417, 5
          %v2566 = vrot.slane %v2565, 4
          %v2567 = vrot.slane %v2000, 5
          %v2568 = vsel %vm1249, %v2566, %v2567
          %v2569 = vrot.slane %v2567, 4
          %v2570 = vrot.slane %v2017, 5
          %v2571 = vsel %vm1249, %v2569, %v2570
          %v2572 = vrot.slane %v2418, 5
          %v2573 = vrot.slane %v2572, 4
          %v2574 = vrot.slane %v2002, 5
          %v2575 = vsel %vm1249, %v2573, %v2574
          %v2576 = vrot.slane %v2574, 4
          %v2577 = vrot.slane %v2018, 5
          %v2578 = vsel %vm1249, %v2576, %v2577
          %v2595 = vunpack.c.l.b16 %v748
          %v2596 = vunpack.c.l.b16 %v749
          %v2597 = vunpack.c.l.b16 %v750
          %v2598 = vunpack.c.l.b16 %v751
          %v2599 = vunpack.c.l.b16 %v752
          %v2600 = vunpack.c.l.b16 %v753
          %v2601 = vunpack.c.l.b16 %v754
          %v2602 = vunpack.c.l.b16 %v755
          %v2603 = vunpack.c.l.b16 %v756
          %v2604 = vunpack.c.l.b16 %v757
          %v2605 = vunpack.c.l.b16 %v758
          %v2606 = vunpack.c.l.b16 %v759
          %v2607 = vunpack.c.l.b16 %v760
          %v2608 = vunpack.c.l.b16 %v761
          %v2609 = vunpack.c.l.b16 %v762
          %v2610 = vunpack.c.l.b16 %v763
          %v2611 = vunpack.c.l.b16 %v764
          %v2612 = vunpack.c.l.b16 %v765
          %v2613 = vunpack.c.l.b16 %v766
          %v2614 = vunpack.c.l.b16 %v767
          %v2615 = vunpack.c.l.b16 %v768
          %v2616 = vunpack.c.l.b16 %v769
          %v2617 = vunpack.c.l.b16 %v770
          %v2618 = vunpack.c.l.b16 %v771
          %v2619 = vunpack.c.l.b16 %v772
          %v2620 = vunpack.c.l.b16 %v773
          %v2621 = vunpack.c.l.b16 %v774
          %v2622 = vunpack.c.l.b16 %v775
          %v2623 = vunpack.c.l.b16 %v776
          %v2624 = vunpack.c.l.b16 %v777
          %v2625 = vunpack.c.l.b16 %v778
          %v2626 = vunpack.c.l.b16 %v779
          %v2627 = vpack.c.b16 %v2596, %v2595
          %v2628 = vpack.c.b16 %v2598, %v2597
          %v2629 = vpack.c.b16 %v2600, %v2599
          %v2630 = vpack.c.b16 %v2602, %v2601
          %v2631 = vpack.c.b16 %v2604, %v2603
          %v2632 = vpack.c.b16 %v2606, %v2605
          %v2633 = vpack.c.b16 %v2608, %v2607
          %v2634 = vpack.c.b16 %v2610, %v2609
          %v2635 = vpack.c.b16 %v2612, %v2611
          %v2636 = vpack.c.b16 %v2614, %v2613
          %v2637 = vpack.c.b16 %v2616, %v2615
          %v2638 = vpack.c.b16 %v2618, %v2617
          %v2639 = vpack.c.b16 %v2620, %v2619
          %v2640 = vpack.c.b16 %v2622, %v2621
          %v2641 = vpack.c.b16 %v2624, %v2623
          %v2642 = vpack.c.b16 %v2626, %v2625
          %v2643 = vunpack.c.l.b16 %v812
          %v2644 = vunpack.c.l.b16 %v822
          %v2645 = vunpack.c.l.b16 %v836
          %v2646 = vunpack.c.l.b16 %v846
          %v2647 = vunpack.c.l.b16 %v860
          %v2648 = vunpack.c.l.b16 %v870
          %v2649 = vunpack.c.l.b16 %v884
          %v2650 = vunpack.c.l.b16 %v894
          %v2651 = vunpack.c.l.b16 %v908
          %v2652 = vunpack.c.l.b16 %v918
          %v2653 = vunpack.c.l.b16 %v932
          %v2654 = vunpack.c.l.b16 %v942
          %v2655 = vunpack.c.l.b16 %v956
          %v2656 = vunpack.c.l.b16 %v966
          %v2657 = vunpack.c.l.b16 %v980
          %v2658 = vunpack.c.l.b16 %v990
          %v2659 = vunpack.c.l.b16 %v1004
          %v2660 = vunpack.c.l.b16 %v1014
          %v2661 = vunpack.c.l.b16 %v1028
          %v2662 = vunpack.c.l.b16 %v1038
          %v2663 = vunpack.c.l.b16 %v1052
          %v2664 = vunpack.c.l.b16 %v1062
          %v2665 = vunpack.c.l.b16 %v1076
          %v2666 = vunpack.c.l.b16 %v1086
          %v2667 = vunpack.c.l.b16 %v1100
          %v2668 = vunpack.c.l.b16 %v1110
          %v2669 = vunpack.c.l.b16 %v1124
          %v2670 = vunpack.c.l.b16 %v1134
          %v2671 = vunpack.c.l.b16 %v1148
          %v2672 = vunpack.c.l.b16 %v1158
          %v2673 = vunpack.c.l.b16 %v1172
          %v2674 = vunpack.c.l.b16 %v1182
          %v2675 = vpack.c.b16 %v2644, %v2643
          %v2676 = vpack.c.b16 %v2646, %v2645
          %v2677 = vpack.c.b16 %v2648, %v2647
          %v2678 = vpack.c.b16 %v2650, %v2649
          %v2679 = vpack.c.b16 %v2652, %v2651
          %v2680 = vpack.c.b16 %v2654, %v2653
          %v2681 = vpack.c.b16 %v2656, %v2655
          %v2682 = vpack.c.b16 %v2658, %v2657
          %v2683 = vpack.c.b16 %v2660, %v2659
          %v2684 = vpack.c.b16 %v2662, %v2661
          %v2685 = vpack.c.b16 %v2664, %v2663
          %v2686 = vpack.c.b16 %v2666, %v2665
          %v2687 = vpack.c.b16 %v2668, %v2667
          %v2688 = vpack.c.b16 %v2670, %v2669
          %v2689 = vpack.c.b16 %v2672, %v2671
          %v2690 = vpack.c.b16 %v2674, %v2673
          %2691 = vrot.lane.b32.xlu0 %v2675, 4
          %v2692 = vpop.permute.xlu0 %2691
          %2693 = vrot.lane.b32.xlu0 %v2676, 4
          %v2694 = vpop.permute.xlu0 %2693
          %2695 = vrot.lane.b32.xlu0 %v2677, 4
          %v2696 = vpop.permute.xlu0 %2695
          %2697 = vrot.lane.b32.xlu0 %v2678, 4
          %v2698 = vpop.permute.xlu0 %2697
          %2699 = vrot.lane.b32.xlu0 %v2679, 4
          %v2700 = vpop.permute.xlu0 %2699
          %2701 = vrot.lane.b32.xlu0 %v2680, 4
          %v2702 = vpop.permute.xlu0 %2701
          %2703 = vrot.lane.b32.xlu0 %v2681, 4
          %v2704 = vpop.permute.xlu0 %2703
          %2705 = vrot.lane.b32.xlu0 %v2682, 4
          %v2706 = vpop.permute.xlu0 %2705
          %2707 = vrot.lane.b32.xlu0 %v2683, 4
          %v2708 = vpop.permute.xlu0 %2707
          %2709 = vrot.lane.b32.xlu0 %v2684, 4
          %v2710 = vpop.permute.xlu0 %2709
          %2711 = vrot.lane.b32.xlu0 %v2685, 4
          %v2712 = vpop.permute.xlu0 %2711
          %2713 = vrot.lane.b32.xlu0 %v2686, 4
          %v2714 = vpop.permute.xlu0 %2713
          %2715 = vrot.lane.b32.xlu0 %v2687, 4
          %v2716 = vpop.permute.xlu0 %2715
          %2717 = vrot.lane.b32.xlu0 %v2688, 4
          %v2718 = vpop.permute.xlu0 %2717
          %2719 = vrot.lane.b32.xlu0 %v2689, 4
          %v2720 = vpop.permute.xlu0 %2719
          %2721 = vrot.lane.b32.xlu0 %v2690, 4
          %v2722 = vpop.permute.xlu0 %2721
          %v2723 = vunpack.c.l.b16 %v1253
          %v2724 = vunpack.c.l.b16 %v1256
          %v2725 = vunpack.c.l.b16 %v1260
          %v2726 = vunpack.c.l.b16 %v1263
          %v2727 = vunpack.c.l.b16 %v1267
          %v2728 = vunpack.c.l.b16 %v1270
          %v2729 = vunpack.c.l.b16 %v1274
          %v2730 = vunpack.c.l.b16 %v1277
          %v2731 = vunpack.c.l.b16 %v1281
          %v2732 = vunpack.c.l.b16 %v1284
          %v2733 = vunpack.c.l.b16 %v1288
          %v2734 = vunpack.c.l.b16 %v1291
          %v2735 = vunpack.c.l.b16 %v1295
          %v2736 = vunpack.c.l.b16 %v1298
          %v2737 = vunpack.c.l.b16 %v1302
          %v2738 = vunpack.c.l.b16 %v1305
          %v2739 = vunpack.c.l.b16 %v1309
          %v2740 = vunpack.c.l.b16 %v1312
          %v2741 = vunpack.c.l.b16 %v1316
          %v2742 = vunpack.c.l.b16 %v1319
          %v2743 = vunpack.c.l.b16 %v1323
          %v2744 = vunpack.c.l.b16 %v1326
          %v2745 = vunpack.c.l.b16 %v1330
          %v2746 = vunpack.c.l.b16 %v1333
          %v2747 = vunpack.c.l.b16 %v1337
          %v2748 = vunpack.c.l.b16 %v1340
          %v2749 = vunpack.c.l.b16 %v1344
          %v2750 = vunpack.c.l.b16 %v1347
          %v2751 = vunpack.c.l.b16 %v1351
          %v2752 = vunpack.c.l.b16 %v1354
          %v2753 = vunpack.c.l.b16 %v1358
          %v2754 = vunpack.c.l.b16 %v1361
          %v2755 = vpack.c.b16 %v2724, %v2723
          %v2756 = vpack.c.b16 %v2726, %v2725
          %v2757 = vpack.c.b16 %v2728, %v2727
          %v2758 = vpack.c.b16 %v2730, %v2729
          %v2759 = vpack.c.b16 %v2732, %v2731
          %v2760 = vpack.c.b16 %v2734, %v2733
          %v2761 = vpack.c.b16 %v2736, %v2735
          %v2762 = vpack.c.b16 %v2738, %v2737
          %v2763 = vpack.c.b16 %v2740, %v2739
          %v2764 = vpack.c.b16 %v2742, %v2741
          %v2765 = vpack.c.b16 %v2744, %v2743
          %v2766 = vpack.c.b16 %v2746, %v2745
          %v2767 = vpack.c.b16 %v2748, %v2747
          %v2768 = vpack.c.b16 %v2750, %v2749
          %v2769 = vpack.c.b16 %v2752, %v2751
          %v2770 = vpack.c.b16 %v2754, %v2753
          %2771 = vrot.lane.b32.xlu0 %v2755, 8
          %v2772 = vpop.permute.xlu0 %2771
          %2773 = vrot.lane.b32.xlu0 %v2756, 8
          %v2774 = vpop.permute.xlu0 %2773
          %2775 = vrot.lane.b32.xlu0 %v2757, 8
          %v2776 = vpop.permute.xlu0 %2775
          %2777 = vrot.lane.b32.xlu0 %v2758, 8
          %v2778 = vpop.permute.xlu0 %2777
          %2779 = vrot.lane.b32.xlu0 %v2759, 8
          %v2780 = vpop.permute.xlu0 %2779
          %2781 = vrot.lane.b32.xlu0 %v2760, 8
          %v2782 = vpop.permute.xlu0 %2781
          %2783 = vrot.lane.b32.xlu0 %v2761, 8
          %v2784 = vpop.permute.xlu0 %2783
          %2785 = vrot.lane.b32.xlu0 %v2762, 8
          %v2786 = vpop.permute.xlu0 %2785
          %2787 = vrot.lane.b32.xlu0 %v2763, 8
          %v2788 = vpop.permute.xlu0 %2787
          %2789 = vrot.lane.b32.xlu0 %v2764, 8
          %v2790 = vpop.permute.xlu0 %2789
          %2791 = vrot.lane.b32.xlu0 %v2765, 8
          %v2792 = vpop.permute.xlu0 %2791
          %2793 = vrot.lane.b32.xlu0 %v2766, 8
          %v2794 = vpop.permute.xlu0 %2793
          %2795 = vrot.lane.b32.xlu0 %v2767, 8
          %v2796 = vpop.permute.xlu0 %2795
          %2797 = vrot.lane.b32.xlu0 %v2768, 8
          %v2798 = vpop.permute.xlu0 %2797
          %2799 = vrot.lane.b32.xlu0 %v2769, 8
          %v2800 = vpop.permute.xlu0 %2799
          %2801 = vrot.lane.b32.xlu0 %v2770, 8
          %v2802 = vpop.permute.xlu0 %2801
          %v2819 = vunpack.c.l.b16 %v1362
          %v2820 = vunpack.c.l.b16 %v1363
          %v2821 = vunpack.c.l.b16 %v1364
          %v2822 = vunpack.c.l.b16 %v1365
          %v2823 = vunpack.c.l.b16 %v1366
          %v2824 = vunpack.c.l.b16 %v1367
          %v2825 = vunpack.c.l.b16 %v1368
          %v2826 = vunpack.c.l.b16 %v1369
          %v2827 = vunpack.c.l.b16 %v1370
          %v2828 = vunpack.c.l.b16 %v1371
          %v2829 = vunpack.c.l.b16 %v1372
          %v2830 = vunpack.c.l.b16 %v1373
          %v2831 = vunpack.c.l.b16 %v1374
          %v2832 = vunpack.c.l.b16 %v1375
          %v2833 = vunpack.c.l.b16 %v1376
          %v2834 = vunpack.c.l.b16 %v1377
          %v2835 = vunpack.c.l.b16 %v1378
          %v2836 = vunpack.c.l.b16 %v1379
          %v2837 = vunpack.c.l.b16 %v1380
          %v2838 = vunpack.c.l.b16 %v1381
          %v2839 = vunpack.c.l.b16 %v1382
          %v2840 = vunpack.c.l.b16 %v1383
          %v2841 = vunpack.c.l.b16 %v1384
          %v2842 = vunpack.c.l.b16 %v1385
          %v2843 = vunpack.c.l.b16 %v1386
          %v2844 = vunpack.c.l.b16 %v1387
          %v2845 = vunpack.c.l.b16 %v1388
          %v2846 = vunpack.c.l.b16 %v1389
          %v2847 = vunpack.c.l.b16 %v1390
          %v2848 = vunpack.c.l.b16 %v1391
          %v2849 = vunpack.c.l.b16 %v1392
          %v2850 = vunpack.c.l.b16 %v1393
          %v2851 = vpack.c.b16 %v2820, %v2819
          %v2852 = vpack.c.b16 %v2822, %v2821
          %v2853 = vpack.c.b16 %v2824, %v2823
          %v2854 = vpack.c.b16 %v2826, %v2825
          %v2855 = vpack.c.b16 %v2828, %v2827
          %v2856 = vpack.c.b16 %v2830, %v2829
          %v2857 = vpack.c.b16 %v2832, %v2831
          %v2858 = vpack.c.b16 %v2834, %v2833
          %v2859 = vpack.c.b16 %v2836, %v2835
          %v2860 = vpack.c.b16 %v2838, %v2837
          %v2861 = vpack.c.b16 %v2840, %v2839
          %v2862 = vpack.c.b16 %v2842, %v2841
          %v2863 = vpack.c.b16 %v2844, %v2843
          %v2864 = vpack.c.b16 %v2846, %v2845
          %v2865 = vpack.c.b16 %v2848, %v2847
          %v2866 = vpack.c.b16 %v2850, %v2849
          %2867 = vrot.lane.b32.xlu0 %v2851, 12
          %v2868 = vpop.permute.xlu0 %2867
          %2869 = vrot.lane.b32.xlu0 %v2852, 12
          %v2870 = vpop.permute.xlu0 %2869
          %2871 = vrot.lane.b32.xlu0 %v2853, 12
          %v2872 = vpop.permute.xlu0 %2871
          %2873 = vrot.lane.b32.xlu0 %v2854, 12
          %v2874 = vpop.permute.xlu0 %2873
          %2875 = vrot.lane.b32.xlu0 %v2855, 12
          %v2876 = vpop.permute.xlu0 %2875
          %2877 = vrot.lane.b32.xlu0 %v2856, 12
          %v2878 = vpop.permute.xlu0 %2877
          %2879 = vrot.lane.b32.xlu0 %v2857, 12
          %v2880 = vpop.permute.xlu0 %2879
          %2881 = vrot.lane.b32.xlu0 %v2858, 12
          %v2882 = vpop.permute.xlu0 %2881
          %2883 = vrot.lane.b32.xlu0 %v2859, 12
          %v2884 = vpop.permute.xlu0 %2883
          %2885 = vrot.lane.b32.xlu0 %v2860, 12
          %v2886 = vpop.permute.xlu0 %2885
          %2887 = vrot.lane.b32.xlu0 %v2861, 12
          %v2888 = vpop.permute.xlu0 %2887
          %2889 = vrot.lane.b32.xlu0 %v2862, 12
          %v2890 = vpop.permute.xlu0 %2889
          %2891 = vrot.lane.b32.xlu0 %v2863, 12
          %v2892 = vpop.permute.xlu0 %2891
          %2893 = vrot.lane.b32.xlu0 %v2864, 12
          %v2894 = vpop.permute.xlu0 %2893
          %2895 = vrot.lane.b32.xlu0 %v2865, 12
          %v2896 = vpop.permute.xlu0 %2895
          %2897 = vrot.lane.b32.xlu0 %v2866, 12
          %v2898 = vpop.permute.xlu0 %2897
          %v2899 = vunpack.c.l.b16 %v1423
          %v2900 = vunpack.c.l.b16 %v1433
          %v2901 = vunpack.c.l.b16 %v1447
          %v2902 = vunpack.c.l.b16 %v1457
          %v2903 = vunpack.c.l.b16 %v1471
          %v2904 = vunpack.c.l.b16 %v1481
          %v2905 = vunpack.c.l.b16 %v1495
          %v2906 = vunpack.c.l.b16 %v1505
          %v2907 = vunpack.c.l.b16 %v1519
          %v2908 = vunpack.c.l.b16 %v1529
          %v2909 = vunpack.c.l.b16 %v1543
          %v2910 = vunpack.c.l.b16 %v1553
          %v2911 = vunpack.c.l.b16 %v1567
          %v2912 = vunpack.c.l.b16 %v1577
          %v2913 = vunpack.c.l.b16 %v1591
          %v2914 = vunpack.c.l.b16 %v1601
          %v2915 = vunpack.c.l.b16 %v1615
          %v2916 = vunpack.c.l.b16 %v1625
          %v2917 = vunpack.c.l.b16 %v1639
          %v2918 = vunpack.c.l.b16 %v1649
          %v2919 = vunpack.c.l.b16 %v1663
          %v2920 = vunpack.c.l.b16 %v1673
          %v2921 = vunpack.c.l.b16 %v1687
          %v2922 = vunpack.c.l.b16 %v1697
          %v2923 = vunpack.c.l.b16 %v1711
          %v2924 = vunpack.c.l.b16 %v1721
          %v2925 = vunpack.c.l.b16 %v1735
          %v2926 = vunpack.c.l.b16 %v1745
          %v2927 = vunpack.c.l.b16 %v1759
          %v2928 = vunpack.c.l.b16 %v1769
          %v2929 = vunpack.c.l.b16 %v1783
          %v2930 = vunpack.c.l.b16 %v1793
          %v2931 = vpack.c.b16 %v2900, %v2899
          %v2932 = vpack.c.b16 %v2902, %v2901
          %v2933 = vpack.c.b16 %v2904, %v2903
          %v2934 = vpack.c.b16 %v2906, %v2905
          %v2935 = vpack.c.b16 %v2908, %v2907
          %v2936 = vpack.c.b16 %v2910, %v2909
          %v2937 = vpack.c.b16 %v2912, %v2911
          %v2938 = vpack.c.b16 %v2914, %v2913
          %v2939 = vpack.c.b16 %v2916, %v2915
          %v2940 = vpack.c.b16 %v2918, %v2917
          %v2941 = vpack.c.b16 %v2920, %v2919
          %v2942 = vpack.c.b16 %v2922, %v2921
          %v2943 = vpack.c.b16 %v2924, %v2923
          %v2944 = vpack.c.b16 %v2926, %v2925
          %v2945 = vpack.c.b16 %v2928, %v2927
          %v2946 = vpack.c.b16 %v2930, %v2929
          %2947 = vrot.lane.b32.xlu0 %v2931, 16
          %v2948 = vpop.permute.xlu0 %2947
          %2949 = vrot.lane.b32.xlu0 %v2932, 16
          %v2950 = vpop.permute.xlu0 %2949
          %2951 = vrot.lane.b32.xlu0 %v2933, 16
          %v2952 = vpop.permute.xlu0 %2951
          %2953 = vrot.lane.b32.xlu0 %v2934, 16
          %v2954 = vpop.permute.xlu0 %2953
          %2955 = vrot.lane.b32.xlu0 %v2935, 16
          %v2956 = vpop.permute.xlu0 %2955
          %2957 = vrot.lane.b32.xlu0 %v2936, 16
          %v2958 = vpop.permute.xlu0 %2957
          %2959 = vrot.lane.b32.xlu0 %v2937, 16
          %v2960 = vpop.permute.xlu0 %2959
          %2961 = vrot.lane.b32.xlu0 %v2938, 16
          %v2962 = vpop.permute.xlu0 %2961
          %2963 = vrot.lane.b32.xlu0 %v2939, 16
          %v2964 = vpop.permute.xlu0 %2963
          %2965 = vrot.lane.b32.xlu0 %v2940, 16
          %v2966 = vpop.permute.xlu0 %2965
          %2967 = vrot.lane.b32.xlu0 %v2941, 16
          %v2968 = vpop.permute.xlu0 %2967
          %2969 = vrot.lane.b32.xlu0 %v2942, 16
          %v2970 = vpop.permute.xlu0 %2969
          %2971 = vrot.lane.b32.xlu0 %v2943, 16
          %v2972 = vpop.permute.xlu0 %2971
          %2973 = vrot.lane.b32.xlu0 %v2944, 16
          %v2974 = vpop.permute.xlu0 %2973
          %2975 = vrot.lane.b32.xlu0 %v2945, 16
          %v2976 = vpop.permute.xlu0 %2975
          %2977 = vrot.lane.b32.xlu0 %v2946, 16
          %v2978 = vpop.permute.xlu0 %2977
          %v2979 = vunpack.c.l.b16 %v1861
          %v2980 = vunpack.c.l.b16 %v1864
          %v2981 = vunpack.c.l.b16 %v1868
          %v2982 = vunpack.c.l.b16 %v1871
          %v2983 = vunpack.c.l.b16 %v1875
          %v2984 = vunpack.c.l.b16 %v1878
          %v2985 = vunpack.c.l.b16 %v1882
          %v2986 = vunpack.c.l.b16 %v1885
          %v2987 = vunpack.c.l.b16 %v1889
          %v2988 = vunpack.c.l.b16 %v1892
          %v2989 = vunpack.c.l.b16 %v1896
          %v2990 = vunpack.c.l.b16 %v1899
          %v2991 = vunpack.c.l.b16 %v1903
          %v2992 = vunpack.c.l.b16 %v1906
          %v2993 = vunpack.c.l.b16 %v1910
          %v2994 = vunpack.c.l.b16 %v1913
          %v2995 = vunpack.c.l.b16 %v1917
          %v2996 = vunpack.c.l.b16 %v1920
          %v2997 = vunpack.c.l.b16 %v1924
          %v2998 = vunpack.c.l.b16 %v1927
          %v2999 = vunpack.c.l.b16 %v1931
          %v3000 = vunpack.c.l.b16 %v1934
          %v3001 = vunpack.c.l.b16 %v1938
          %v3002 = vunpack.c.l.b16 %v1941
          %v3003 = vunpack.c.l.b16 %v1945
          %v3004 = vunpack.c.l.b16 %v1948
          %v3005 = vunpack.c.l.b16 %v1952
          %v3006 = vunpack.c.l.b16 %v1955
          %v3007 = vunpack.c.l.b16 %v1959
          %v3008 = vunpack.c.l.b16 %v1962
          %v3009 = vunpack.c.l.b16 %v1966
          %v3010 = vunpack.c.l.b16 %v1969
          %v3011 = vpack.c.b16 %v2980, %v2979
          %v3012 = vpack.c.b16 %v2982, %v2981
          %v3013 = vpack.c.b16 %v2984, %v2983
          %v3014 = vpack.c.b16 %v2986, %v2985
          %v3015 = vpack.c.b16 %v2988, %v2987
          %v3016 = vpack.c.b16 %v2990, %v2989
          %v3017 = vpack.c.b16 %v2992, %v2991
          %v3018 = vpack.c.b16 %v2994, %v2993
          %v3019 = vpack.c.b16 %v2996, %v2995
          %v3020 = vpack.c.b16 %v2998, %v2997
          %v3021 = vpack.c.b16 %v3000, %v2999
          %v3022 = vpack.c.b16 %v3002, %v3001
          %v3023 = vpack.c.b16 %v3004, %v3003
          %v3024 = vpack.c.b16 %v3006, %v3005
          %v3025 = vpack.c.b16 %v3008, %v3007
          %v3026 = vpack.c.b16 %v3010, %v3009
          %3027 = vrot.lane.b32.xlu0 %v3011, 20
          %v3028 = vpop.permute.xlu0 %3027
          %3029 = vrot.lane.b32.xlu0 %v3012, 20
          %v3030 = vpop.permute.xlu0 %3029
          %3031 = vrot.lane.b32.xlu0 %v3013, 20
          %v3032 = vpop.permute.xlu0 %3031
          %3033 = vrot.lane.b32.xlu0 %v3014, 20
          %v3034 = vpop.permute.xlu0 %3033
          %3035 = vrot.lane.b32.xlu0 %v3015, 20
          %v3036 = vpop.permute.xlu0 %3035
          %3037 = vrot.lane.b32.xlu0 %v3016, 20
          %v3038 = vpop.permute.xlu0 %3037
          %3039 = vrot.lane.b32.xlu0 %v3017, 20
          %v3040 = vpop.permute.xlu0 %3039
          %3041 = vrot.lane.b32.xlu0 %v3018, 20
          %v3042 = vpop.permute.xlu0 %3041
          %3043 = vrot.lane.b32.xlu0 %v3019, 20
          %v3044 = vpop.permute.xlu0 %3043
          %3045 = vrot.lane.b32.xlu0 %v3020, 20
          %v3046 = vpop.permute.xlu0 %3045
          %3047 = vrot.lane.b32.xlu0 %v3021, 20
          %v3048 = vpop.permute.xlu0 %3047
          %3049 = vrot.lane.b32.xlu0 %v3022, 20
          %v3050 = vpop.permute.xlu0 %3049
          %3051 = vrot.lane.b32.xlu0 %v3023, 20
          %v3052 = vpop.permute.xlu0 %3051
          %3053 = vrot.lane.b32.xlu0 %v3024, 20
          %v3054 = vpop.permute.xlu0 %3053
          %3055 = vrot.lane.b32.xlu0 %v3025, 20
          %v3056 = vpop.permute.xlu0 %3055
          %3057 = vrot.lane.b32.xlu0 %v3026, 20
          %v3058 = vpop.permute.xlu0 %3057
          %v3075 = vunpack.c.l.b16 %v1971
          %v3076 = vunpack.c.l.b16 %v1972
          %v3077 = vunpack.c.l.b16 %v1973
          %v3078 = vunpack.c.l.b16 %v1974
          %v3079 = vunpack.c.l.b16 %v1975
          %v3080 = vunpack.c.l.b16 %v1976
          %v3081 = vunpack.c.l.b16 %v1977
          %v3082 = vunpack.c.l.b16 %v1978
          %v3083 = vunpack.c.l.b16 %v1979
          %v3084 = vunpack.c.l.b16 %v1980
          %v3085 = vunpack.c.l.b16 %v1981
          %v3086 = vunpack.c.l.b16 %v1982
          %v3087 = vunpack.c.l.b16 %v1983
          %v3088 = vunpack.c.l.b16 %v1984
          %v3089 = vunpack.c.l.b16 %v1985
          %v3090 = vunpack.c.l.b16 %v1986
          %v3091 = vunpack.c.l.b16 %v1987
          %v3092 = vunpack.c.l.b16 %v1988
          %v3093 = vunpack.c.l.b16 %v1989
          %v3094 = vunpack.c.l.b16 %v1990
          %v3095 = vunpack.c.l.b16 %v1991
          %v3096 = vunpack.c.l.b16 %v1992
          %v3097 = vunpack.c.l.b16 %v1993
          %v3098 = vunpack.c.l.b16 %v1994
          %v3099 = vunpack.c.l.b16 %v1995
          %v3100 = vunpack.c.l.b16 %v1996
          %v3101 = vunpack.c.l.b16 %v1997
          %v3102 = vunpack.c.l.b16 %v1998
          %v3103 = vunpack.c.l.b16 %v1999
          %v3104 = vunpack.c.l.b16 %v2000
          %v3105 = vunpack.c.l.b16 %v2001
          %v3106 = vunpack.c.l.b16 %v2002
          %v3107 = vpack.c.b16 %v3076, %v3075
          %v3108 = vpack.c.b16 %v3078, %v3077
          %v3109 = vpack.c.b16 %v3080, %v3079
          %v3110 = vpack.c.b16 %v3082, %v3081
          %v3111 = vpack.c.b16 %v3084, %v3083
          %v3112 = vpack.c.b16 %v3086, %v3085
          %v3113 = vpack.c.b16 %v3088, %v3087
          %v3114 = vpack.c.b16 %v3090, %v3089
          %v3115 = vpack.c.b16 %v3092, %v3091
          %v3116 = vpack.c.b16 %v3094, %v3093
          %v3117 = vpack.c.b16 %v3096, %v3095
          %v3118 = vpack.c.b16 %v3098, %v3097
          %v3119 = vpack.c.b16 %v3100, %v3099
          %v3120 = vpack.c.b16 %v3102, %v3101
          %v3121 = vpack.c.b16 %v3104, %v3103
          %v3122 = vpack.c.b16 %v3106, %v3105
          %3123 = vrot.lane.b32.xlu0 %v3107, 24
          %v3124 = vpop.permute.xlu0 %3123
          %3125 = vrot.lane.b32.xlu0 %v3108, 24
          %v3126 = vpop.permute.xlu0 %3125
          %3127 = vrot.lane.b32.xlu0 %v3109, 24
          %v3128 = vpop.permute.xlu0 %3127
          %3129 = vrot.lane.b32.xlu0 %v3110, 24
          %v3130 = vpop.permute.xlu0 %3129
          %3131 = vrot.lane.b32.xlu0 %v3111, 24
          %v3132 = vpop.permute.xlu0 %3131
          %3133 = vrot.lane.b32.xlu0 %v3112, 24
          %v3134 = vpop.permute.xlu0 %3133
          %3135 = vrot.lane.b32.xlu0 %v3113, 24
          %v3136 = vpop.permute.xlu0 %3135
          %3137 = vrot.lane.b32.xlu0 %v3114, 24
          %v3138 = vpop.permute.xlu0 %3137
          %3139 = vrot.lane.b32.xlu0 %v3115, 24
          %v3140 = vpop.permute.xlu0 %3139
          %3141 = vrot.lane.b32.xlu0 %v3116, 24
          %v3142 = vpop.permute.xlu0 %3141
          %3143 = vrot.lane.b32.xlu0 %v3117, 24
          %v3144 = vpop.permute.xlu0 %3143
          %3145 = vrot.lane.b32.xlu0 %v3118, 24
          %v3146 = vpop.permute.xlu0 %3145
          %3147 = vrot.lane.b32.xlu0 %v3119, 24
          %v3148 = vpop.permute.xlu0 %3147
          %3149 = vrot.lane.b32.xlu0 %v3120, 24
          %v3150 = vpop.permute.xlu0 %3149
          %3151 = vrot.lane.b32.xlu0 %v3121, 24
          %v3152 = vpop.permute.xlu0 %3151
          %3153 = vrot.lane.b32.xlu0 %v3122, 24
          %v3154 = vpop.permute.xlu0 %3153
          %v3155 = vunpack.c.l.b16 %v2032
          %v3156 = vunpack.c.l.b16 %v2042
          %v3157 = vunpack.c.l.b16 %v2056
          %v3158 = vunpack.c.l.b16 %v2066
          %v3159 = vunpack.c.l.b16 %v2080
          %v3160 = vunpack.c.l.b16 %v2090
          %v3161 = vunpack.c.l.b16 %v2104
          %v3162 = vunpack.c.l.b16 %v2114
          %v3163 = vunpack.c.l.b16 %v2128
          %v3164 = vunpack.c.l.b16 %v2138
          %v3165 = vunpack.c.l.b16 %v2152
          %v3166 = vunpack.c.l.b16 %v2162
          %v3167 = vunpack.c.l.b16 %v2176
          %v3168 = vunpack.c.l.b16 %v2186
          %v3169 = vunpack.c.l.b16 %v2200
          %v3170 = vunpack.c.l.b16 %v2210
          %v3171 = vunpack.c.l.b16 %v2224
          %v3172 = vunpack.c.l.b16 %v2234
          %v3173 = vunpack.c.l.b16 %v2248
          %v3174 = vunpack.c.l.b16 %v2258
          %v3175 = vunpack.c.l.b16 %v2272
          %v3176 = vunpack.c.l.b16 %v2282
          %v3177 = vunpack.c.l.b16 %v2296
          %v3178 = vunpack.c.l.b16 %v2306
          %v3179 = vunpack.c.l.b16 %v2320
          %v3180 = vunpack.c.l.b16 %v2330
          %v3181 = vunpack.c.l.b16 %v2344
          %v3182 = vunpack.c.l.b16 %v2354
          %v3183 = vunpack.c.l.b16 %v2368
          %v3184 = vunpack.c.l.b16 %v2378
          %v3185 = vunpack.c.l.b16 %v2392
          %v3186 = vunpack.c.l.b16 %v2402
          %v3187 = vpack.c.b16 %v3156, %v3155
          %v3188 = vpack.c.b16 %v3158, %v3157
          %v3189 = vpack.c.b16 %v3160, %v3159
          %v3190 = vpack.c.b16 %v3162, %v3161
          %v3191 = vpack.c.b16 %v3164, %v3163
          %v3192 = vpack.c.b16 %v3166, %v3165
          %v3193 = vpack.c.b16 %v3168, %v3167
          %v3194 = vpack.c.b16 %v3170, %v3169
          %v3195 = vpack.c.b16 %v3172, %v3171
          %v3196 = vpack.c.b16 %v3174, %v3173
          %v3197 = vpack.c.b16 %v3176, %v3175
          %v3198 = vpack.c.b16 %v3178, %v3177
          %v3199 = vpack.c.b16 %v3180, %v3179
          %v3200 = vpack.c.b16 %v3182, %v3181
          %v3201 = vpack.c.b16 %v3184, %v3183
          %v3202 = vpack.c.b16 %v3186, %v3185
          %3203 = vrot.lane.b32.xlu0 %v3187, 28
          %v3204 = vpop.permute.xlu0 %3203
          %3205 = vrot.lane.b32.xlu0 %v3188, 28
          %v3206 = vpop.permute.xlu0 %3205
          %3207 = vrot.lane.b32.xlu0 %v3189, 28
          %v3208 = vpop.permute.xlu0 %3207
          %3209 = vrot.lane.b32.xlu0 %v3190, 28
          %v3210 = vpop.permute.xlu0 %3209
          %3211 = vrot.lane.b32.xlu0 %v3191, 28
          %v3212 = vpop.permute.xlu0 %3211
          %3213 = vrot.lane.b32.xlu0 %v3192, 28
          %v3214 = vpop.permute.xlu0 %3213
          %3215 = vrot.lane.b32.xlu0 %v3193, 28
          %v3216 = vpop.permute.xlu0 %3215
          %3217 = vrot.lane.b32.xlu0 %v3194, 28
          %v3218 = vpop.permute.xlu0 %3217
          %3219 = vrot.lane.b32.xlu0 %v3195, 28
          %v3220 = vpop.permute.xlu0 %3219
          %3221 = vrot.lane.b32.xlu0 %v3196, 28
          %v3222 = vpop.permute.xlu0 %3221
          %3223 = vrot.lane.b32.xlu0 %v3197, 28
          %v3224 = vpop.permute.xlu0 %3223
          %3225 = vrot.lane.b32.xlu0 %v3198, 28
          %v3226 = vpop.permute.xlu0 %3225
          %3227 = vrot.lane.b32.xlu0 %v3199, 28
          %v3228 = vpop.permute.xlu0 %3227
          %3229 = vrot.lane.b32.xlu0 %v3200, 28
          %v3230 = vpop.permute.xlu0 %3229
          %3231 = vrot.lane.b32.xlu0 %v3201, 28
          %v3232 = vpop.permute.xlu0 %3231
          %3233 = vrot.lane.b32.xlu0 %v3202, 28
          %v3234 = vpop.permute.xlu0 %3233
          %v3235 = vunpack.c.l.b16 %v2470
          %v3236 = vunpack.c.l.b16 %v2473
          %v3237 = vunpack.c.l.b16 %v2477
          %v3238 = vunpack.c.l.b16 %v2480
          %v3239 = vunpack.c.l.b16 %v2484
          %v3240 = vunpack.c.l.b16 %v2487
          %v3241 = vunpack.c.l.b16 %v2491
          %v3242 = vunpack.c.l.b16 %v2494
          %v3243 = vunpack.c.l.b16 %v2498
          %v3244 = vunpack.c.l.b16 %v2501
          %v3245 = vunpack.c.l.b16 %v2505
          %v3246 = vunpack.c.l.b16 %v2508
          %v3247 = vunpack.c.l.b16 %v2512
          %v3248 = vunpack.c.l.b16 %v2515
          %v3249 = vunpack.c.l.b16 %v2519
          %v3250 = vunpack.c.l.b16 %v2522
          %v3251 = vunpack.c.l.b16 %v2526
          %v3252 = vunpack.c.l.b16 %v2529
          %v3253 = vunpack.c.l.b16 %v2533
          %v3254 = vunpack.c.l.b16 %v2536
          %v3255 = vunpack.c.l.b16 %v2540
          %v3256 = vunpack.c.l.b16 %v2543
          %v3257 = vunpack.c.l.b16 %v2547
          %v3258 = vunpack.c.l.b16 %v2550
          %v3259 = vunpack.c.l.b16 %v2554
          %v3260 = vunpack.c.l.b16 %v2557
          %v3261 = vunpack.c.l.b16 %v2561
          %v3262 = vunpack.c.l.b16 %v2564
          %v3263 = vunpack.c.l.b16 %v2568
          %v3264 = vunpack.c.l.b16 %v2571
          %v3265 = vunpack.c.l.b16 %v2575
          %v3266 = vunpack.c.l.b16 %v2578
          %v3267 = vpack.c.b16 %v3236, %v3235
          %v3268 = vpack.c.b16 %v3238, %v3237
          %v3269 = vpack.c.b16 %v3240, %v3239
          %v3270 = vpack.c.b16 %v3242, %v3241
          %v3271 = vpack.c.b16 %v3244, %v3243
          %v3272 = vpack.c.b16 %v3246, %v3245
          %v3273 = vpack.c.b16 %v3248, %v3247
          %v3274 = vpack.c.b16 %v3250, %v3249
          %v3275 = vpack.c.b16 %v3252, %v3251
          %v3276 = vpack.c.b16 %v3254, %v3253
          %v3277 = vpack.c.b16 %v3256, %v3255
          %v3278 = vpack.c.b16 %v3258, %v3257
          %v3279 = vpack.c.b16 %v3260, %v3259
          %v3280 = vpack.c.b16 %v3262, %v3261
          %v3281 = vpack.c.b16 %v3264, %v3263
          %v3282 = vpack.c.b16 %v3266, %v3265
          %3283 = vrot.lane.b32.xlu0 %v3267, 32
          %v3284 = vpop.permute.xlu0 %3283
          %3285 = vrot.lane.b32.xlu0 %v3268, 32
          %v3286 = vpop.permute.xlu0 %3285
          %3287 = vrot.lane.b32.xlu0 %v3269, 32
          %v3288 = vpop.permute.xlu0 %3287
          %3289 = vrot.lane.b32.xlu0 %v3270, 32
          %v3290 = vpop.permute.xlu0 %3289
          %3291 = vrot.lane.b32.xlu0 %v3271, 32
          %v3292 = vpop.permute.xlu0 %3291
          %3293 = vrot.lane.b32.xlu0 %v3272, 32
          %v3294 = vpop.permute.xlu0 %3293
          %3295 = vrot.lane.b32.xlu0 %v3273, 32
          %v3296 = vpop.permute.xlu0 %3295
          %3297 = vrot.lane.b32.xlu0 %v3274, 32
          %v3298 = vpop.permute.xlu0 %3297
          %3299 = vrot.lane.b32.xlu0 %v3275, 32
          %v3300 = vpop.permute.xlu0 %3299
          %3301 = vrot.lane.b32.xlu0 %v3276, 32
          %v3302 = vpop.permute.xlu0 %3301
          %3303 = vrot.lane.b32.xlu0 %v3277, 32
          %v3304 = vpop.permute.xlu0 %3303
          %3305 = vrot.lane.b32.xlu0 %v3278, 32
          %v3306 = vpop.permute.xlu0 %3305
          %3307 = vrot.lane.b32.xlu0 %v3279, 32
          %v3308 = vpop.permute.xlu0 %3307
          %3309 = vrot.lane.b32.xlu0 %v3280, 32
          %v3310 = vpop.permute.xlu0 %3309
          %3311 = vrot.lane.b32.xlu0 %v3281, 32
          %v3312 = vpop.permute.xlu0 %3311
          %3313 = vrot.lane.b32.xlu0 %v3282, 32
          %v3314 = vpop.permute.xlu0 %3313
          %vm3315 = vcmask 31744
          %v3318 = vsel %vm3315, %v2627, %v2692
          %v3321 = vsel %vm3315, %v2628, %v2694
          %v3324 = vsel %vm3315, %v2629, %v2696
          %v3327 = vsel %vm3315, %v2630, %v2698
          %v3330 = vsel %vm3315, %v2631, %v2700
          %v3333 = vsel %vm3315, %v2632, %v2702
          %v3336 = vsel %vm3315, %v2633, %v2704
          %v3339 = vsel %vm3315, %v2634, %v2706
          %v3342 = vsel %vm3315, %v2635, %v2708
          %v3345 = vsel %vm3315, %v2636, %v2710
          %v3348 = vsel %vm3315, %v2637, %v2712
          %v3351 = vsel %vm3315, %v2638, %v2714
          %v3354 = vsel %vm3315, %v2639, %v2716
          %v3357 = vsel %vm3315, %v2640, %v2718
          %v3360 = vsel %vm3315, %v2641, %v2720
          %v3363 = vsel %vm3315, %v2642, %v2722
          %vm3364 = vcmask 64512
          %v3366 = vsel %vm3364, %v3318, %v2772
          %v3368 = vsel %vm3364, %v3321, %v2774
          %v3370 = vsel %vm3364, %v3324, %v2776
          %v3372 = vsel %vm3364, %v3327, %v2778
          %v3374 = vsel %vm3364, %v3330, %v2780
          %v3376 = vsel %vm3364, %v3333, %v2782
          %v3378 = vsel %vm3364, %v3336, %v2784
          %v3380 = vsel %vm3364, %v3339, %v2786
          %v3382 = vsel %vm3364, %v3342, %v2788
          %v3384 = vsel %vm3364, %v3345, %v2790
          %v3386 = vsel %vm3364, %v3348, %v2792
          %v3388 = vsel %vm3364, %v3351, %v2794
          %v3390 = vsel %vm3364, %v3354, %v2796
          %v3392 = vsel %vm3364, %v3357, %v2798
          %v3394 = vsel %vm3364, %v3360, %v2800
          %v3396 = vsel %vm3364, %v3363, %v2802
          %vm3397 = vcmask 97280
          %v3399 = vsel %vm3397, %v3366, %v2868
          %v3401 = vsel %vm3397, %v3368, %v2870
          %v3403 = vsel %vm3397, %v3370, %v2872
          %v3405 = vsel %vm3397, %v3372, %v2874
          %v3407 = vsel %vm3397, %v3374, %v2876
          %v3409 = vsel %vm3397, %v3376, %v2878
          %v3411 = vsel %vm3397, %v3378, %v2880
          %v3413 = vsel %vm3397, %v3380, %v2882
          %v3415 = vsel %vm3397, %v3382, %v2884
          %v3417 = vsel %vm3397, %v3384, %v2886
          %v3419 = vsel %vm3397, %v3386, %v2888
          %v3421 = vsel %vm3397, %v3388, %v2890
          %v3423 = vsel %vm3397, %v3390, %v2892
          %v3425 = vsel %vm3397, %v3392, %v2894
          %v3427 = vsel %vm3397, %v3394, %v2896
          %v3429 = vsel %vm3397, %v3396, %v2898
          %vm3430 = vcmask 130048
          %v3432 = vsel %vm3430, %v3399, %v2948
          %v3434 = vsel %vm3430, %v3401, %v2950
          %v3436 = vsel %vm3430, %v3403, %v2952
          %v3438 = vsel %vm3430, %v3405, %v2954
          %v3440 = vsel %vm3430, %v3407, %v2956
          %v3442 = vsel %vm3430, %v3409, %v2958
          %v3444 = vsel %vm3430, %v3411, %v2960
          %v3446 = vsel %vm3430, %v3413, %v2962
          %v3448 = vsel %vm3430, %v3415, %v2964
          %v3450 = vsel %vm3430, %v3417, %v2966
          %v3452 = vsel %vm3430, %v3419, %v2968
          %v3454 = vsel %vm3430, %v3421, %v2970
          %v3456 = vsel %vm3430, %v3423, %v2972
          %v3458 = vsel %vm3430, %v3425, %v2974
          %v3460 = vsel %vm3430, %v3427, %v2976
          %v3462 = vsel %vm3430, %v3429, %v2978
          %vm3463 = vcmask 162816
          %v3465 = vsel %vm3463, %v3432, %v3028
          %v3467 = vsel %vm3463, %v3434, %v3030
          %v3469 = vsel %vm3463, %v3436, %v3032
          %v3471 = vsel %vm3463, %v3438, %v3034
          %v3473 = vsel %vm3463, %v3440, %v3036
          %v3475 = vsel %vm3463, %v3442, %v3038
          %v3477 = vsel %vm3463, %v3444, %v3040
          %v3479 = vsel %vm3463, %v3446, %v3042
          %v3481 = vsel %vm3463, %v3448, %v3044
          %v3483 = vsel %vm3463, %v3450, %v3046
          %v3485 = vsel %vm3463, %v3452, %v3048
          %v3487 = vsel %vm3463, %v3454, %v3050
          %v3489 = vsel %vm3463, %v3456, %v3052
          %v3491 = vsel %vm3463, %v3458, %v3054
          %v3493 = vsel %vm3463, %v3460, %v3056
          %v3495 = vsel %vm3463, %v3462, %v3058
          %vm3496 = vcmask 195584
          %v3498 = vsel %vm3496, %v3465, %v3124
          %v3500 = vsel %vm3496, %v3467, %v3126
          %v3502 = vsel %vm3496, %v3469, %v3128
          %v3504 = vsel %vm3496, %v3471, %v3130
          %v3506 = vsel %vm3496, %v3473, %v3132
          %v3508 = vsel %vm3496, %v3475, %v3134
          %v3510 = vsel %vm3496, %v3477, %v3136
          %v3512 = vsel %vm3496, %v3479, %v3138
          %v3514 = vsel %vm3496, %v3481, %v3140
          %v3516 = vsel %vm3496, %v3483, %v3142
          %v3518 = vsel %vm3496, %v3485, %v3144
          %v3520 = vsel %vm3496, %v3487, %v3146
          %v3522 = vsel %vm3496, %v3489, %v3148
          %v3524 = vsel %vm3496, %v3491, %v3150
          %v3526 = vsel %vm3496, %v3493, %v3152
          %v3528 = vsel %vm3496, %v3495, %v3154
          %vm3529 = vcmask 228352
          %v3531 = vsel %vm3529, %v3498, %v3204
          %v3533 = vsel %vm3529, %v3500, %v3206
          %v3535 = vsel %vm3529, %v3502, %v3208
          %v3537 = vsel %vm3529, %v3504, %v3210
          %v3539 = vsel %vm3529, %v3506, %v3212
          %v3541 = vsel %vm3529, %v3508, %v3214
          %v3543 = vsel %vm3529, %v3510, %v3216
          %v3545 = vsel %vm3529, %v3512, %v3218
          %v3547 = vsel %vm3529, %v3514, %v3220
          %v3549 = vsel %vm3529, %v3516, %v3222
          %v3551 = vsel %vm3529, %v3518, %v3224
          %v3553 = vsel %vm3529, %v3520, %v3226
          %v3555 = vsel %vm3529, %v3522, %v3228
          %v3557 = vsel %vm3529, %v3524, %v3230
          %v3559 = vsel %vm3529, %v3526, %v3232
          %v3561 = vsel %vm3529, %v3528, %v3234
          %vm3562 = vcmask 261120
          %v3564 = vsel %vm3562, %v3531, %v3284
          %v3566 = vsel %vm3562, %v3533, %v3286
          %v3568 = vsel %vm3562, %v3535, %v3288
          %v3570 = vsel %vm3562, %v3537, %v3290
          %v3572 = vsel %vm3562, %v3539, %v3292
          %v3574 = vsel %vm3562, %v3541, %v3294
          %v3576 = vsel %vm3562, %v3543, %v3296
          %v3578 = vsel %vm3562, %v3545, %v3298
          %v3580 = vsel %vm3562, %v3547, %v3300
          %v3582 = vsel %vm3562, %v3549, %v3302
          %v3584 = vsel %vm3562, %v3551, %v3304
          %v3586 = vsel %vm3562, %v3553, %v3306
          %v3588 = vsel %vm3562, %v3555, %v3308
          %v3590 = vsel %vm3562, %v3557, %v3310
          %v3592 = vsel %vm3562, %v3559, %v3312
          %v3594 = vsel %vm3562, %v3561, %v3314
          %v3611 = vunpack.c.l.b16 %v3564
          %v3612 = vunpack.c.h.b16 %v3564
          %v3613 = vunpack.c.l.b16 %v3566
          %v3614 = vunpack.c.h.b16 %v3566
          %v3615 = vunpack.c.l.b16 %v3568
          %v3616 = vunpack.c.h.b16 %v3568
          %v3617 = vunpack.c.l.b16 %v3570
          %v3618 = vunpack.c.h.b16 %v3570
          %v3619 = vunpack.c.l.b16 %v3572
          %v3620 = vunpack.c.h.b16 %v3572
          %v3621 = vunpack.c.l.b16 %v3574
          %v3622 = vunpack.c.h.b16 %v3574
          %v3623 = vunpack.c.l.b16 %v3576
          %v3624 = vunpack.c.h.b16 %v3576
          %v3625 = vunpack.c.l.b16 %v3578
          %v3626 = vunpack.c.h.b16 %v3578
          %v3627 = vunpack.c.l.b16 %v3580
          %v3628 = vunpack.c.h.b16 %v3580
          %v3629 = vunpack.c.l.b16 %v3582
          %v3630 = vunpack.c.h.b16 %v3582
          %v3631 = vunpack.c.l.b16 %v3584
          %v3632 = vunpack.c.h.b16 %v3584
          %v3633 = vunpack.c.l.b16 %v3586
          %v3634 = vunpack.c.h.b16 %v3586
          %v3635 = vunpack.c.l.b16 %v3588
          %v3636 = vunpack.c.h.b16 %v3588
          %v3637 = vunpack.c.l.b16 %v3590
          %v3638 = vunpack.c.h.b16 %v3590
          %v3639 = vunpack.c.l.b16 %v3592
          %v3640 = vunpack.c.h.b16 %v3592
          %v3641 = vunpack.c.l.b16 %v3594
          %v3642 = vunpack.c.h.b16 %v3594
          %v3643 = vpack.c.b16 %v3611, %v3611
          %v3644 = vpack.c.b16 %v3612, %v3612
          %v3645 = vpack.c.b16 %v3613, %v3613
          %v3646 = vpack.c.b16 %v3614, %v3614
          %v3647 = vpack.c.b16 %v3615, %v3615
          %v3648 = vpack.c.b16 %v3616, %v3616
          %v3649 = vpack.c.b16 %v3617, %v3617
          %v3650 = vpack.c.b16 %v3618, %v3618
          %v3651 = vpack.c.b16 %v3619, %v3619
          %v3652 = vpack.c.b16 %v3620, %v3620
          %v3653 = vpack.c.b16 %v3621, %v3621
          %v3654 = vpack.c.b16 %v3622, %v3622
          %v3655 = vpack.c.b16 %v3623, %v3623
          %v3656 = vpack.c.b16 %v3624, %v3624
          %v3657 = vpack.c.b16 %v3625, %v3625
          %v3658 = vpack.c.b16 %v3626, %v3626
          %v3659 = vpack.c.b16 %v3627, %v3627
          %v3660 = vpack.c.b16 %v3628, %v3628
          %v3661 = vpack.c.b16 %v3629, %v3629
          %v3662 = vpack.c.b16 %v3630, %v3630
          %v3663 = vpack.c.b16 %v3631, %v3631
          %v3664 = vpack.c.b16 %v3632, %v3632
          %v3665 = vpack.c.b16 %v3633, %v3633
          %v3666 = vpack.c.b16 %v3634, %v3634
          %v3667 = vpack.c.b16 %v3635, %v3635
          %v3668 = vpack.c.b16 %v3636, %v3636
          %v3669 = vpack.c.b16 %v3637, %v3637
          %v3670 = vpack.c.b16 %v3638, %v3638
          %v3671 = vpack.c.b16 %v3639, %v3639
          %v3672 = vpack.c.b16 %v3640, %v3640
          %v3673 = vpack.c.b16 %v3641, %v3641
          %v3674 = vpack.c.b16 %v3642, %v3642
          %vm3707 = vcmask 289792
          %3708 = vst.msk [vmem:[#allocation3] sm:$0xf] %vm3707, %v3643
          %3709 = vst.msk [vmem:[#allocation3 + $0x4] sm:$0xf] %vm3707, %v3644
          %3710 = vst.msk [vmem:[#allocation3 + $0x8] sm:$0xf] %vm3707, %v3645
          %3711 = vst.msk [vmem:[#allocation3 + $0xc] sm:$0xf] %vm3707, %v3646
          %3712 = vst.msk [vmem:[#allocation3 + $0x10] sm:$0xf] %vm3707, %v3647
          %3713 = vst.msk [vmem:[#allocation3 + $0x14] sm:$0xf] %vm3707, %v3648
          %3714 = vst.msk [vmem:[#allocation3 + $0x18] sm:$0xf] %vm3707, %v3649
          %3715 = vst.msk [vmem:[#allocation3 + $0x1c] sm:$0xf] %vm3707, %v3650
          %3716 = vst.msk [vmem:[#allocation3 + $0x20] sm:$0xf] %vm3707, %v3651
          %3717 = vst.msk [vmem:[#allocation3 + $0x24] sm:$0xf] %vm3707, %v3652
          %3718 = vst.msk [vmem:[#allocation3 + $0x28] sm:$0xf] %vm3707, %v3653
          %3719 = vst.msk [vmem:[#allocation3 + $0x2c] sm:$0xf] %vm3707, %v3654
          %3720 = vst.msk [vmem:[#allocation3 + $0x30] sm:$0xf] %vm3707, %v3655
          %3721 = vst.msk [vmem:[#allocation3 + $0x34] sm:$0xf] %vm3707, %v3656
          %3722 = vst.msk [vmem:[#allocation3 + $0x38] sm:$0xf] %vm3707, %v3657
          %3723 = vst.msk [vmem:[#allocation3 + $0x3c] sm:$0xf] %vm3707, %v3658
          %3724 = vst.msk [vmem:[#allocation3 + $0x40] sm:$0xf] %vm3707, %v3659
          %3725 = vst.msk [vmem:[#allocation3 + $0x44] sm:$0xf] %vm3707, %v3660
          %3726 = vst.msk [vmem:[#allocation3 + $0x48] sm:$0xf] %vm3707, %v3661
          %3727 = vst.msk [vmem:[#allocation3 + $0x4c] sm:$0xf] %vm3707, %v3662
          %3728 = vst.msk [vmem:[#allocation3 + $0x50] sm:$0xf] %vm3707, %v3663
          %3729 = vst.msk [vmem:[#allocation3 + $0x54] sm:$0xf] %vm3707, %v3664
          %3730 = vst.msk [vmem:[#allocation3 + $0x58] sm:$0xf] %vm3707, %v3665
          %3731 = vst.msk [vmem:[#allocation3 + $0x5c] sm:$0xf] %vm3707, %v3666
          %3732 = vst.msk [vmem:[#allocation3 + $0x60] sm:$0xf] %vm3707, %v3667
          %3733 = vst.msk [vmem:[#allocation3 + $0x64] sm:$0xf] %vm3707, %v3668
          %3734 = vst.msk [vmem:[#allocation3 + $0x68] sm:$0xf] %vm3707, %v3669
          %3735 = vst.msk [vmem:[#allocation3 + $0x6c] sm:$0xf] %vm3707, %v3670
          %3736 = vst.msk [vmem:[#allocation3 + $0x70] sm:$0xf] %vm3707, %v3671
          %3737 = vst.msk [vmem:[#allocation3 + $0x74] sm:$0xf] %vm3707, %v3672
          %3738 = vst.msk [vmem:[#allocation3 + $0x78] sm:$0xf] %vm3707, %v3673
          %3739 = vst.msk [vmem:[#allocation3 + $0x7c] sm:$0xf] %vm3707, %v3674
        $region36: #{tpu_custom_call.1} parent=31 // pred_fallthru
          _
        %v3740 = vld [vmem:[#allocation3] sm:$0xf]
        %v3741 = vld [vmem:[#allocation3 + $0x4] sm:$0xf]
        %v3742 = vld [vmem:[#allocation3 + $0x8] sm:$0xf]
        %v3743 = vld [vmem:[#allocation3 + $0xc] sm:$0xf]
        %v3744 = vld [vmem:[#allocation3 + $0x10] sm:$0xf]
        %v3745 = vld [vmem:[#allocation3 + $0x14] sm:$0xf]
        %v3746 = vld [vmem:[#allocation3 + $0x18] sm:$0xf]
        %v3747 = vld [vmem:[#allocation3 + $0x1c] sm:$0xf]
        %v3748 = vld [vmem:[#allocation3 + $0x20] sm:$0xf]
        %v3749 = vld [vmem:[#allocation3 + $0x24] sm:$0xf]
        %v3750 = vld [vmem:[#allocation3 + $0x28] sm:$0xf]
        %v3751 = vld [vmem:[#allocation3 + $0x2c] sm:$0xf]
        %v3752 = vld [vmem:[#allocation3 + $0x30] sm:$0xf]
        %v3753 = vld [vmem:[#allocation3 + $0x34] sm:$0xf]
        %v3754 = vld [vmem:[#allocation3 + $0x38] sm:$0xf]
        %v3755 = vld [vmem:[#allocation3 + $0x3c] sm:$0xf]
        %v3756 = vld [vmem:[#allocation3 + $0x40] sm:$0xf]
        %v3757 = vld [vmem:[#allocation3 + $0x44] sm:$0xf]
        %v3758 = vld [vmem:[#allocation3 + $0x48] sm:$0xf]
        %v3759 = vld [vmem:[#allocation3 + $0x4c] sm:$0xf]
        %v3760 = vld [vmem:[#allocation3 + $0x50] sm:$0xf]
        %v3761 = vld [vmem:[#allocation3 + $0x54] sm:$0xf]
        %v3762 = vld [vmem:[#allocation3 + $0x58] sm:$0xf]
        %v3763 = vld [vmem:[#allocation3 + $0x5c] sm:$0xf]
        %v3764 = vld [vmem:[#allocation3 + $0x60] sm:$0xf]
        %v3765 = vld [vmem:[#allocation3 + $0x64] sm:$0xf]
        %v3766 = vld [vmem:[#allocation3 + $0x68] sm:$0xf]
        %v3767 = vld [vmem:[#allocation3 + $0x6c] sm:$0xf]
        %v3768 = vld [vmem:[#allocation3 + $0x70] sm:$0xf]
        %v3769 = vld [vmem:[#allocation3 + $0x74] sm:$0xf]
        %v3770 = vld [vmem:[#allocation3 + $0x78] sm:$0xf]
        %v3771 = vld [vmem:[#allocation3 + $0x7c] sm:$0xf]
        %v3772 = vld [vmem:[%s210] sm:$0xf]
        %v3773 = vld [vmem:[%s210 + $0x4] sm:$0xf]
        %v3774 = vld [vmem:[%s210 + $0x8] sm:$0xf]
        %v3775 = vld [vmem:[%s210 + $0xc] sm:$0xf]
        %v3776 = vld [vmem:[%s210 + $0x10] sm:$0x3]
        %v3777 = vld [vmem:[%s213] sm:$0x1]
        %v3779 = vlaneseq
        %v3780 = vshrl.u32 %v3779, 7
        %v3781 = vsub.s32 0, %v3780
        %v3782 = vrot.slane %v3777, %v3781
        %v3816 = vunpack.c.l.b16 %v3740
        %v3817 = vunpack.c.l.b16 %v3741
        %v3818 = vunpack.c.l.b16 %v3742
        %v3819 = vunpack.c.l.b16 %v3743
        %v3820 = vunpack.c.l.b16 %v3744
        %v3821 = vunpack.c.l.b16 %v3745
        %v3822 = vunpack.c.l.b16 %v3746
        %v3823 = vunpack.c.l.b16 %v3747
        %v3824 = vunpack.c.l.b16 %v3748
        %v3825 = vunpack.c.l.b16 %v3749
        %v3826 = vunpack.c.l.b16 %v3750
        %v3827 = vunpack.c.l.b16 %v3751
        %v3828 = vunpack.c.l.b16 %v3752
        %v3829 = vunpack.c.l.b16 %v3753
        %v3830 = vunpack.c.l.b16 %v3754
        %v3831 = vunpack.c.l.b16 %v3755
        %v3832 = vunpack.c.l.b16 %v3756
        %v3833 = vunpack.c.l.b16 %v3757
        %v3834 = vunpack.c.l.b16 %v3758
        %v3835 = vunpack.c.l.b16 %v3759
        %v3836 = vunpack.c.l.b16 %v3760
        %v3837 = vunpack.c.l.b16 %v3761
        %v3838 = vunpack.c.l.b16 %v3762
        %v3839 = vunpack.c.l.b16 %v3763
        %v3840 = vunpack.c.l.b16 %v3764
        %v3841 = vunpack.c.l.b16 %v3765
        %v3842 = vunpack.c.l.b16 %v3766
        %v3843 = vunpack.c.l.b16 %v3767
        %v3844 = vunpack.c.l.b16 %v3768
        %v3845 = vunpack.c.l.b16 %v3769
        %v3846 = vunpack.c.l.b16 %v3770
        %v3847 = vunpack.c.l.b16 %v3771
        %v3848 = vpack.c.b16 %v3817, %v3816
        %v3849 = vpack.c.b16 %v3819, %v3818
        %v3850 = vpack.c.b16 %v3821, %v3820
        %v3851 = vpack.c.b16 %v3823, %v3822
        %v3852 = vpack.c.b16 %v3825, %v3824
        %v3853 = vpack.c.b16 %v3827, %v3826
        %v3854 = vpack.c.b16 %v3829, %v3828
        %v3855 = vpack.c.b16 %v3831, %v3830
        %v3856 = vpack.c.b16 %v3833, %v3832
        %v3857 = vpack.c.b16 %v3835, %v3834
        %v3858 = vpack.c.b16 %v3837, %v3836
        %v3859 = vpack.c.b16 %v3839, %v3838
        %v3860 = vpack.c.b16 %v3841, %v3840
        %v3861 = vpack.c.b16 %v3843, %v3842
        %v3862 = vpack.c.b16 %v3845, %v3844
        %v3863 = vpack.c.b16 %v3847, %v3846
        %v3869 = vunpack.c.l.b16 %v3772
        %v3870 = vunpack.c.l.b16 %v3773
        %v3871 = vunpack.c.l.b16 %v3774
        %v3872 = vunpack.c.l.b16 %v3775
        %v3873 = vunpack.c.l.b16 %v3776
        %v3874 = vpack.c.b16 %v3870, %v3869
        %v3875 = vpack.c.b16 %v3872, %v3871
        %v3876 = vpack.c.b16 %v3873, %v3873
        %vm3879 = vcmask 293888
        %v3881 = vsel %vm3879, %v3848, 0
        %v3884 = vsel %vm3879, %v3849, 0
        %v3887 = vsel %vm3879, %v3850, 0
        %v3890 = vsel %vm3879, %v3851, 0
        %v3893 = vsel %vm3879, %v3852, 0
        %v3896 = vsel %vm3879, %v3853, 0
        %v3899 = vsel %vm3879, %v3854, 0
        %v3902 = vsel %vm3879, %v3855, 0
        %v3905 = vsel %vm3879, %v3856, 0
        %v3908 = vsel %vm3879, %v3857, 0
        %v3911 = vsel %vm3879, %v3858, 0
        %v3914 = vsel %vm3879, %v3859, 0
        %v3917 = vsel %vm3879, %v3860, 0
        %v3920 = vsel %vm3879, %v3861, 0
        %v3923 = vsel %vm3879, %v3862, 0
        %v3926 = vsel %vm3879, %v3863, 0
        %vm3928 = vcmask 1041408
        %v3930 = vsel %vm3928, %v3876, 0
        %3932 = vmatprep.subr.bf16.mxu0 0
        %3933 = vmatpush1.bf16.msra.mxu0 0
        %3934 = vmatprep.subr.bf16.mxu0 0
        %3935 = vmatpush1.bf16.msra.mxu0 0
        %3936 = vmatprep.subr.bf16.mxu0 0
        %3937 = vmatpush1.bf16.msra.mxu0 0
        %3938 = vmatprep.subr.bf16.mxu0 0
        %3939 = vmatpush1.bf16.msra.mxu0 0
        %3940 = vmatprep.subr.bf16.mxu0 0
        %3941 = vmatpush1.bf16.msra.mxu0 0
        %3942 = vmatprep.subr.bf16.mxu0 0
        %3943 = vmatpush1.bf16.msra.mxu0 %v3930
        %3944 = vmatprep.subr.bf16.mxu0 0
        %3945 = vmatpush1.bf16.msra.mxu0 %v3875
        %3946 = vmatprep.subr.bf16.mxu0 0
        %3947 = vmatpush1.bf16.msra.mxu0 %v3874
        %3948 = vmatprep.subr.bf16.mxu0 0
        %3949 = vmatpush2.bf16.msra.mxu0 0
        %3950 = vmatprep.subr.bf16.mxu0 0
        %3951 = vmatpush2.bf16.msra.mxu0 0
        %3952 = vmatprep.subr.bf16.mxu0 0
        %3953 = vmatpush2.bf16.msra.mxu0 0
        %3954 = vmatprep.subr.bf16.mxu0 0
        %3955 = vmatpush2.bf16.msra.mxu0 0
        %3956 = vmatprep.subr.bf16.mxu0 0
        %3957 = vmatpush2.bf16.msra.mxu0 0
        %3958 = vmatprep.subr.bf16.mxu0 0
        %3959 = vmatpush2.bf16.msra.mxu0 0
        %3960 = vmatprep.subr.bf16.mxu0 0
        %3961 = vmatpush2.bf16.msra.mxu0 0
        %3962 = vmatprep.subr.bf16.mxu0 0
        %3963 = vmatpush2.bf16.msra.mxu0 0
        %3964 = vmatprep.mubr.bf16.mxu0 0
        %3965 = vmatmul.mubr.bf16.gmra.mxu0 %v3881
        %v3966 = vpop.f32.mrf.mxu0
        %v3967 = vadd.f32 %v3782, %v3966
        %v3968 = vpop.f32.mrf.mxu0
        %v3969 = vpop.f32.mrf.mxu0
        %v3970 = vadd.f32 %v3782, %v3969
        %v3971 = vpop.f32.mrf.mxu0
        %3972 = vmatprep.mubr.bf16.mxu0 0
        %3973 = vmatmul.mubr.bf16.gmra.mxu0 %v3884
        %v3974 = vpop.f32.mrf.mxu0
        %v3975 = vadd.f32 %v3782, %v3974
        %v3976 = vpop.f32.mrf.mxu0
        %v3977 = vpop.f32.mrf.mxu0
        %v3978 = vadd.f32 %v3782, %v3977
        %v3979 = vpop.f32.mrf.mxu0
        %3980 = vmatprep.mubr.bf16.mxu0 0
        %3981 = vmatmul.mubr.bf16.gmra.mxu0 %v3887
        %v3982 = vpop.f32.mrf.mxu0
        %v3983 = vadd.f32 %v3782, %v3982
        %v3984 = vpop.f32.mrf.mxu0
        %v3985 = vpop.f32.mrf.mxu0
        %v3986 = vadd.f32 %v3782, %v3985
        %v3987 = vpop.f32.mrf.mxu0
        %3988 = vmatprep.mubr.bf16.mxu0 0
        %3989 = vmatmul.mubr.bf16.gmra.mxu0 %v3890
        %v3990 = vpop.f32.mrf.mxu0
        %v3991 = vadd.f32 %v3782, %v3990
        %v3992 = vpop.f32.mrf.mxu0
        %v3993 = vpop.f32.mrf.mxu0
        %v3994 = vadd.f32 %v3782, %v3993
        %v3995 = vpop.f32.mrf.mxu0
        %3996 = vmatprep.mubr.bf16.mxu0 0
        %3997 = vmatmul.mubr.bf16.gmra.mxu0 %v3893
        %v3998 = vpop.f32.mrf.mxu0
        %v3999 = vadd.f32 %v3782, %v3998
        %v4000 = vpop.f32.mrf.mxu0
        %v4001 = vpop.f32.mrf.mxu0
        %v4002 = vadd.f32 %v3782, %v4001
        %v4003 = vpop.f32.mrf.mxu0
        %4004 = vmatprep.mubr.bf16.mxu0 0
        %4005 = vmatmul.mubr.bf16.gmra.mxu0 %v3896
        %v4006 = vpop.f32.mrf.mxu0
        %v4007 = vadd.f32 %v3782, %v4006
        %v4008 = vpop.f32.mrf.mxu0
        %v4009 = vpop.f32.mrf.mxu0
        %v4010 = vadd.f32 %v3782, %v4009
        %v4011 = vpop.f32.mrf.mxu0
        %4012 = vmatprep.mubr.bf16.mxu0 0
        %4013 = vmatmul.mubr.bf16.gmra.mxu0 %v3899
        %v4014 = vpop.f32.mrf.mxu0
        %v4015 = vadd.f32 %v3782, %v4014
        %v4016 = vpop.f32.mrf.mxu0
        %v4017 = vpop.f32.mrf.mxu0
        %v4018 = vadd.f32 %v3782, %v4017
        %v4019 = vpop.f32.mrf.mxu0
        %4020 = vmatprep.mubr.bf16.mxu0 0
        %4021 = vmatmul.mubr.bf16.gmra.mxu0 %v3902
        %v4022 = vpop.f32.mrf.mxu0
        %v4023 = vadd.f32 %v3782, %v4022
        %v4024 = vpop.f32.mrf.mxu0
        %v4025 = vpop.f32.mrf.mxu0
        %v4026 = vadd.f32 %v3782, %v4025
        %v4027 = vpop.f32.mrf.mxu0
        %4028 = vmatprep.mubr.bf16.mxu0 0
        %4029 = vmatmul.mubr.bf16.gmra.mxu0 %v3905
        %v4030 = vpop.f32.mrf.mxu0
        %v4031 = vadd.f32 %v3782, %v4030
        %v4032 = vpop.f32.mrf.mxu0
        %v4033 = vpop.f32.mrf.mxu0
        %v4034 = vadd.f32 %v3782, %v4033
        %v4035 = vpop.f32.mrf.mxu0
        %4036 = vmatprep.mubr.bf16.mxu0 0
        %4037 = vmatmul.mubr.bf16.gmra.mxu0 %v3908
        %v4038 = vpop.f32.mrf.mxu0
        %v4039 = vadd.f32 %v3782, %v4038
        %v4040 = vpop.f32.mrf.mxu0
        %v4041 = vpop.f32.mrf.mxu0
        %v4042 = vadd.f32 %v3782, %v4041
        %v4043 = vpop.f32.mrf.mxu0
        %4044 = vmatprep.mubr.bf16.mxu0 0
        %4045 = vmatmul.mubr.bf16.gmra.mxu0 %v3911
        %v4046 = vpop.f32.mrf.mxu0
        %v4047 = vadd.f32 %v3782, %v4046
        %v4048 = vpop.f32.mrf.mxu0
        %v4049 = vpop.f32.mrf.mxu0
        %v4050 = vadd.f32 %v3782, %v4049
        %v4051 = vpop.f32.mrf.mxu0
        %4052 = vmatprep.mubr.bf16.mxu0 0
        %4053 = vmatmul.mubr.bf16.gmra.mxu0 %v3914
        %v4054 = vpop.f32.mrf.mxu0
        %v4055 = vadd.f32 %v3782, %v4054
        %v4056 = vpop.f32.mrf.mxu0
        %v4057 = vpop.f32.mrf.mxu0
        %v4058 = vadd.f32 %v3782, %v4057
        %v4059 = vpop.f32.mrf.mxu0
        %4060 = vmatprep.mubr.bf16.mxu0 0
        %4061 = vmatmul.mubr.bf16.gmra.mxu0 %v3917
        %v4062 = vpop.f32.mrf.mxu0
        %v4063 = vadd.f32 %v3782, %v4062
        %v4064 = vpop.f32.mrf.mxu0
        %v4065 = vpop.f32.mrf.mxu0
        %v4066 = vadd.f32 %v3782, %v4065
        %v4067 = vpop.f32.mrf.mxu0
        %4068 = vmatprep.mubr.bf16.mxu0 0
        %4069 = vmatmul.mubr.bf16.gmra.mxu0 %v3920
        %v4070 = vpop.f32.mrf.mxu0
        %v4071 = vadd.f32 %v3782, %v4070
        %v4072 = vpop.f32.mrf.mxu0
        %v4073 = vpop.f32.mrf.mxu0
        %v4074 = vadd.f32 %v3782, %v4073
        %v4075 = vpop.f32.mrf.mxu0
        %4076 = vmatprep.mubr.bf16.mxu0 0
        %4077 = vmatmul.mubr.bf16.gmra.mxu0 %v3923
        %v4078 = vpop.f32.mrf.mxu0
        %v4079 = vadd.f32 %v3782, %v4078
        %v4080 = vpop.f32.mrf.mxu0
        %v4081 = vpop.f32.mrf.mxu0
        %v4082 = vadd.f32 %v3782, %v4081
        %v4083 = vpop.f32.mrf.mxu0
        %4084 = vmatprep.mubr.bf16.mxu0 0
        %4085 = vmatmul.mubr.bf16.gmra.mxu0 %v3926
        %v4086 = vpop.f32.mrf.mxu0
        %v4087 = vadd.f32 %v3782, %v4086
        %v4088 = vpop.f32.mrf.mxu0
        %v4089 = vpop.f32.mrf.mxu0
        %v4090 = vadd.f32 %v3782, %v4089
        %v4091 = vpop.f32.mrf.mxu0
        %4092 = vdwg.mxu0
        %v4093 = vmax.f32 %v3967, 0.0
        %v4094 = vmax.f32 %v3970, 0.0
        %v4095 = vmax.f32 %v3975, 0.0
        %v4096 = vmax.f32 %v3978, 0.0
        %v4097 = vmax.f32 %v3983, 0.0
        %v4098 = vmax.f32 %v3986, 0.0
        %v4099 = vmax.f32 %v3991, 0.0
        %v4100 = vmax.f32 %v3994, 0.0
        %v4101 = vmax.f32 %v3999, 0.0
        %v4102 = vmax.f32 %v4002, 0.0
        %v4103 = vmax.f32 %v4007, 0.0
        %v4104 = vmax.f32 %v4010, 0.0
        %v4105 = vmax.f32 %v4015, 0.0
        %v4106 = vmax.f32 %v4018, 0.0
        %v4107 = vmax.f32 %v4023, 0.0
        %v4108 = vmax.f32 %v4026, 0.0
        %v4109 = vmax.f32 %v4031, 0.0
        %v4110 = vmax.f32 %v4034, 0.0
        %v4111 = vmax.f32 %v4039, 0.0
        %v4112 = vmax.f32 %v4042, 0.0
        %v4113 = vmax.f32 %v4047, 0.0
        %v4114 = vmax.f32 %v4050, 0.0
        %v4115 = vmax.f32 %v4055, 0.0
        %v4116 = vmax.f32 %v4058, 0.0
        %v4117 = vmax.f32 %v4063, 0.0
        %v4118 = vmax.f32 %v4066, 0.0
        %v4119 = vmax.f32 %v4071, 0.0
        %v4120 = vmax.f32 %v4074, 0.0
        %v4121 = vmax.f32 %v4079, 0.0
        %v4122 = vmax.f32 %v4082, 0.0
        %v4123 = vmax.f32 %v4087, 0.0
        %v4124 = vmax.f32 %v4090, 0.0
        %4125 = vst [vmem:[%s201] sm:$0xff] %v4093
        %4126 = vst [vmem:[%s201 + $0x8] sm:$0xff] %v4094
        %4127 = vst [vmem:[%s201 + $0x10] sm:$0xff] %v4095
        %4128 = vst [vmem:[%s201 + $0x18] sm:$0xff] %v4096
        %4129 = vst [vmem:[%s201 + $0x20] sm:$0xff] %v4097
        %4130 = vst [vmem:[%s201 + $0x28] sm:$0xff] %v4098
        %4131 = vst [vmem:[%s201 + $0x30] sm:$0xff] %v4099
        %4132 = vst [vmem:[%s201 + $0x38] sm:$0xff] %v4100
        %4133 = vst [vmem:[%s201 + $0x40] sm:$0xff] %v4101
        %4134 = vst [vmem:[%s201 + $0x48] sm:$0xff] %v4102
        %4135 = vst [vmem:[%s201 + $0x50] sm:$0xff] %v4103
        %4136 = vst [vmem:[%s201 + $0x58] sm:$0xff] %v4104
        %4137 = vst [vmem:[%s201 + $0x60] sm:$0xff] %v4105
        %4138 = vst [vmem:[%s201 + $0x68] sm:$0xff] %v4106
        %4139 = vst [vmem:[%s201 + $0x70] sm:$0xff] %v4107
        %4140 = vst [vmem:[%s201 + $0x78] sm:$0xff] %v4108
        %4141 = vst [vmem:[%s201 + $0x80] sm:$0xff] %v4109
        %4142 = vst [vmem:[%s201 + $0x88] sm:$0xff] %v4110
        %4143 = vst [vmem:[%s201 + $0x90] sm:$0xff] %v4111
        %4144 = vst [vmem:[%s201 + $0x98] sm:$0xff] %v4112
        %4145 = vst [vmem:[%s201 + $0xa0] sm:$0xff] %v4113
        %4146 = vst [vmem:[%s201 + $0xa8] sm:$0xff] %v4114
        %4147 = vst [vmem:[%s201 + $0xb0] sm:$0xff] %v4115
        %4148 = vst [vmem:[%s201 + $0xb8] sm:$0xff] %v4116
        %4149 = vst [vmem:[%s201 + $0xc0] sm:$0xff] %v4117
        %4150 = vst [vmem:[%s201 + $0xc8] sm:$0xff] %v4118
        %4151 = vst [vmem:[%s201 + $0xd0] sm:$0xff] %v4119
        %4152 = vst [vmem:[%s201 + $0xd8] sm:$0xff] %v4120
        %4153 = vst [vmem:[%s201 + $0xe0] sm:$0xff] %v4121
        %4154 = vst [vmem:[%s201 + $0xe8] sm:$0xff] %v4122
        %4155 = vst [vmem:[%s201 + $0xf0] sm:$0xff] %v4123
        %4156 = vst [vmem:[%s201 + $0xf8] sm:$0xff] %v4124
        %s4157 = sand.u32 %s117, 1
        %s4158 = scalar_lea.sflag [#allocation5], %s4157
        %s4159 = sand.u32 %s117, 1
        %s4160 = smul.addr %s4159, 256
        %s4161 = scalar_lea.vmem [#allocation4], %s4160
        // Predicated region
        $region37: #{tpu_custom_call.1} parent=31 // pred_check
          %p4162 = pneg %p127
        $region38: #{tpu_custom_call.1} parent=31 // pred_check_branch
          %4164 = sbr.rel (%p4162) target = $region40
        $region39: #{tpu_custom_call.1} parent=31 // pred_region
          %s4166 = ssub.s32 4096, 4096
          %4167 = vsyncadd %s4158, %s4166
          %s4168 = smul.addr %s21, 32
          %s4169 = sadd.s32 %s22, %s4168
          %s4170 = smul.addr %s4169, 128
          %s4171 = scalar_lea.hbm %s3, %s4170
          %s4172 = sshll.u32 %s4161, 4
          %s4173 = int_to_ptr.vmem [resolvable:$true] %s4172
          %4178 = dma.vmem_to_hbm [thread:$0]  %s4173, 4096, %s4171, %s4158, 128, 128, 8
        $region40: #{tpu_custom_call.1} parent=31 // pred_fallthru
          _
      $region32: #{tpu_custom_call.1} parent=5 // pred_fallthru
        _
      %p4179 = scmp.le.s32.totalorder 2, %s12
      // Predicated region
      $region41: #{tpu_custom_call.1} parent=5 // pred_check
        %p4180 = pneg %p4179
      $region42: #{tpu_custom_call.1} parent=5 // pred_check_branch
        %4182 = sbr.rel (%p4180) target = $region44
      $region43: #{tpu_custom_call.1} parent=5 // pred_region
        %s4183 = ssub.s32 %s12, 2
        // Predicated region
        $region45: #{tpu_custom_call.1} parent=43 // pred_check
          %p4184 = pneg %p133
        $region46: #{tpu_custom_call.1} parent=43 // pred_check_branch
          %4186 = sbr.rel (%p4184) target = $region48
        $region47: #{tpu_custom_call.1} parent=43 // pred_region
          %s4187 = sand.u32 %s118, 1
          %s4188 = scalar_lea.sflag [#allocation5], %s4187
          %s4189 = sand.u32 %s118, 1
          %s4190 = smul.addr %s4189, 256
          %s4191 = scalar_lea.vmem [#allocation4], %s4190
          %4192 = dma.done %s4188, 4096
        $region48: #{tpu_custom_call.1} parent=43 // pred_fallthru
          _
      $region44: #{tpu_custom_call.1} parent=5 // pred_fallthru
        _
    $region6: #{tpu_custom_call.1} parent=1 // loop_footer
      %s16 = sadd.s32 1, %s12
    $region7: #{tpu_custom_call.1} parent=1 // loop_footer_branch
      %11 = sbr.rel target = $region3
    $region8: #{tpu_custom_call.1} parent=1 // loop_exit
      _
    %4193 = vsyncpa [#allocation5], 1
    %s4194 = scalar_lea.sflag [#allocation5], 1
    %4195 = vsyncpa %s4194, 1

</llo_original>
